<compile_context>
chip_gen: v7x
topology: tpu7x:2x2x1
jax: 0.10.0
libtpu: 0.0.40
codegen_flags: <defaults>
</compile_context>

<pallas_src>
import numpy as np
import jax
import jax.numpy as jnp
from jax import lax
from jax.experimental import pallas as pl
from jax.experimental.pallas import tpu as pltpu


C1 = 32   # conv1 output channels
C2 = 64   # conv2 output channels


# -----------------------------------------------------------------------------
# Fused kernel: conv1 + ReLU + conv2 + ReLU + flatten + (mu|logvar) heads + z.
# Grid = (batch tiles,), "parallel".
# -----------------------------------------------------------------------------
def encoder_kernel(x_ref, w1_ref, b1_ref, w2_ref, b2_ref,
                   w1cat_ref, b1cat_ref, w2blk_ref, b2cat_ref, eps_ref,
                   out_ref, hflat_ref):
    # x_ref    : (TB, L)        input batch tile
    # w1_ref   : (3, 32)        conv1 weight (tap, Cout);   b1_ref: (1, 32)
    # w2_ref   : (3, 32, 64)    conv2 weight (tap, Cin, Co);b2_ref: (1, 64)
    # w1cat_ref: (F, 256) bf16  row-permuted [Wmu1|Wlv1];   b1cat_ref: (1, 256)
    # w2blk_ref: (256, 2*lat)   blockdiag(Wmu2, Wlv2);      b2cat_ref: (1, 2*lat)
    # eps_ref  : (TB, lat)
    # out_ref  : (TB, 3*lat)    [z | mu | logvar]
    # hflat_ref: (TB, F) bf16   VMEM scratch: flattened conv activations
    TB, L = x_ref.shape
    latent = eps_ref.shape[-1]

    x = x_ref[...]                                        # (TB, L) f32
    w1 = w1_ref[...]                                      # (3, 32)
    w2 = w2_ref[...]                                      # (3, 32, 64)

    # ---- Conv1d(1->32, k=3, pad=1) + ReLU ------------------------------------
    # Shift-selector matmuls produce the three taps of x already transposed to
    # length-major (L, TB) layout; rows 0 / L-1 of the shifted taps are exact
    # zeros == what pad=1 supplies at the sequence boundaries.
    ri = lax.broadcasted_iota(jnp.int32, (L, L), 0)
    ci = lax.broadcasted_iota(jnp.int32, (L, L), 1)
    dn = (((1,), (1,)), ((), ()))                         # S @ x^T

    def tap(selector):
        return lax.dot_general(selector.astype(jnp.float32), x, dn,
                               preferred_element_type=jnp.float32)   # (L, TB)

    x_cent = tap(ri == ci)            # x[b, l]
    x_prev = tap(ri == ci + 1)        # x[b, l-1], zeros at l == 0
    x_next = tap(ri + 1 == ci)        # x[b, l+1], zeros at l == L-1

    h1 = (x_prev[:, :, None] * w1[0]
          + x_cent[:, :, None] * w1[1]
          + x_next[:, :, None] * w1[2]
          + b1_ref[...])                                  # (L, TB, 32)
    h1 = jnp.maximum(h1, 0.0)
    h1 = h1.reshape(L * TB, C1)                           # row = l*TB + b (TB % 8 == 0)

    # ---- Conv1d(32->64, k=3, pad=1) + ReLU -----------------------------------
    # Shifting the merged rows by one batch tile shifts l by one; the zero
    # blocks are exactly conv2's pad=1 zeros (boundary-semantics fix).
    zblk = jnp.zeros((TB, C1), jnp.float32)
    h1_prev = jnp.concatenate([zblk, h1[:(L - 1) * TB, :]], axis=0)   # h1 at l-1
    h1_next = jnp.concatenate([h1[TB:, :], zblk], axis=0)             # h1 at l+1
    h2 = (jnp.dot(h1_prev, w2[0], preferred_element_type=jnp.float32)
          + jnp.dot(h1,      w2[1], preferred_element_type=jnp.float32)
          + jnp.dot(h1_next, w2[2], preferred_element_type=jnp.float32)
          + b2_ref[...])
    h2 = jnp.maximum(h2, 0.0)                             # (L*TB, 64)

    # ---- Flatten to (TB, 64*L) in VMEM (length-major; PyTorch's channel-major
    #      flatten order is absorbed into w1cat's row permutation) -------------
    for l in range(L):                                    # static unroll, stores only
        hflat_ref[:, l * C2:(l + 1) * C2] = (
            h2[l * TB:(l + 1) * TB, :].astype(hflat_ref.dtype))

    # ---- Fused mu/logvar heads + reparameterization --------------------------
    a1 = jnp.dot(hflat_ref[...], w1cat_ref[...],
                 preferred_element_type=jnp.float32) + b1cat_ref[...]
    a1 = jnp.maximum(a1, 0.0)                             # (TB, 256)
    h3 = jnp.dot(a1, w2blk_ref[...],
                 preferred_element_type=jnp.float32) + b2cat_ref[...]  # (TB, 2*lat)
    mu = h3[:, :latent]
    lv = h3[:, latent:]
    z = mu + eps_ref[...] * jnp.exp(0.5 * lv)
    out_ref[:, 0:latent] = z
    out_ref[:, latent:2 * latent] = mu
    out_ref[:, 2 * latent:3 * latent] = lv


# -----------------------------------------------------------------------------
# Tiling helpers
# -----------------------------------------------------------------------------
def _round_up(n, m):
    return ((n + m - 1) // m) * m


def _pick_batch_tile(batch, per_sample_bytes, budget_bytes):
    """Largest batch tile that divides `batch`, is a multiple of 8 (keeps blocks
    and in-kernel reshapes tile-aligned), fits the VMEM budget, and -- when
    possible -- leaves >= 2 grid steps so both v7x TensorCores get work."""
    cands = [d for d in range(min(batch, 256), 0, -1)
             if batch % d == 0 and d % 8 == 0]
    if not cands:
        cands = [batch]
    fitting = [d for d in cands if d * per_sample_bytes <= budget_bytes] or [cands[-1]]
    for d in fitting:
        if batch // d >= 2:
            return d
    return fitting[0]


# -----------------------------------------------------------------------------
# Wrapper
# -----------------------------------------------------------------------------
def cnn_encoder_forward(x, kp, eps):
    B, L = x.shape
    latent = eps.shape[-1]
    F = C2 * L
    H2 = kp["w1cat"].shape[1]          # 256 = fused hidden width of the two heads
    twolat = kp["w2blk"].shape[1]

    # Per-generation VMEM capacity (v5e/v6e: 128 MiB, v7x: 64 MiB).
    try:
        vmem_cap = int(pltpu.get_tpu_info().vmem_capacity_bytes)
    except Exception:
        vmem_cap = 64 * 1024 * 1024

    # Pad batch to a multiple of 8; padded rows are dropped after the call.
    B_pad = _round_up(max(B, 8), 8)
    x_p = jnp.pad(x.astype(jnp.float32), ((0, B_pad - B), (0, 0)))
    eps_p = jnp.pad(eps.astype(jnp.float32), ((0, B_pad - B), (0, 0)))

    # Resident weights are fetched once (constant index_map); per-sample bytes
    # cover conv temporaries, the bf16 hflat scratch row, io tiles and FC temps.
    weight_bytes = 2 * (kp["w1cat"].size * kp["w1cat"].dtype.itemsize
                        + 4 * (3 * C1 + C1 + 3 * C1 * C2 + C2
                               + H2 + H2 * twolat + twolat))
    per_sample = (4 * L * (3 + 6 * C1 + 3 * C2)
                  + 2 * F
                  + 4 * (L + 4 * H2 + 8 * latent))
    budget = max(int(0.5 * vmem_cap) - weight_bytes, 8 * per_sample)
    TB = _pick_batch_tile(B_pad, per_sample, budget)

    cost = pl.CostEstimate(
        flops=int(2 * B_pad * L * (3 * L + 3 * C1 + 3 * C1 * C2)
                  + 2 * B_pad * F * H2 + 2 * B_pad * H2 * twolat
                  + 4 * B_pad * latent),
        transcendentals=int(B_pad * latent),
        bytes_accessed=int(4 * B_pad * L
                           + kp["w1cat"].size * kp["w1cat"].dtype.itemsize
                           + 4 * (3 * C1 * (1 + C2) + H2 * (1 + twolat))
                           + 4 * B_pad * (latent + 3 * latent)),
    )

    out = pl.pallas_call(
        encoder_kernel,
        out_shape=jax.ShapeDtypeStruct((B_pad, 3 * latent), jnp.float32),
        grid=(B_pad // TB,),
        in_specs=[
            pl.BlockSpec((TB, L), lambda b: (b, 0)),               # x
            pl.BlockSpec((3, C1), lambda b: (0, 0)),               # conv1 weight
            pl.BlockSpec((1, C1), lambda b: (0, 0)),               # conv1 bias
            pl.BlockSpec((3, C1, C2), lambda b: (0, 0, 0)),        # conv2 weight
            pl.BlockSpec((1, C2), lambda b: (0, 0)),               # conv2 bias
            pl.BlockSpec((F, H2), lambda b: (0, 0)),               # [Wmu1|Wlv1] bf16
            pl.BlockSpec((1, H2), lambda b: (0, 0)),               # [bmu1|blv1]
            pl.BlockSpec((H2, twolat), lambda b: (0, 0)),          # blockdiag(Wmu2,Wlv2)
            pl.BlockSpec((1, twolat), lambda b: (0, 0)),           # [bmu2|blv2]
            pl.BlockSpec((TB, latent), lambda b: (b, 0)),          # eps
        ],
        out_specs=pl.BlockSpec((TB, 3 * latent), lambda b: (b, 0)),
        scratch_shapes=[pltpu.VMEM((TB, F), jnp.bfloat16)],
        compiler_params=pltpu.CompilerParams(
            dimension_semantics=("parallel",),
            vmem_limit_bytes=int(min(vmem_cap, 128 * 1024 * 1024) * 3 // 4)),
        cost_estimate=cost,
    )(x_p, kp["w1"], kp["b1"], kp["w2"], kp["b2"],
      kp["w1cat"], kp["b1cat"], kp["w2blk"], kp["b2cat"], eps_p)

    z = out[:B, 0:latent]
    mu = out[:B, latent:2 * latent]
    logvar = out[:B, 2 * latent:3 * latent]
    return z, mu, logvar


# -----------------------------------------------------------------------------
# Parameters: PyTorch-style uniform(+-1/sqrt(fan_in)) init, then a one-time
# packing step producing the kernel-side fused / permuted layouts.
# -----------------------------------------------------------------------------
def init_params(key, input_length, latent_dim):
    ks = jax.random.split(key, 12)

    def u(k, shape, fan_in):
        b = 1.0 / np.sqrt(fan_in)
        return jax.random.uniform(k, shape, jnp.float32, -b, b)

    F = C2 * input_length
    return {
        "w1": u(ks[0], (3, C1), 1 * 3),            # conv1 weight (tap, Cout), Cin=1
        "b1": u(ks[1], (1, C1), 1 * 3),
        "w2": u(ks[2], (3, C1, C2), C1 * 3),       # conv2 weight (tap, Cin, Cout)
        "b2": u(ks[3], (1, C2), C1 * 3),
        "wm1": u(ks[4], (F, 128), F),              # fc_mu[0]   rows in torch c*L+l order
        "bm1": u(ks[5], (1, 128), F),
        "wm2": u(ks[6], (128, latent_dim), 128),   # fc_mu[2]
        "bm2": u(ks[7], (1, latent_dim), 128),
        "wl1": u(ks[8], (F, 128), F),              # fc_logvar[0]
        "bl1": u(ks[9], (1, 128), F),
        "wl2": u(ks[10], (128, latent_dim), 128),  # fc_logvar[2]
        "bl2": u(ks[11], (1, latent_dim), 128),
    }


def pack_params(params, input_length):
    """Static, one-time repacking of weights into the kernel-side layouts."""
    L = input_length
    # Kernel flattens the conv output length-major (l*64 + c); PyTorch flattens
    # channel-major (c*L + l).  Absorb the difference into the FC row order.
    perm = (np.arange(C2)[None, :] * L + np.arange(L)[:, None]).reshape(-1)
    w1cat = jnp.concatenate([params["wm1"][perm, :], params["wl1"][perm, :]],
                            axis=1).astype(jnp.bfloat16)               # (F, 256) bf16
    b1cat = jnp.concatenate([params["bm1"], params["bl1"]], axis=1)    # (1, 256)
    H, D = params["wm2"].shape
    w2blk = jnp.zeros((2 * H, 2 * D), jnp.float32)
    w2blk = w2blk.at[:H, :D].set(params["wm2"]).at[H:, D:].set(params["wl2"])
    b2cat = jnp.concatenate([params["bm2"], params["bl2"]], axis=1)    # (1, 2*latent)
    return {"w1": params["w1"], "b1": params["b1"],
            "w2": params["w2"], "b2": params["b2"],
            "w1cat": w1cat, "b1cat": b1cat, "w2blk": w2blk, "b2cat": b2cat}


# Pure-JAX reference with exact PyTorch Conv1d(pad=1) / Flatten semantics.
def reference_forward(x, params, eps):
    B, L = x.shape
    xp = jnp.pad(x, ((0, 0), (1, 1)))
    h1 = sum(xp[:, k:k + L, None] * params["w1"][k][None, None, :] for k in range(3))
    h1 = jnp.maximum(h1 + params["b1"][None, :, :], 0.0)               # (B, L, 32)
    h1p = jnp.pad(h1, ((0, 0), (1, 1), (0, 0)))
    h2 = sum(jnp.einsum("blc,cd->bld", h1p[:, k:k + L, :], params["w2"][k])
             for k in range(3))
    h2 = jnp.maximum(h2 + params["b2"][None, :, :], 0.0)               # (B, L, 64)
    h = jnp.transpose(h2, (0, 2, 1)).reshape(B, C2 * L)                # NCL flatten
    hm = jnp.maximum(h @ params["wm1"] + params["bm1"], 0.0)
    mu = hm @ params["wm2"] + params["bm2"]
    hl = jnp.maximum(h @ params["wl1"] + params["bl1"], 0.0)
    lv = hl @ params["wl2"] + params["bl2"]
    z = mu + eps * jnp.exp(0.5 * lv)
    return z, mu, lv


if __name__ == "__main__":
    B, L, LATENT = 16, 16, 16   # small shapes consistent with CNNEncoder(latent_dim, input_length)
    key = jax.random.PRNGKey(0)
    kx, kparam, ke = jax.random.split(key, 3)

    x = jax.random.normal(kx, (B, L), jnp.float32)
    params = init_params(kparam, L, LATENT)
    packed = pack_params(params, L)
    eps = jax.random.normal(ke, (B, LATENT), jnp.float32)

    z, mu, logvar = jax.block_until_ready(jax.jit(cnn_encoder_forward)(x, packed, eps))

    zr, mur, lvr = reference_forward(x, params, eps)
    assert np.allclose(np.asarray(mu), np.asarray(mur), rtol=5e-2, atol=5e-2)
    assert np.allclose(np.asarray(logvar), np.asarray(lvr), rtol=5e-2, atol=5e-2)
    assert np.allclose(np.asarray(z), np.asarray(zr), rtol=5e-2, atol=5e-2)

    print("KERNEL_OK")
</pallas_src>

<mosaic_0001>
module attributes {stable_mosaic.version = 11 : i64} {
  func.func @encoder_kernel(%arg0: i32, %arg1: memref<8x16xf32, #tpu.memory_space<vmem>>, %arg2: memref<3x32xf32, #tpu.memory_space<vmem>>, %arg3: memref<1x32xf32, #tpu.memory_space<vmem>>, %arg4: memref<3x32x64xf32, #tpu.memory_space<vmem>>, %arg5: memref<1x64xf32, #tpu.memory_space<vmem>>, %arg6: memref<1024x256xbf16, #tpu.memory_space<vmem>>, %arg7: memref<1x256xf32, #tpu.memory_space<vmem>>, %arg8: memref<256x32xf32, #tpu.memory_space<vmem>>, %arg9: memref<1x32xf32, #tpu.memory_space<vmem>>, %arg10: memref<8x16xf32, #tpu.memory_space<vmem>>, %arg11: memref<8x48xf32, #tpu.memory_space<vmem>>, %arg12: memref<8x1024xbf16, #tpu.memory_space<vmem>>) attributes {dimension_semantics = [#tpu.dimension_semantics<parallel>], iteration_bounds = array<i64: 2>, scalar_prefetch = 0 : i64, scratch_operands = 1 : i64, tpu.core_type = #tpu.core_type<tc>, window_params = [{transform_indices = @transform_0, window_bounds = array<i64: 8, 16>}, {pipeline_mode = #tpu.pipeline_mode<synchronous>, transform_indices = @transform_1, window_bounds = array<i64: 3, 32>}, {pipeline_mode = #tpu.pipeline_mode<synchronous>, transform_indices = @transform_2, window_bounds = array<i64: 1, 32>}, {pipeline_mode = #tpu.pipeline_mode<synchronous>, transform_indices = @transform_3, window_bounds = array<i64: 3, 32, 64>}, {pipeline_mode = #tpu.pipeline_mode<synchronous>, transform_indices = @transform_4, window_bounds = array<i64: 1, 64>}, {pipeline_mode = #tpu.pipeline_mode<synchronous>, transform_indices = @transform_5, window_bounds = array<i64: 1024, 256>}, {pipeline_mode = #tpu.pipeline_mode<synchronous>, transform_indices = @transform_6, window_bounds = array<i64: 1, 256>}, {pipeline_mode = #tpu.pipeline_mode<synchronous>, transform_indices = @transform_7, window_bounds = array<i64: 256, 32>}, {pipeline_mode = #tpu.pipeline_mode<synchronous>, transform_indices = @transform_8, window_bounds = array<i64: 1, 32>}, {transform_indices = @transform_9, window_bounds = array<i64: 8, 16>}, {transform_indices = @transform_10, window_bounds = array<i64: 8, 48>}]} {
    %c0 = arith.constant 0 : index
    %c0_0 = arith.constant 0 : index
    %0 = vector.load %arg1[%c0, %c0_0] : memref<8x16xf32, #tpu.memory_space<vmem>>, vector<8x16xf32>
    %c0_1 = arith.constant 0 : index
    %c0_2 = arith.constant 0 : index
    %1 = vector.load %arg2[%c0_1, %c0_2] : memref<3x32xf32, #tpu.memory_space<vmem>>, vector<3x32xf32>
    %c0_3 = arith.constant 0 : index
    %c0_4 = arith.constant 0 : index
    %c0_5 = arith.constant 0 : index
    %2 = vector.load %arg4[%c0_3, %c0_4, %c0_5] : memref<3x32x64xf32, #tpu.memory_space<vmem>>, vector<3x32x64xf32>
    %3 = tpu.iota {dimensions = array<i32: 0>} : vector<16x16xi32>
    %4 = tpu.iota {dimensions = array<i32: 1>} : vector<16x16xi32>
    %5 = arith.cmpi eq, %3, %4 : vector<16x16xi32>
    %6 = arith.extui %5 : vector<16x16xi1> to vector<16x16xi32>
    %7 = arith.sitofp %6 : vector<16x16xi32> to vector<16x16xf32>
    %cst = arith.constant dense<0.000000e+00> : vector<16x8xf32>
    %8 = tpu.matmul %7, %0, %cst {dimension_numbers = #tpu.dot_dimension_numbers<[1], [1], [0], [0], [0, 0, 1, 0], [], []>} : vector<16x16xf32>, vector<8x16xf32>, vector<16x8xf32> -> vector<16x8xf32>
    %c1_i32 = arith.constant 1 : i32
    %9 = vector.broadcast %c1_i32 : i32 to vector<16x16xi32>
    %10 = arith.addi %4, %9 : vector<16x16xi32>
    %11 = arith.cmpi eq, %3, %10 : vector<16x16xi32>
    %12 = arith.extui %11 : vector<16x16xi1> to vector<16x16xi32>
    %13 = arith.sitofp %12 : vector<16x16xi32> to vector<16x16xf32>
    %cst_6 = arith.constant dense<0.000000e+00> : vector<16x8xf32>
    %14 = tpu.matmul %13, %0, %cst_6 {dimension_numbers = #tpu.dot_dimension_numbers<[1], [1], [0], [0], [0, 0, 1, 0], [], []>} : vector<16x16xf32>, vector<8x16xf32>, vector<16x8xf32> -> vector<16x8xf32>
    %c1_i32_7 = arith.constant 1 : i32
    %15 = vector.broadcast %c1_i32_7 : i32 to vector<16x16xi32>
    %16 = arith.addi %3, %15 : vector<16x16xi32>
    %17 = arith.cmpi eq, %16, %4 : vector<16x16xi32>
    %18 = arith.extui %17 : vector<16x16xi1> to vector<16x16xi32>
    %19 = arith.sitofp %18 : vector<16x16xi32> to vector<16x16xf32>
    %cst_8 = arith.constant dense<0.000000e+00> : vector<16x8xf32>
    %20 = tpu.matmul %19, %0, %cst_8 {dimension_numbers = #tpu.dot_dimension_numbers<[1], [1], [0], [0], [0, 0, 1, 0], [], []>} : vector<16x16xf32>, vector<8x16xf32>, vector<16x8xf32> -> vector<16x8xf32>
    %21 = vector.shape_cast %14 : vector<16x8xf32> to vector<16x8x1xf32>
    %22 = vector.extract_strided_slice %1 {offsets = [0, 0], sizes = [1, 32], strides = [1, 1]} : vector<3x32xf32> to vector<1x32xf32>
    %23 = vector.shape_cast %22 : vector<1x32xf32> to vector<32xf32>
    %24 = vector.shape_cast %23 : vector<32xf32> to vector<1x1x32xf32>
    %25 = vector.broadcast %21 : vector<16x8x1xf32> to vector<16x8x32xf32>
    %26 = vector.broadcast %24 : vector<1x1x32xf32> to vector<16x8x32xf32>
    %27 = arith.mulf %25, %26 : vector<16x8x32xf32>
    %28 = vector.shape_cast %8 : vector<16x8xf32> to vector<16x8x1xf32>
    %29 = vector.extract_strided_slice %1 {offsets = [1, 0], sizes = [1, 32], strides = [1, 1]} : vector<3x32xf32> to vector<1x32xf32>
    %30 = vector.shape_cast %29 : vector<1x32xf32> to vector<32xf32>
    %31 = vector.shape_cast %30 : vector<32xf32> to vector<1x1x32xf32>
    %32 = vector.broadcast %28 : vector<16x8x1xf32> to vector<16x8x32xf32>
    %33 = vector.broadcast %31 : vector<1x1x32xf32> to vector<16x8x32xf32>
    %34 = arith.mulf %32, %33 : vector<16x8x32xf32>
    %35 = arith.addf %27, %34 : vector<16x8x32xf32>
    %36 = vector.shape_cast %20 : vector<16x8xf32> to vector<16x8x1xf32>
    %37 = vector.extract_strided_slice %1 {offsets = [2, 0], sizes = [1, 32], strides = [1, 1]} : vector<3x32xf32> to vector<1x32xf32>
    %38 = vector.shape_cast %37 : vector<1x32xf32> to vector<32xf32>
    %39 = vector.shape_cast %38 : vector<32xf32> to vector<1x1x32xf32>
    %40 = vector.broadcast %36 : vector<16x8x1xf32> to vector<16x8x32xf32>
    %41 = vector.broadcast %39 : vector<1x1x32xf32> to vector<16x8x32xf32>
    %42 = arith.mulf %40, %41 : vector<16x8x32xf32>
    %43 = arith.addf %35, %42 : vector<16x8x32xf32>
    %c0_9 = arith.constant 0 : index
    %c0_10 = arith.constant 0 : index
    %44 = vector.load %arg3[%c0_9, %c0_10] : memref<1x32xf32, #tpu.memory_space<vmem>>, vector<1x32xf32>
    %45 = vector.shape_cast %44 : vector<1x32xf32> to vector<1x1x32xf32>
    %46 = vector.broadcast %45 : vector<1x1x32xf32> to vector<16x8x32xf32>
    %47 = arith.addf %43, %46 : vector<16x8x32xf32>
    %cst_11 = arith.constant 0.000000e+00 : f32
    %48 = vector.broadcast %cst_11 : f32 to vector<16x8x32xf32>
    %49 = arith.maximumf %47, %48 : vector<16x8x32xf32>
    %50 = vector.shape_cast %49 : vector<16x8x32xf32> to vector<128x32xf32>
    %cst_12 = arith.constant 0.000000e+00 : f32
    %51 = vector.broadcast %cst_12 : f32 to vector<8x32xf32>
    %52 = vector.extract_strided_slice %50 {offsets = [0, 0], sizes = [120, 32], strides = [1, 1]} : vector<128x32xf32> to vector<120x32xf32>
    %53 = tpu.concatenate %51, %52 in 0 : vector<8x32xf32>, vector<120x32xf32> -> vector<128x32xf32>
    %54 = vector.extract_strided_slice %50 {offsets = [8, 0], sizes = [120, 32], strides = [1, 1]} : vector<128x32xf32> to vector<120x32xf32>
    %55 = tpu.concatenate %54, %51 in 0 : vector<120x32xf32>, vector<8x32xf32> -> vector<128x32xf32>
    %56 = vector.extract_strided_slice %2 {offsets = [0, 0, 0], sizes = [1, 32, 64], strides = [1, 1, 1]} : vector<3x32x64xf32> to vector<1x32x64xf32>
    %57 = vector.shape_cast %56 : vector<1x32x64xf32> to vector<32x64xf32>
    %cst_13 = arith.constant dense<0.000000e+00> : vector<128x64xf32>
    %58 = tpu.matmul %53, %57, %cst_13 {dimension_numbers = #tpu.dot_dimension_numbers<[1], [0], [0], [1], [0, 0, 1, 1], [], []>} : vector<128x32xf32>, vector<32x64xf32>, vector<128x64xf32> -> vector<128x64xf32>
    %59 = vector.extract_strided_slice %2 {offsets = [1, 0, 0], sizes = [1, 32, 64], strides = [1, 1, 1]} : vector<3x32x64xf32> to vector<1x32x64xf32>
    %60 = vector.shape_cast %59 : vector<1x32x64xf32> to vector<32x64xf32>
    %cst_14 = arith.constant dense<0.000000e+00> : vector<128x64xf32>
    %61 = tpu.matmul %50, %60, %cst_14 {dimension_numbers = #tpu.dot_dimension_numbers<[1], [0], [0], [1], [0, 0, 1, 1], [], []>} : vector<128x32xf32>, vector<32x64xf32>, vector<128x64xf32> -> vector<128x64xf32>
    %62 = arith.addf %58, %61 : vector<128x64xf32>
    %63 = vector.extract_strided_slice %2 {offsets = [2, 0, 0], sizes = [1, 32, 64], strides = [1, 1, 1]} : vector<3x32x64xf32> to vector<1x32x64xf32>
    %64 = vector.shape_cast %63 : vector<1x32x64xf32> to vector<32x64xf32>
    %cst_15 = arith.constant dense<0.000000e+00> : vector<128x64xf32>
    %65 = tpu.matmul %55, %64, %cst_15 {dimension_numbers = #tpu.dot_dimension_numbers<[1], [0], [0], [1], [0, 0, 1, 1], [], []>} : vector<128x32xf32>, vector<32x64xf32>, vector<128x64xf32> -> vector<128x64xf32>
    %66 = arith.addf %62, %65 : vector<128x64xf32>
    %c0_16 = arith.constant 0 : index
    %c0_17 = arith.constant 0 : index
    %67 = vector.load %arg5[%c0_16, %c0_17] : memref<1x64xf32, #tpu.memory_space<vmem>>, vector<1x64xf32>
    %68 = vector.broadcast %67 : vector<1x64xf32> to vector<128x64xf32>
    %69 = arith.addf %66, %68 : vector<128x64xf32>
    %cst_18 = arith.constant 0.000000e+00 : f32
    %70 = vector.broadcast %cst_18 : f32 to vector<128x64xf32>
    %71 = arith.maximumf %69, %70 : vector<128x64xf32>
    %72 = vector.extract_strided_slice %71 {offsets = [0, 0], sizes = [8, 64], strides = [1, 1]} : vector<128x64xf32> to vector<8x64xf32>
    %73 = arith.truncf %72 : vector<8x64xf32> to vector<8x64xbf16>
    %c0_19 = arith.constant 0 : index
    %c0_20 = arith.constant 0 : index
    %74 = vector.load %arg12[%c0_19, %c0_20] : memref<8x1024xbf16, #tpu.memory_space<vmem>>, vector<8x64xbf16>
    tpu.vector_store %arg12[%c0_19, %c0_20], %73 {strides = array<i32>} : memref<8x1024xbf16, #tpu.memory_space<vmem>>, vector<8x64xbf16>,
    %75 = vector.extract_strided_slice %71 {offsets = [8, 0], sizes = [8, 64], strides = [1, 1]} : vector<128x64xf32> to vector<8x64xf32>
    %76 = arith.truncf %75 : vector<8x64xf32> to vector<8x64xbf16>
    %c0_21 = arith.constant 0 : index
    %c64 = arith.constant 64 : index
    %77 = vector.load %arg12[%c0_21, %c64] : memref<8x1024xbf16, #tpu.memory_space<vmem>>, vector<8x64xbf16>
    tpu.vector_store %arg12[%c0_21, %c64], %76 {strides = array<i32>} : memref<8x1024xbf16, #tpu.memory_space<vmem>>, vector<8x64xbf16>,
    %78 = vector.extract_strided_slice %71 {offsets = [16, 0], sizes = [8, 64], strides = [1, 1]} : vector<128x64xf32> to vector<8x64xf32>
    %79 = arith.truncf %78 : vector<8x64xf32> to vector<8x64xbf16>
    %c0_22 = arith.constant 0 : index
    %c128 = arith.constant 128 : index
    %80 = vector.load %arg12[%c0_22, %c128] : memref<8x1024xbf16, #tpu.memory_space<vmem>>, vector<8x64xbf16>
    tpu.vector_store %arg12[%c0_22, %c128], %79 {strides = array<i32>} : memref<8x1024xbf16, #tpu.memory_space<vmem>>, vector<8x64xbf16>,
    %81 = vector.extract_strided_slice %71 {offsets = [24, 0], sizes = [8, 64], strides = [1, 1]} : vector<128x64xf32> to vector<8x64xf32>
    %82 = arith.truncf %81 : vector<8x64xf32> to vector<8x64xbf16>
    %c0_23 = arith.constant 0 : index
    %c192 = arith.constant 192 : index
    %83 = vector.load %arg12[%c0_23, %c192] : memref<8x1024xbf16, #tpu.memory_space<vmem>>, vector<8x64xbf16>
    tpu.vector_store %arg12[%c0_23, %c192], %82 {strides = array<i32>} : memref<8x1024xbf16, #tpu.memory_space<vmem>>, vector<8x64xbf16>,
    %84 = vector.extract_strided_slice %71 {offsets = [32, 0], sizes = [8, 64], strides = [1, 1]} : vector<128x64xf32> to vector<8x64xf32>
    %85 = arith.truncf %84 : vector<8x64xf32> to vector<8x64xbf16>
    %c0_24 = arith.constant 0 : index
    %c256 = arith.constant 256 : index
    %86 = vector.load %arg12[%c0_24, %c256] : memref<8x1024xbf16, #tpu.memory_space<vmem>>, vector<8x64xbf16>
    tpu.vector_store %arg12[%c0_24, %c256], %85 {strides = array<i32>} : memref<8x1024xbf16, #tpu.memory_space<vmem>>, vector<8x64xbf16>,
    %87 = vector.extract_strided_slice %71 {offsets = [40, 0], sizes = [8, 64], strides = [1, 1]} : vector<128x64xf32> to vector<8x64xf32>
    %88 = arith.truncf %87 : vector<8x64xf32> to vector<8x64xbf16>
    %c0_25 = arith.constant 0 : index
    %c320 = arith.constant 320 : index
    %89 = vector.load %arg12[%c0_25, %c320] : memref<8x1024xbf16, #tpu.memory_space<vmem>>, vector<8x64xbf16>
    tpu.vector_store %arg12[%c0_25, %c320], %88 {strides = array<i32>} : memref<8x1024xbf16, #tpu.memory_space<vmem>>, vector<8x64xbf16>,
    %90 = vector.extract_strided_slice %71 {offsets = [48, 0], sizes = [8, 64], strides = [1, 1]} : vector<128x64xf32> to vector<8x64xf32>
    %91 = arith.truncf %90 : vector<8x64xf32> to vector<8x64xbf16>
    %c0_26 = arith.constant 0 : index
    %c384 = arith.constant 384 : index
    %92 = vector.load %arg12[%c0_26, %c384] : memref<8x1024xbf16, #tpu.memory_space<vmem>>, vector<8x64xbf16>
    tpu.vector_store %arg12[%c0_26, %c384], %91 {strides = array<i32>} : memref<8x1024xbf16, #tpu.memory_space<vmem>>, vector<8x64xbf16>,
    %93 = vector.extract_strided_slice %71 {offsets = [56, 0], sizes = [8, 64], strides = [1, 1]} : vector<128x64xf32> to vector<8x64xf32>
    %94 = arith.truncf %93 : vector<8x64xf32> to vector<8x64xbf16>
    %c0_27 = arith.constant 0 : index
    %c448 = arith.constant 448 : index
    %95 = vector.load %arg12[%c0_27, %c448] : memref<8x1024xbf16, #tpu.memory_space<vmem>>, vector<8x64xbf16>
    tpu.vector_store %arg12[%c0_27, %c448], %94 {strides = array<i32>} : memref<8x1024xbf16, #tpu.memory_space<vmem>>, vector<8x64xbf16>,
    %96 = vector.extract_strided_slice %71 {offsets = [64, 0], sizes = [8, 64], strides = [1, 1]} : vector<128x64xf32> to vector<8x64xf32>
    %97 = arith.truncf %96 : vector<8x64xf32> to vector<8x64xbf16>
    %c0_28 = arith.constant 0 : index
    %c512 = arith.constant 512 : index
    %98 = vector.load %arg12[%c0_28, %c512] : memref<8x1024xbf16, #tpu.memory_space<vmem>>, vector<8x64xbf16>
    tpu.vector_store %arg12[%c0_28, %c512], %97 {strides = array<i32>} : memref<8x1024xbf16, #tpu.memory_space<vmem>>, vector<8x64xbf16>,
    %99 = vector.extract_strided_slice %71 {offsets = [72, 0], sizes = [8, 64], strides = [1, 1]} : vector<128x64xf32> to vector<8x64xf32>
    %100 = arith.truncf %99 : vector<8x64xf32> to vector<8x64xbf16>
    %c0_29 = arith.constant 0 : index
    %c576 = arith.constant 576 : index
    %101 = vector.load %arg12[%c0_29, %c576] : memref<8x1024xbf16, #tpu.memory_space<vmem>>, vector<8x64xbf16>
    tpu.vector_store %arg12[%c0_29, %c576], %100 {strides = array<i32>} : memref<8x1024xbf16, #tpu.memory_space<vmem>>, vector<8x64xbf16>,
    %102 = vector.extract_strided_slice %71 {offsets = [80, 0], sizes = [8, 64], strides = [1, 1]} : vector<128x64xf32> to vector<8x64xf32>
    %103 = arith.truncf %102 : vector<8x64xf32> to vector<8x64xbf16>
    %c0_30 = arith.constant 0 : index
    %c640 = arith.constant 640 : index
    %104 = vector.load %arg12[%c0_30, %c640] : memref<8x1024xbf16, #tpu.memory_space<vmem>>, vector<8x64xbf16>
    tpu.vector_store %arg12[%c0_30, %c640], %103 {strides = array<i32>} : memref<8x1024xbf16, #tpu.memory_space<vmem>>, vector<8x64xbf16>,
    %105 = vector.extract_strided_slice %71 {offsets = [88, 0], sizes = [8, 64], strides = [1, 1]} : vector<128x64xf32> to vector<8x64xf32>
    %106 = arith.truncf %105 : vector<8x64xf32> to vector<8x64xbf16>
    %c0_31 = arith.constant 0 : index
    %c704 = arith.constant 704 : index
    %107 = vector.load %arg12[%c0_31, %c704] : memref<8x1024xbf16, #tpu.memory_space<vmem>>, vector<8x64xbf16>
    tpu.vector_store %arg12[%c0_31, %c704], %106 {strides = array<i32>} : memref<8x1024xbf16, #tpu.memory_space<vmem>>, vector<8x64xbf16>,
    %108 = vector.extract_strided_slice %71 {offsets = [96, 0], sizes = [8, 64], strides = [1, 1]} : vector<128x64xf32> to vector<8x64xf32>
    %109 = arith.truncf %108 : vector<8x64xf32> to vector<8x64xbf16>
    %c0_32 = arith.constant 0 : index
    %c768 = arith.constant 768 : index
    %110 = vector.load %arg12[%c0_32, %c768] : memref<8x1024xbf16, #tpu.memory_space<vmem>>, vector<8x64xbf16>
    tpu.vector_store %arg12[%c0_32, %c768], %109 {strides = array<i32>} : memref<8x1024xbf16, #tpu.memory_space<vmem>>, vector<8x64xbf16>,
    %111 = vector.extract_strided_slice %71 {offsets = [104, 0], sizes = [8, 64], strides = [1, 1]} : vector<128x64xf32> to vector<8x64xf32>
    %112 = arith.truncf %111 : vector<8x64xf32> to vector<8x64xbf16>
    %c0_33 = arith.constant 0 : index
    %c832 = arith.constant 832 : index
    %113 = vector.load %arg12[%c0_33, %c832] : memref<8x1024xbf16, #tpu.memory_space<vmem>>, vector<8x64xbf16>
    tpu.vector_store %arg12[%c0_33, %c832], %112 {strides = array<i32>} : memref<8x1024xbf16, #tpu.memory_space<vmem>>, vector<8x64xbf16>,
    %114 = vector.extract_strided_slice %71 {offsets = [112, 0], sizes = [8, 64], strides = [1, 1]} : vector<128x64xf32> to vector<8x64xf32>
    %115 = arith.truncf %114 : vector<8x64xf32> to vector<8x64xbf16>
    %c0_34 = arith.constant 0 : index
    %c896 = arith.constant 896 : index
    %116 = vector.load %arg12[%c0_34, %c896] : memref<8x1024xbf16, #tpu.memory_space<vmem>>, vector<8x64xbf16>
    tpu.vector_store %arg12[%c0_34, %c896], %115 {strides = array<i32>} : memref<8x1024xbf16, #tpu.memory_space<vmem>>, vector<8x64xbf16>,
    %117 = vector.extract_strided_slice %71 {offsets = [120, 0], sizes = [8, 64], strides = [1, 1]} : vector<128x64xf32> to vector<8x64xf32>
    %118 = arith.truncf %117 : vector<8x64xf32> to vector<8x64xbf16>
    %c0_35 = arith.constant 0 : index
    %c960 = arith.constant 960 : index
    %119 = vector.load %arg12[%c0_35, %c960] : memref<8x1024xbf16, #tpu.memory_space<vmem>>, vector<8x64xbf16>
    tpu.vector_store %arg12[%c0_35, %c960], %118 {strides = array<i32>} : memref<8x1024xbf16, #tpu.memory_space<vmem>>, vector<8x64xbf16>,
    %c0_36 = arith.constant 0 : index
    %c0_37 = arith.constant 0 : index
    %120 = vector.load %arg12[%c0_36, %c0_37] : memref<8x1024xbf16, #tpu.memory_space<vmem>>, vector<8x1024xbf16>
    %c0_38 = arith.constant 0 : index
    %c0_39 = arith.constant 0 : index
    %121 = vector.load %arg6[%c0_38, %c0_39] : memref<1024x256xbf16, #tpu.memory_space<vmem>>, vector<1024x256xbf16>
    %cst_40 = arith.constant dense<0.000000e+00> : vector<8x256xf32>
    %122 = tpu.matmul %120, %121, %cst_40 {dimension_numbers = #tpu.dot_dimension_numbers<[1], [0], [0], [1], [0, 0, 1, 1], [], []>} : vector<8x1024xbf16>, vector<1024x256xbf16>, vector<8x256xf32> -> vector<8x256xf32>
    %c0_41 = arith.constant 0 : index
    %c0_42 = arith.constant 0 : index
    %123 = vector.load %arg7[%c0_41, %c0_42] : memref<1x256xf32, #tpu.memory_space<vmem>>, vector<1x256xf32>
    %124 = vector.broadcast %123 : vector<1x256xf32> to vector<8x256xf32>
    %125 = arith.addf %122, %124 : vector<8x256xf32>
    %cst_43 = arith.constant 0.000000e+00 : f32
    %126 = vector.broadcast %cst_43 : f32 to vector<8x256xf32>
    %127 = arith.maximumf %125, %126 : vector<8x256xf32>
    %c0_44 = arith.constant 0 : index
    %c0_45 = arith.constant 0 : index
    %128 = vector.load %arg8[%c0_44, %c0_45] : memref<256x32xf32, #tpu.memory_space<vmem>>, vector<256x32xf32>
    %cst_46 = arith.constant dense<0.000000e+00> : vector<8x32xf32>
    %129 = tpu.matmul %127, %128, %cst_46 {dimension_numbers = #tpu.dot_dimension_numbers<[1], [0], [0], [1], [0, 0, 1, 1], [], []>} : vector<8x256xf32>, vector<256x32xf32>, vector<8x32xf32> -> vector<8x32xf32>
    %c0_47 = arith.constant 0 : index
    %c0_48 = arith.constant 0 : index
    %130 = vector.load %arg9[%c0_47, %c0_48] : memref<1x32xf32, #tpu.memory_space<vmem>>, vector<1x32xf32>
    %131 = vector.broadcast %130 : vector<1x32xf32> to vector<8x32xf32>
    %132 = arith.addf %129, %131 : vector<8x32xf32>
    %133 = vector.extract_strided_slice %132 {offsets = [0, 0], sizes = [8, 16], strides = [1, 1]} : vector<8x32xf32> to vector<8x16xf32>
    %134 = vector.extract_strided_slice %132 {offsets = [0, 16], sizes = [8, 16], strides = [1, 1]} : vector<8x32xf32> to vector<8x16xf32>
    %c0_49 = arith.constant 0 : index
    %c0_50 = arith.constant 0 : index
    %135 = vector.load %arg10[%c0_49, %c0_50] : memref<8x16xf32, #tpu.memory_space<vmem>>, vector<8x16xf32>
    %cst_51 = arith.constant 5.000000e-01 : f32
    %136 = vector.broadcast %cst_51 : f32 to vector<8x16xf32>
    %137 = arith.mulf %136, %134 : vector<8x16xf32>
    %138 = math.exp %137 : vector<8x16xf32>
    %139 = arith.mulf %135, %138 : vector<8x16xf32>
    %140 = arith.addf %133, %139 : vector<8x16xf32>
    %c0_52 = arith.constant 0 : index
    %c0_53 = arith.constant 0 : index
    %141 = vector.load %arg11[%c0_52, %c0_53] : memref<8x48xf32, #tpu.memory_space<vmem>>, vector<8x16xf32>
    tpu.vector_store %arg11[%c0_52, %c0_53], %140 {strides = array<i32>} : memref<8x48xf32, #tpu.memory_space<vmem>>, vector<8x16xf32>,
    %c0_54 = arith.constant 0 : index
    %c16 = arith.constant 16 : index
    %142 = vector.load %arg11[%c0_54, %c16] : memref<8x48xf32, #tpu.memory_space<vmem>>, vector<8x16xf32>
    tpu.vector_store %arg11[%c0_54, %c16], %133 {strides = array<i32>} : memref<8x48xf32, #tpu.memory_space<vmem>>, vector<8x16xf32>,
    %c0_55 = arith.constant 0 : index
    %c32 = arith.constant 32 : index
    %143 = vector.load %arg11[%c0_55, %c32] : memref<8x48xf32, #tpu.memory_space<vmem>>, vector<8x16xf32>
    tpu.vector_store %arg11[%c0_55, %c32], %134 {strides = array<i32>} : memref<8x48xf32, #tpu.memory_space<vmem>>, vector<8x16xf32>,
    return
  }
  func.func @transform_0(%arg0: i32) -> (i32, i32) {
    %c0_i32 = arith.constant 0 : i32
    %c0_i32_0 = arith.constant 0 : i32
    return %arg0, %c0_i32 : i32, i32
  }
  func.func @transform_1(%arg0: i32) -> (i32, i32) {
    %c0_i32 = arith.constant 0 : i32
    %c0_i32_0 = arith.constant 0 : i32
    %c0_i32_1 = arith.constant 0 : i32
    return %c0_i32, %c0_i32_0 : i32, i32
  }
  func.func @transform_2(%arg0: i32) -> (i32, i32) {
    %c0_i32 = arith.constant 0 : i32
    %c0_i32_0 = arith.constant 0 : i32
    %c0_i32_1 = arith.constant 0 : i32
    return %c0_i32, %c0_i32_0 : i32, i32
  }
  func.func @transform_3(%arg0: i32) -> (i32, i32, i32) {
    %c0_i32 = arith.constant 0 : i32
    %c0_i32_0 = arith.constant 0 : i32
    %c0_i32_1 = arith.constant 0 : i32
    %c0_i32_2 = arith.constant 0 : i32
    return %c0_i32, %c0_i32_0, %c0_i32_1 : i32, i32, i32
  }
  func.func @transform_4(%arg0: i32) -> (i32, i32) {
    %c0_i32 = arith.constant 0 : i32
    %c0_i32_0 = arith.constant 0 : i32
    %c0_i32_1 = arith.constant 0 : i32
    return %c0_i32, %c0_i32_0 : i32, i32
  }
  func.func @transform_5(%arg0: i32) -> (i32, i32) {
    %c0_i32 = arith.constant 0 : i32
    %c0_i32_0 = arith.constant 0 : i32
    %c0_i32_1 = arith.constant 0 : i32
    return %c0_i32, %c0_i32_0 : i32, i32
  }
  func.func @transform_6(%arg0: i32) -> (i32, i32) {
    %c0_i32 = arith.constant 0 : i32
    %c0_i32_0 = arith.constant 0 : i32
    %c0_i32_1 = arith.constant 0 : i32
    return %c0_i32, %c0_i32_0 : i32, i32
  }
  func.func @transform_7(%arg0: i32) -> (i32, i32) {
    %c0_i32 = arith.constant 0 : i32
    %c0_i32_0 = arith.constant 0 : i32
    %c0_i32_1 = arith.constant 0 : i32
    return %c0_i32, %c0_i32_0 : i32, i32
  }
  func.func @transform_8(%arg0: i32) -> (i32, i32) {
    %c0_i32 = arith.constant 0 : i32
    %c0_i32_0 = arith.constant 0 : i32
    %c0_i32_1 = arith.constant 0 : i32
    return %c0_i32, %c0_i32_0 : i32, i32
  }
  func.func @transform_9(%arg0: i32) -> (i32, i32) {
    %c0_i32 = arith.constant 0 : i32
    %c0_i32_0 = arith.constant 0 : i32
    return %arg0, %c0_i32 : i32, i32
  }
  func.func @transform_10(%arg0: i32) -> (i32, i32) {
    %c0_i32 = arith.constant 0 : i32
    %c0_i32_0 = arith.constant 0 : i32
    return %arg0, %c0_i32 : i32, i32
  }
}

</mosaic_0001>

<llo_original>
// kernel: cnn_encoder_forward.1
$region0: #{cnn_encoder_forward.1}
  #allocation0 [shape = 'u32[]', space=smem, size = 0x4, offset = 0x4, fixed_abs, tag = 'smem constant byte address 0x4 - core index']
  #allocation1 [shape = 'u32[144,128]{1,0:T(1,128)}', space=vmem, size = 0x12000, scoped, tag = 'internal scratch']
  #allocation2 [shape = 'bf16[8,1024]{1,0:T(8,128)(2,1)}', space=vmem, size = 0x4000, scoped, tag = 'scratch operand']
  %s0 = inlined_call_operand.vmem [shape: f32[16,16], index: 0, kind: input, shape index: {}]
  %s1 = inlined_call_operand.vmem [shape: f32[3,32], index: 1, kind: input, shape index: {}]
  %s2 = inlined_call_operand.vmem [shape: f32[1,32], index: 2, kind: input, shape index: {}]
  %s3 = inlined_call_operand.vmem [shape: f32[3,32,64], index: 3, kind: input, shape index: {}]
  %s4 = inlined_call_operand.vmem [shape: f32[1,64], index: 4, kind: input, shape index: {}]
  %s5 = inlined_call_operand.hbm [shape: bf16[1024,256], index: 5, kind: input, shape index: {}]
  %s6 = inlined_call_operand.vmem [shape: f32[1,256], index: 6, kind: input, shape index: {}]
  %s7 = inlined_call_operand.vmem [shape: f32[256,32], index: 7, kind: input, shape index: {}]
  %s8 = inlined_call_operand.vmem [shape: f32[1,32], index: 8, kind: input, shape index: {}]
  %s9 = inlined_call_operand.vmem [shape: f32[16,16], index: 9, kind: input, shape index: {}]
  %s10 = inlined_call_operand.vmem [shape: f32[16,48], index: 10, kind: output, shape index: {}]
  %s11 = sld [smem:[#allocation0]]
  $region77: #{cnn_encoder_forward.1} parent=0
    _
  %s13 = ssub.s32 1, %s11
  %s14 = scalar_select 0, %s13, %s11
  $region1: #{cnn_encoder_forward.1} parent=0
    #allocation3 [shape = 'u8[524288]{0}', space=vmem, size = 0x80000, scoped, tag = 'input window, operand 5, single buffered']
    #allocation4 [shape = 's32[2]{0}', space=sflag, size = 0x8, scoped, tag = 'scoped memory for cnn_encoder_forward.1']
    %15 = vsyncpa [#allocation4], 0
    loop: start=0, step=1, limit=4
    $region2: #{cnn_encoder_forward.1} parent=1 // loop_pre_header
      _
    $region3: #{cnn_encoder_forward.1} parent=1 // loop_header
      %s17 = sphi 0, %s21
      %p18 = scmp.ge.s32.totalorder %s17, 4
      %s27 = sphi 0, %s29
      %s30 = sphi 0, %s27
      %s31 = sphi 0, %s30
      %s47 = sphi 0, %s31
      %s51 = sphi 0, %s51
      %s53 = sphi 0, %s51
      %s54 = sphi 0, %s53
      %s68 = sphi 0, %s54
      %s72 = sphi 0, %s72
      %s74 = sphi 0, %s72
      %s75 = sphi 0, %s74
      %s89 = sphi 0, %s75
      %s93 = sphi 0, %s93
      %s95 = sphi 0, %s93
      %s96 = sphi 0, %s95
      %s110 = sphi 0, %s96
      %s114 = sphi 0, %s114
      %s116 = sphi 0, %s114
      %s117 = sphi 0, %s116
      %s131 = sphi 0, %s117
      %s135 = sphi 0, %s135
      %s137 = sphi 0, %s135
      %s138 = sphi 0, %s137
      %s152 = sphi 0, %s138
      %s156 = sphi 0, %s156
      %s158 = sphi 0, %s156
      %s159 = sphi 0, %s158
      %s173 = sphi 0, %s159
      %s177 = sphi 0, %s177
      %s179 = sphi 0, %s177
      %s180 = sphi 0, %s179
      %s194 = sphi 0, %s180
      %s198 = sphi 0, %s198
      %s200 = sphi 0, %s198
      %s201 = sphi 0, %s200
      %s215 = sphi 0, %s201
      %s221 = sphi 0, %s223
      %s224 = sphi 0, %s221
      %s225 = sphi 0, %s224
      %s241 = sphi 0, %s225
      %s247 = sphi 0, %s249
      %s250 = sphi 0, %s247
      %s251 = sphi 0, %s250
      %s267 = sphi 0, %s251
    $region4: #{cnn_encoder_forward.1} parent=1 // loop_header_branch
      %20 = sbr.rel (%p18) target = $region8
    $region5: #{cnn_encoder_forward.1} parent=1 // loop_body
      %s22 = ssub.s32 %s17, 1
      %s23 = ssub.s32 %s17, 2
      %s24 = sadd.s32 %s17, 1
      %s25 = ssub.s32 %s17, %s24
      %p26 = scmp.eq.s32.totalorder %s25, 0
      %s28 = sadd.s32 %s27, 1
      %s29 = scalar_select %p26, %s27, %s28
      %p32 = pneg %p26
      %p33 = scmp.eq.s32.totalorder %s17, 1
      %p34 = por %p32, %p33
      %p35 = scmp.ne.s32.totalorder %s27, %s30
      %p36 = scmp.eq.s32.totalorder %s17, 0
      %p37 = por %p35, %p36
      %p38 = scmp.ne.s32.totalorder %s27, %s30
      %p39 = scmp.eq.s32.totalorder %s22, 1
      %p40 = por %p38, %p39
      %p41 = scmp.ne.s32.totalorder %s30, %s31
      %p42 = scmp.eq.s32.totalorder %s22, 0
      %p43 = por %p41, %p42
      %p44 = scmp.ne.s32.totalorder %s30, %s31
      %p45 = scmp.eq.s32.totalorder %s23, 1
      %p46 = por %p44, %p45
      %p48 = scmp.ne.s32.totalorder %s31, %s47
      %p49 = scmp.eq.s32.totalorder %s23, 0
      %p50 = por %p48, %p49
      %s52 = sadd.s32 %s51, 1
      %p55 = scmp.eq.s32.totalorder %s17, 1
      %p56 = scmp.ne.s32.totalorder %s51, %s53
      %p57 = scmp.eq.s32.totalorder %s17, 0
      %p58 = por %p56, %p57
      %p59 = scmp.ne.s32.totalorder %s51, %s53
      %p60 = scmp.eq.s32.totalorder %s22, 1
      %p61 = por %p59, %p60
      %p62 = scmp.ne.s32.totalorder %s53, %s54
      %p63 = scmp.eq.s32.totalorder %s22, 0
      %p64 = por %p62, %p63
      %p65 = scmp.ne.s32.totalorder %s53, %s54
      %p66 = scmp.eq.s32.totalorder %s23, 1
      %p67 = por %p65, %p66
      %p69 = scmp.ne.s32.totalorder %s54, %s68
      %p70 = scmp.eq.s32.totalorder %s23, 0
      %p71 = por %p69, %p70
      %s73 = sadd.s32 %s72, 1
      %p76 = scmp.eq.s32.totalorder %s17, 1
      %p77 = scmp.ne.s32.totalorder %s72, %s74
      %p78 = scmp.eq.s32.totalorder %s17, 0
      %p79 = por %p77, %p78
      %p80 = scmp.ne.s32.totalorder %s72, %s74
      %p81 = scmp.eq.s32.totalorder %s22, 1
      %p82 = por %p80, %p81
      %p83 = scmp.ne.s32.totalorder %s74, %s75
      %p84 = scmp.eq.s32.totalorder %s22, 0
      %p85 = por %p83, %p84
      %p86 = scmp.ne.s32.totalorder %s74, %s75
      %p87 = scmp.eq.s32.totalorder %s23, 1
      %p88 = por %p86, %p87
      %p90 = scmp.ne.s32.totalorder %s75, %s89
      %p91 = scmp.eq.s32.totalorder %s23, 0
      %p92 = por %p90, %p91
      %s94 = sadd.s32 %s93, 1
      %p97 = scmp.eq.s32.totalorder %s17, 1
      %p98 = scmp.ne.s32.totalorder %s93, %s95
      %p99 = scmp.eq.s32.totalorder %s17, 0
      %p100 = por %p98, %p99
      %p101 = scmp.ne.s32.totalorder %s93, %s95
      %p102 = scmp.eq.s32.totalorder %s22, 1
      %p103 = por %p101, %p102
      %p104 = scmp.ne.s32.totalorder %s95, %s96
      %p105 = scmp.eq.s32.totalorder %s22, 0
      %p106 = por %p104, %p105
      %p107 = scmp.ne.s32.totalorder %s95, %s96
      %p108 = scmp.eq.s32.totalorder %s23, 1
      %p109 = por %p107, %p108
      %p111 = scmp.ne.s32.totalorder %s96, %s110
      %p112 = scmp.eq.s32.totalorder %s23, 0
      %p113 = por %p111, %p112
      %s115 = sadd.s32 %s114, 1
      %p118 = scmp.eq.s32.totalorder %s17, 1
      %p119 = scmp.ne.s32.totalorder %s114, %s116
      %p120 = scmp.eq.s32.totalorder %s17, 0
      %p121 = por %p119, %p120
      %p122 = scmp.ne.s32.totalorder %s114, %s116
      %p123 = scmp.eq.s32.totalorder %s22, 1
      %p124 = por %p122, %p123
      %p125 = scmp.ne.s32.totalorder %s116, %s117
      %p126 = scmp.eq.s32.totalorder %s22, 0
      %p127 = por %p125, %p126
      %p128 = scmp.ne.s32.totalorder %s116, %s117
      %p129 = scmp.eq.s32.totalorder %s23, 1
      %p130 = por %p128, %p129
      %p132 = scmp.ne.s32.totalorder %s117, %s131
      %p133 = scmp.eq.s32.totalorder %s23, 0
      %p134 = por %p132, %p133
      %s136 = sadd.s32 %s135, 1
      %p139 = scmp.eq.s32.totalorder %s17, 1
      %p140 = scmp.ne.s32.totalorder %s135, %s137
      %p141 = scmp.eq.s32.totalorder %s17, 0
      %p142 = por %p140, %p141
      %p143 = scmp.ne.s32.totalorder %s135, %s137
      %p144 = scmp.eq.s32.totalorder %s22, 1
      %p145 = por %p143, %p144
      %p146 = scmp.ne.s32.totalorder %s137, %s138
      %p147 = scmp.eq.s32.totalorder %s22, 0
      %p148 = por %p146, %p147
      %p149 = scmp.ne.s32.totalorder %s137, %s138
      %p150 = scmp.eq.s32.totalorder %s23, 1
      %p151 = por %p149, %p150
      %p153 = scmp.ne.s32.totalorder %s138, %s152
      %p154 = scmp.eq.s32.totalorder %s23, 0
      %p155 = por %p153, %p154
      %s157 = sadd.s32 %s156, 1
      %p160 = scmp.eq.s32.totalorder %s17, 1
      %p161 = scmp.ne.s32.totalorder %s156, %s158
      %p162 = scmp.eq.s32.totalorder %s17, 0
      %p163 = por %p161, %p162
      %p164 = scmp.ne.s32.totalorder %s156, %s158
      %p165 = scmp.eq.s32.totalorder %s22, 1
      %p166 = por %p164, %p165
      %p167 = scmp.ne.s32.totalorder %s158, %s159
      %p168 = scmp.eq.s32.totalorder %s22, 0
      %p169 = por %p167, %p168
      %p170 = scmp.ne.s32.totalorder %s158, %s159
      %p171 = scmp.eq.s32.totalorder %s23, 1
      %p172 = por %p170, %p171
      %p174 = scmp.ne.s32.totalorder %s159, %s173
      %p175 = scmp.eq.s32.totalorder %s23, 0
      %p176 = por %p174, %p175
      %s178 = sadd.s32 %s177, 1
      %p181 = scmp.eq.s32.totalorder %s17, 1
      %p182 = scmp.ne.s32.totalorder %s177, %s179
      %p183 = scmp.eq.s32.totalorder %s17, 0
      %p184 = por %p182, %p183
      %p185 = scmp.ne.s32.totalorder %s177, %s179
      %p186 = scmp.eq.s32.totalorder %s22, 1
      %p187 = por %p185, %p186
      %p188 = scmp.ne.s32.totalorder %s179, %s180
      %p189 = scmp.eq.s32.totalorder %s22, 0
      %p190 = por %p188, %p189
      %p191 = scmp.ne.s32.totalorder %s179, %s180
      %p192 = scmp.eq.s32.totalorder %s23, 1
      %p193 = por %p191, %p192
      %p195 = scmp.ne.s32.totalorder %s180, %s194
      %p196 = scmp.eq.s32.totalorder %s23, 0
      %p197 = por %p195, %p196
      %s199 = sadd.s32 %s198, 1
      %p202 = scmp.eq.s32.totalorder %s17, 1
      %p203 = scmp.ne.s32.totalorder %s198, %s200
      %p204 = scmp.eq.s32.totalorder %s17, 0
      %p205 = por %p203, %p204
      %p206 = scmp.ne.s32.totalorder %s198, %s200
      %p207 = scmp.eq.s32.totalorder %s22, 1
      %p208 = por %p206, %p207
      %p209 = scmp.ne.s32.totalorder %s200, %s201
      %p210 = scmp.eq.s32.totalorder %s22, 0
      %p211 = por %p209, %p210
      %p212 = scmp.ne.s32.totalorder %s200, %s201
      %p213 = scmp.eq.s32.totalorder %s23, 1
      %p214 = por %p212, %p213
      %p216 = scmp.ne.s32.totalorder %s201, %s215
      %p217 = scmp.eq.s32.totalorder %s23, 0
      %p218 = por %p216, %p217
      %s219 = ssub.s32 %s17, %s24
      %p220 = scmp.eq.s32.totalorder %s219, 0
      %s222 = sadd.s32 %s221, 1
      %s223 = scalar_select %p220, %s221, %s222
      %p226 = pneg %p220
      %p227 = scmp.eq.s32.totalorder %s17, 1
      %p228 = por %p226, %p227
      %p229 = scmp.ne.s32.totalorder %s221, %s224
      %p230 = scmp.eq.s32.totalorder %s17, 0
      %p231 = por %p229, %p230
      %p232 = scmp.ne.s32.totalorder %s221, %s224
      %p233 = scmp.eq.s32.totalorder %s22, 1
      %p234 = por %p232, %p233
      %p235 = scmp.ne.s32.totalorder %s224, %s225
      %p236 = scmp.eq.s32.totalorder %s22, 0
      %p237 = por %p235, %p236
      %p238 = scmp.ne.s32.totalorder %s224, %s225
      %p239 = scmp.eq.s32.totalorder %s23, 1
      %p240 = por %p238, %p239
      %p242 = scmp.ne.s32.totalorder %s225, %s241
      %p243 = scmp.eq.s32.totalorder %s23, 0
      %p244 = por %p242, %p243
      %s245 = ssub.s32 %s17, %s24
      %p246 = scmp.eq.s32.totalorder %s245, 0
      %s248 = sadd.s32 %s247, 1
      %s249 = scalar_select %p246, %s247, %s248
      %p252 = pneg %p246
      %p253 = scmp.eq.s32.totalorder %s17, 1
      %p254 = por %p252, %p253
      %p255 = scmp.ne.s32.totalorder %s247, %s250
      %p256 = scmp.eq.s32.totalorder %s17, 0
      %p257 = por %p255, %p256
      %p258 = scmp.ne.s32.totalorder %s247, %s250
      %p259 = scmp.eq.s32.totalorder %s22, 1
      %p260 = por %p258, %p259
      %p261 = scmp.ne.s32.totalorder %s250, %s251
      %p262 = scmp.eq.s32.totalorder %s22, 0
      %p263 = por %p261, %p262
      %p264 = scmp.ne.s32.totalorder %s250, %s251
      %p265 = scmp.eq.s32.totalorder %s23, 1
      %p266 = por %p264, %p265
      %p268 = scmp.ne.s32.totalorder %s251, %s267
      %p269 = scmp.eq.s32.totalorder %s23, 0
      %p270 = por %p268, %p269
      %p271 = scmp.le.s32.totalorder 1, %s17
      %p272 = scmp.lt.s32.totalorder %s17, 3
      %p273 = pnand %p271, %p272
      %p274 = pneg %p273
      // Predicated region
      $region9: #{cnn_encoder_forward.1} parent=5 // pred_check
        _
      $region10: #{cnn_encoder_forward.1} parent=5 // pred_check_branch
        %276 = sbr.rel (%p273) target = $region12
      $region11: #{cnn_encoder_forward.1} parent=5 // pred_region
        %s277 = ssub.s32 %s17, 1
        // Predicated region
        $region13: #{cnn_encoder_forward.1} parent=11 // pred_check
          %p278 = pneg %p64
        $region14: #{cnn_encoder_forward.1} parent=11 // pred_check_branch
          %280 = sbr.rel (%p278) target = $region16
        $region15: #{cnn_encoder_forward.1} parent=11 // pred_region
          _
        $region16: #{cnn_encoder_forward.1} parent=11 // pred_fallthru
          _
        // Predicated region
        $region17: #{cnn_encoder_forward.1} parent=11 // pred_check
          %p281 = pneg %p85
        $region18: #{cnn_encoder_forward.1} parent=11 // pred_check_branch
          %283 = sbr.rel (%p281) target = $region20
        $region19: #{cnn_encoder_forward.1} parent=11 // pred_region
          _
        $region20: #{cnn_encoder_forward.1} parent=11 // pred_fallthru
          _
        // Predicated region
        $region21: #{cnn_encoder_forward.1} parent=11 // pred_check
          %p284 = pneg %p106
        $region22: #{cnn_encoder_forward.1} parent=11 // pred_check_branch
          %286 = sbr.rel (%p284) target = $region24
        $region23: #{cnn_encoder_forward.1} parent=11 // pred_region
          _
        $region24: #{cnn_encoder_forward.1} parent=11 // pred_fallthru
          _
        // Predicated region
        $region25: #{cnn_encoder_forward.1} parent=11 // pred_check
          %p287 = pneg %p127
        $region26: #{cnn_encoder_forward.1} parent=11 // pred_check_branch
          %289 = sbr.rel (%p287) target = $region28
        $region27: #{cnn_encoder_forward.1} parent=11 // pred_region
          _
        $region28: #{cnn_encoder_forward.1} parent=11 // pred_fallthru
          _
        // Predicated region
        $region29: #{cnn_encoder_forward.1} parent=11 // pred_check
          %p290 = pneg %p148
        $region30: #{cnn_encoder_forward.1} parent=11 // pred_check_branch
          %292 = sbr.rel (%p290) target = $region32
        $region31: #{cnn_encoder_forward.1} parent=11 // pred_region
          %s294 = ssub.s32 16384, 16384
          %295 = vsyncadd [#allocation4], %s294
          %s296 = sshll.u32 [#allocation3], 4
          %s297 = int_to_ptr.vmem [resolvable:$true] %s296
          %302 = dma.hbm_to_vmem [thread:$0]  %s5, 16384, %s297, [#allocation4], 128, 128, 8
        $region32: #{cnn_encoder_forward.1} parent=11 // pred_fallthru
          _
        // Predicated region
        $region33: #{cnn_encoder_forward.1} parent=11 // pred_check
          %p303 = pneg %p169
        $region34: #{cnn_encoder_forward.1} parent=11 // pred_check_branch
          %305 = sbr.rel (%p303) target = $region36
        $region35: #{cnn_encoder_forward.1} parent=11 // pred_region
          _
        $region36: #{cnn_encoder_forward.1} parent=11 // pred_fallthru
          _
        // Predicated region
        $region37: #{cnn_encoder_forward.1} parent=11 // pred_check
          %p306 = pneg %p190
        $region38: #{cnn_encoder_forward.1} parent=11 // pred_check_branch
          %308 = sbr.rel (%p306) target = $region40
        $region39: #{cnn_encoder_forward.1} parent=11 // pred_region
          _
        $region40: #{cnn_encoder_forward.1} parent=11 // pred_fallthru
          _
        // Predicated region
        $region41: #{cnn_encoder_forward.1} parent=11 // pred_check
          %p309 = pneg %p211
        $region42: #{cnn_encoder_forward.1} parent=11 // pred_check_branch
          %311 = sbr.rel (%p309) target = $region44
        $region43: #{cnn_encoder_forward.1} parent=11 // pred_region
          _
        $region44: #{cnn_encoder_forward.1} parent=11 // pred_fallthru
          _
      $region12: #{cnn_encoder_forward.1} parent=5 // pred_fallthru
        _
      %p312 = scmp.lt.s32.totalorder %s17, 2
      // Predicated region
      $region45: #{cnn_encoder_forward.1} parent=5 // pred_check
        %p313 = pneg %p312
      $region46: #{cnn_encoder_forward.1} parent=5 // pred_check_branch
        %315 = sbr.rel (%p313) target = $region48
      $region47: #{cnn_encoder_forward.1} parent=5 // pred_region
        // Predicated region
        $region49: #{cnn_encoder_forward.1} parent=47 // pred_check
          %p316 = pneg %p37
        $region50: #{cnn_encoder_forward.1} parent=47 // pred_check_branch
          %318 = sbr.rel (%p316) target = $region52
        $region51: #{cnn_encoder_forward.1} parent=47 // pred_region
          %p319 = scmp.lt.s32.totalorder %s17, 1
          %s320 = scalar_select %p319, %s17, 1
          %s321 = smul.addr %s320, 8
          %s322 = scalar_lea.vmem %s0, %s321
        $region52: #{cnn_encoder_forward.1} parent=47 // pred_fallthru
          _
        // Predicated region
        $region53: #{cnn_encoder_forward.1} parent=47 // pred_check
          %p323 = pneg %p231
        $region54: #{cnn_encoder_forward.1} parent=47 // pred_check_branch
          %325 = sbr.rel (%p323) target = $region56
        $region55: #{cnn_encoder_forward.1} parent=47 // pred_region
          %p326 = scmp.lt.s32.totalorder %s17, 1
          %s327 = scalar_select %p326, %s17, 1
          %s328 = smul.addr %s327, 8
          %s329 = scalar_lea.vmem %s9, %s328
        $region56: #{cnn_encoder_forward.1} parent=47 // pred_fallthru
          _
      $region48: #{cnn_encoder_forward.1} parent=5 // pred_fallthru
        _
      %p330 = scmp.le.s32.totalorder 1, %s17
      %p331 = scmp.lt.s32.totalorder %s17, 3
      %p332 = pnand %p330, %p331
      %p333 = pneg %p332
      // Predicated region
      $region57: #{cnn_encoder_forward.1} parent=5 // pred_check
        _
      $region58: #{cnn_encoder_forward.1} parent=5 // pred_check_branch
        %335 = sbr.rel (%p332) target = $region60
      $region59: #{cnn_encoder_forward.1} parent=5 // pred_region
        %s336 = ssub.s32 %s17, 1
        // Predicated region
        $region61: #{cnn_encoder_forward.1} parent=59 // pred_check
          %p337 = pneg %p148
        $region62: #{cnn_encoder_forward.1} parent=59 // pred_check_branch
          %339 = sbr.rel (%p337) target = $region64
        $region63: #{cnn_encoder_forward.1} parent=59 // pred_region
          %340 = dma.done [#allocation4], 16384
        $region64: #{cnn_encoder_forward.1} parent=59 // pred_fallthru
          _
        %p341 = scmp.lt.s32.totalorder %s22, 1
        %s342 = scalar_select %p341, %s22, 1
        %s343 = smul.addr %s342, 8
        %s344 = scalar_lea.vmem %s0, %s343
        %p345 = pneg %p43
        %p346 = pneg %p40
        %p347 = pneg %p64
        %p348 = pneg %p61
        %p349 = pneg %p85
        %p350 = pneg %p82
        %p351 = pneg %p106
        %p352 = pneg %p103
        %p353 = pneg %p127
        %p354 = pneg %p124
        %p355 = pneg %p148
        %p356 = pneg %p145
        %p357 = pneg %p169
        %p358 = pneg %p166
        %p359 = pneg %p190
        %p360 = pneg %p187
        %p361 = pneg %p211
        %p362 = pneg %p208
        %p363 = scmp.lt.s32.totalorder %s22, 1
        %s364 = scalar_select %p363, %s22, 1
        %s365 = smul.addr %s364, 8
        %s366 = scalar_lea.vmem %s9, %s365
        %p367 = pneg %p237
        %p368 = pneg %p234
        %p369 = pneg %p263
        %p370 = pneg %p260
        %p371 = scmp.lt.s32.totalorder %s22, 1
        %s372 = scalar_select %p371, %s22, 1
        %s373 = smul.addr %s372, 8
        %s374 = scalar_lea.vmem %s10, %s373
        %p375 = scmp.lt.s32.totalorder %s22, 1
        %s376 = scalar_select %p375, %s22, 1
        %s377 = smul.addr %s376, 8
        %s378 = scalar_lea.vmem %s0, %s377
        %p379 = scmp.lt.s32.totalorder %s22, 1
        %s380 = scalar_select %p379, %s22, 1
        %s381 = smul.addr %s380, 8
        %s382 = scalar_lea.vmem %s9, %s381
        %p383 = scmp.lt.s32.totalorder %s22, 1
        %s384 = scalar_select %p383, %s22, 1
        %s385 = smul.addr %s384, 8
        %s386 = scalar_lea.vmem %s10, %s385
        %v387 = vld [vmem:[%s378] sm:$0xff]
        %v388 = vld [vmem:[%s1] sm:$0x7]
        %v389 = vld [vmem:[%s3] sm:$0xff]
        %v390 = vld [vmem:[%s3 + $0x8] sm:$0xff]
        %v391 = vld [vmem:[%s3 + $0x10] sm:$0xff]
        %v392 = vld [vmem:[%s3 + $0x18] sm:$0xff]
        %v393 = vld [vmem:[%s3 + $0x20] sm:$0xff]
        %v394 = vld [vmem:[%s3 + $0x28] sm:$0xff]
        %v395 = vld [vmem:[%s3 + $0x30] sm:$0xff]
        %v396 = vld [vmem:[%s3 + $0x38] sm:$0xff]
        %v397 = vld [vmem:[%s3 + $0x40] sm:$0xff]
        %v398 = vld [vmem:[%s3 + $0x48] sm:$0xff]
        %v399 = vld [vmem:[%s3 + $0x50] sm:$0xff]
        %v400 = vld [vmem:[%s3 + $0x58] sm:$0xff]
        %v401 = vlaneseq
        %v402 = vshrl.u32 %v401, 7
        %v403 = vadd.s32 %v402, 8
        %v404 = vlaneseq
        %v405 = vand.u32 %v404, 127
        %vm406 = vcmp.eq.s32.totalorder %v402, %v405
        %vm407 = vcmp.eq.s32.totalorder %v403, %v405
        %v408 = vsel %vm406, 1, 0
        %v409 = vsel %vm407, 1, 0
        %v410 = vcvt.s32.f32 %v408
        %v411 = vcvt.s32.f32 %v409
        %vm412 = vcmask 130048
        %v414 = vsel %vm412, %v410, 0
        %v417 = vsel %vm412, %v411, 0
        %v420 = vsel %vm412, %v387, 0
        %422 = vmatprep.subr.mxu0 0.0
        %423 = vmatpush1.xpose.msra.mxu0 %v420
        %424 = vmatprep.subr.mxu0 0.0
        %425 = vmatpush1.xpose.msra.mxu0 0.0
        %426 = vmatprep.subr.mxu0 0.0
        %427 = vmatpush1.xpose.msra.mxu0 0.0
        %428 = vmatprep.subr.mxu0 0.0
        %429 = vmatpush1.xpose.msra.mxu0 0.0
        %430 = vmatprep.subr.mxu0 0.0
        %431 = vmatpush1.xpose.msra.mxu0 0.0
        %432 = vmatprep.subr.mxu0 0.0
        %433 = vmatpush1.xpose.msra.mxu0 0.0
        %434 = vmatprep.subr.mxu0 0.0
        %435 = vmatpush1.xpose.msra.mxu0 0.0
        %436 = vmatprep.subr.mxu0 0.0
        %437 = vmatpush1.xpose.msra.mxu0 0.0
        %438 = vmatprep.subr.mxu0 0.0
        %439 = vmatpush1.xpose.msra.mxu0 0.0
        %440 = vmatprep.subr.mxu0 0.0
        %441 = vmatpush1.xpose.msra.mxu0 0.0
        %442 = vmatprep.subr.mxu0 0.0
        %443 = vmatpush1.xpose.msra.mxu0 0.0
        %444 = vmatprep.subr.mxu0 0.0
        %445 = vmatpush1.xpose.msra.mxu0 0.0
        %446 = vmatprep.subr.mxu0 0.0
        %447 = vmatpush1.xpose.msra.mxu0 0.0
        %448 = vmatprep.subr.mxu0 0.0
        %449 = vmatpush1.xpose.msra.mxu0 0.0
        %450 = vmatprep.subr.mxu0 0.0
        %451 = vmatpush1.xpose.msra.mxu0 0.0
        %452 = vmatprep.subr.mxu0 0.0
        %453 = vmatpush1.xpose.msra.mxu0 0.0
        %454 = vmatprep.subr.mxu0 0.0
        %455 = vmatpush1.xpose.msra.mxu0 0.0
        %456 = vmatprep.subr.mxu0 0.0
        %457 = vmatpush1.xpose.msra.mxu0 0.0
        %458 = vmatprep.subr.mxu0 0.0
        %459 = vmatpush1.xpose.msra.mxu0 0.0
        %460 = vmatprep.subr.mxu0 0.0
        %461 = vmatpush1.xpose.msra.mxu0 0.0
        %462 = vmatprep.subr.mxu0 0.0
        %463 = vmatpush1.xpose.msra.mxu0 0.0
        %464 = vmatprep.subr.mxu0 0.0
        %465 = vmatpush1.xpose.msra.mxu0 0.0
        %466 = vmatprep.subr.mxu0 0.0
        %467 = vmatpush1.xpose.msra.mxu0 0.0
        %468 = vmatprep.subr.mxu0 0.0
        %469 = vmatpush1.xpose.msra.mxu0 0.0
        %470 = vmatprep.subr.mxu0 0.0
        %471 = vmatpush1.xpose.msra.mxu0 0.0
        %472 = vmatprep.subr.mxu0 0.0
        %473 = vmatpush1.xpose.msra.mxu0 0.0
        %474 = vmatprep.subr.mxu0 0.0
        %475 = vmatpush1.xpose.msra.mxu0 0.0
        %476 = vmatprep.subr.mxu0 0.0
        %477 = vmatpush1.xpose.msra.mxu0 0.0
        %478 = vmatprep.subr.mxu0 0.0
        %479 = vmatpush1.xpose.msra.mxu0 0.0
        %480 = vmatprep.subr.mxu0 0.0
        %481 = vmatpush1.xpose.msra.mxu0 0.0
        %482 = vmatprep.subr.mxu0 0.0
        %483 = vmatpush1.xpose.msra.mxu0 0.0
        %484 = vmatprep.subr.mxu0 0.0
        %485 = vmatpush1.xpose.msra.mxu0 0.0
        %486 = vmatprep.mubr.f32.mxu0 0.0
        %487 = vmatmul.mubr.f32.gmra.mrb[0].mxu0 %v414
        %v488 = vpop.f32.mrb[0].mxu0
        %v489 = vadd.f32 0.0, %v488
        %v490 = vpop.f32.mrb[0].mxu0
        %491 = vmatprep.mubr.f32.mxu0 0.0
        %492 = vmatmul.mubr.f32.gmra.mrb[0].mxu0 %v417
        %v493 = vpop.f32.mrb[0].mxu0
        %v494 = vadd.f32 0.0, %v493
        %v495 = vpop.f32.mrb[0].mxu0
        %496 = vdwg.mxu0
        %v497 = vadd.s32 %v405, 1
        %vm498 = vcmp.eq.s32.totalorder %v402, %v497
        %vm499 = vcmp.eq.s32.totalorder %v403, %v497
        %v500 = vsel %vm498, 1, 0
        %v501 = vsel %vm499, 1, 0
        %v502 = vcvt.s32.f32 %v500
        %v503 = vcvt.s32.f32 %v501
        %v505 = vsel %vm412, %v502, 0
        %v508 = vsel %vm412, %v503, 0
        %510 = vmatprep.subr.mxu0 0.0
        %511 = vmatpush1.xpose.msra.mxu0 %v420
        %512 = vmatprep.subr.mxu0 0.0
        %513 = vmatpush1.xpose.msra.mxu0 0.0
        %514 = vmatprep.subr.mxu0 0.0
        %515 = vmatpush1.xpose.msra.mxu0 0.0
        %516 = vmatprep.subr.mxu0 0.0
        %517 = vmatpush1.xpose.msra.mxu0 0.0
        %518 = vmatprep.subr.mxu0 0.0
        %519 = vmatpush1.xpose.msra.mxu0 0.0
        %520 = vmatprep.subr.mxu0 0.0
        %521 = vmatpush1.xpose.msra.mxu0 0.0
        %522 = vmatprep.subr.mxu0 0.0
        %523 = vmatpush1.xpose.msra.mxu0 0.0
        %524 = vmatprep.subr.mxu0 0.0
        %525 = vmatpush1.xpose.msra.mxu0 0.0
        %526 = vmatprep.subr.mxu0 0.0
        %527 = vmatpush1.xpose.msra.mxu0 0.0
        %528 = vmatprep.subr.mxu0 0.0
        %529 = vmatpush1.xpose.msra.mxu0 0.0
        %530 = vmatprep.subr.mxu0 0.0
        %531 = vmatpush1.xpose.msra.mxu0 0.0
        %532 = vmatprep.subr.mxu0 0.0
        %533 = vmatpush1.xpose.msra.mxu0 0.0
        %534 = vmatprep.subr.mxu0 0.0
        %535 = vmatpush1.xpose.msra.mxu0 0.0
        %536 = vmatprep.subr.mxu0 0.0
        %537 = vmatpush1.xpose.msra.mxu0 0.0
        %538 = vmatprep.subr.mxu0 0.0
        %539 = vmatpush1.xpose.msra.mxu0 0.0
        %540 = vmatprep.subr.mxu0 0.0
        %541 = vmatpush1.xpose.msra.mxu0 0.0
        %542 = vmatprep.subr.mxu0 0.0
        %543 = vmatpush1.xpose.msra.mxu0 0.0
        %544 = vmatprep.subr.mxu0 0.0
        %545 = vmatpush1.xpose.msra.mxu0 0.0
        %546 = vmatprep.subr.mxu0 0.0
        %547 = vmatpush1.xpose.msra.mxu0 0.0
        %548 = vmatprep.subr.mxu0 0.0
        %549 = vmatpush1.xpose.msra.mxu0 0.0
        %550 = vmatprep.subr.mxu0 0.0
        %551 = vmatpush1.xpose.msra.mxu0 0.0
        %552 = vmatprep.subr.mxu0 0.0
        %553 = vmatpush1.xpose.msra.mxu0 0.0
        %554 = vmatprep.subr.mxu0 0.0
        %555 = vmatpush1.xpose.msra.mxu0 0.0
        %556 = vmatprep.subr.mxu0 0.0
        %557 = vmatpush1.xpose.msra.mxu0 0.0
        %558 = vmatprep.subr.mxu0 0.0
        %559 = vmatpush1.xpose.msra.mxu0 0.0
        %560 = vmatprep.subr.mxu0 0.0
        %561 = vmatpush1.xpose.msra.mxu0 0.0
        %562 = vmatprep.subr.mxu0 0.0
        %563 = vmatpush1.xpose.msra.mxu0 0.0
        %564 = vmatprep.subr.mxu0 0.0
        %565 = vmatpush1.xpose.msra.mxu0 0.0
        %566 = vmatprep.subr.mxu0 0.0
        %567 = vmatpush1.xpose.msra.mxu0 0.0
        %568 = vmatprep.subr.mxu0 0.0
        %569 = vmatpush1.xpose.msra.mxu0 0.0
        %570 = vmatprep.subr.mxu0 0.0
        %571 = vmatpush1.xpose.msra.mxu0 0.0
        %572 = vmatprep.subr.mxu0 0.0
        %573 = vmatpush1.xpose.msra.mxu0 0.0
        %574 = vmatprep.mubr.f32.mxu0 0.0
        %575 = vmatmul.mubr.f32.gmra.mrb[0].mxu0 %v505
        %v576 = vpop.f32.mrb[0].mxu0
        %v577 = vadd.f32 0.0, %v576
        %v578 = vpop.f32.mrb[0].mxu0
        %579 = vmatprep.mubr.f32.mxu0 0.0
        %580 = vmatmul.mubr.f32.gmra.mrb[0].mxu0 %v508
        %v581 = vpop.f32.mrb[0].mxu0
        %v582 = vadd.f32 0.0, %v581
        %v583 = vpop.f32.mrb[0].mxu0
        %584 = vdwg.mxu0
        %v585 = vadd.s32 %v402, 1
        %v586 = vadd.s32 %v403, 1
        %vm587 = vcmp.eq.s32.totalorder %v585, %v405
        %vm588 = vcmp.eq.s32.totalorder %v586, %v405
        %v589 = vsel %vm587, 1, 0
        %v590 = vsel %vm588, 1, 0
        %v591 = vcvt.s32.f32 %v589
        %v592 = vcvt.s32.f32 %v590
        %v594 = vsel %vm412, %v591, 0
        %v597 = vsel %vm412, %v592, 0
        %599 = vmatprep.subr.mxu0 0.0
        %600 = vmatpush1.xpose.msra.mxu0 %v420
        %601 = vmatprep.subr.mxu0 0.0
        %602 = vmatpush1.xpose.msra.mxu0 0.0
        %603 = vmatprep.subr.mxu0 0.0
        %604 = vmatpush1.xpose.msra.mxu0 0.0
        %605 = vmatprep.subr.mxu0 0.0
        %606 = vmatpush1.xpose.msra.mxu0 0.0
        %607 = vmatprep.subr.mxu0 0.0
        %608 = vmatpush1.xpose.msra.mxu0 0.0
        %609 = vmatprep.subr.mxu0 0.0
        %610 = vmatpush1.xpose.msra.mxu0 0.0
        %611 = vmatprep.subr.mxu0 0.0
        %612 = vmatpush1.xpose.msra.mxu0 0.0
        %613 = vmatprep.subr.mxu0 0.0
        %614 = vmatpush1.xpose.msra.mxu0 0.0
        %615 = vmatprep.subr.mxu0 0.0
        %616 = vmatpush1.xpose.msra.mxu0 0.0
        %617 = vmatprep.subr.mxu0 0.0
        %618 = vmatpush1.xpose.msra.mxu0 0.0
        %619 = vmatprep.subr.mxu0 0.0
        %620 = vmatpush1.xpose.msra.mxu0 0.0
        %621 = vmatprep.subr.mxu0 0.0
        %622 = vmatpush1.xpose.msra.mxu0 0.0
        %623 = vmatprep.subr.mxu0 0.0
        %624 = vmatpush1.xpose.msra.mxu0 0.0
        %625 = vmatprep.subr.mxu0 0.0
        %626 = vmatpush1.xpose.msra.mxu0 0.0
        %627 = vmatprep.subr.mxu0 0.0
        %628 = vmatpush1.xpose.msra.mxu0 0.0
        %629 = vmatprep.subr.mxu0 0.0
        %630 = vmatpush1.xpose.msra.mxu0 0.0
        %631 = vmatprep.subr.mxu0 0.0
        %632 = vmatpush1.xpose.msra.mxu0 0.0
        %633 = vmatprep.subr.mxu0 0.0
        %634 = vmatpush1.xpose.msra.mxu0 0.0
        %635 = vmatprep.subr.mxu0 0.0
        %636 = vmatpush1.xpose.msra.mxu0 0.0
        %637 = vmatprep.subr.mxu0 0.0
        %638 = vmatpush1.xpose.msra.mxu0 0.0
        %639 = vmatprep.subr.mxu0 0.0
        %640 = vmatpush1.xpose.msra.mxu0 0.0
        %641 = vmatprep.subr.mxu0 0.0
        %642 = vmatpush1.xpose.msra.mxu0 0.0
        %643 = vmatprep.subr.mxu0 0.0
        %644 = vmatpush1.xpose.msra.mxu0 0.0
        %645 = vmatprep.subr.mxu0 0.0
        %646 = vmatpush1.xpose.msra.mxu0 0.0
        %647 = vmatprep.subr.mxu0 0.0
        %648 = vmatpush1.xpose.msra.mxu0 0.0
        %649 = vmatprep.subr.mxu0 0.0
        %650 = vmatpush1.xpose.msra.mxu0 0.0
        %651 = vmatprep.subr.mxu0 0.0
        %652 = vmatpush1.xpose.msra.mxu0 0.0
        %653 = vmatprep.subr.mxu0 0.0
        %654 = vmatpush1.xpose.msra.mxu0 0.0
        %655 = vmatprep.subr.mxu0 0.0
        %656 = vmatpush1.xpose.msra.mxu0 0.0
        %657 = vmatprep.subr.mxu0 0.0
        %658 = vmatpush1.xpose.msra.mxu0 0.0
        %659 = vmatprep.subr.mxu0 0.0
        %660 = vmatpush1.xpose.msra.mxu0 0.0
        %661 = vmatprep.subr.mxu0 0.0
        %662 = vmatpush1.xpose.msra.mxu0 0.0
        %663 = vmatprep.mubr.f32.mxu0 0.0
        %664 = vmatmul.mubr.f32.gmra.mrb[0].mxu0 %v594
        %v665 = vpop.f32.mrb[0].mxu0
        %v666 = vadd.f32 0.0, %v665
        %v667 = vpop.f32.mrb[0].mxu0
        %668 = vmatprep.mubr.f32.mxu0 0.0
        %669 = vmatmul.mubr.f32.gmra.mrb[0].mxu0 %v597
        %v670 = vpop.f32.mrb[0].mxu0
        %v671 = vadd.f32 0.0, %v670
        %v672 = vpop.f32.mrb[0].mxu0
        %673 = vdwg.mxu0
        %v674 = vlaneseq
        %v675 = vshrl.u32 %v674, 7
        %v676 = vsub.s32 0, %v675
        %v677 = vrot.slane %v577, %v676
        %679 = vbcast.lane.b32.xlu0 %v677, 256
        %v680 = vpop.permute.xlu0 %679
        %v681 = vlaneseq
        %v682 = vshrl.u32 %v681, 7
        %v683 = vsub.s32 1, %v682
        %v684 = vrot.slane %v577, %v683
        %686 = vbcast.lane.b32.xlu0 %v684, 256
        %v687 = vpop.permute.xlu0 %686
        %v688 = vlaneseq
        %v689 = vshrl.u32 %v688, 7
        %v690 = vsub.s32 2, %v689
        %v691 = vrot.slane %v577, %v690
        %693 = vbcast.lane.b32.xlu0 %v691, 256
        %v694 = vpop.permute.xlu0 %693
        %v695 = vlaneseq
        %v696 = vshrl.u32 %v695, 7
        %v697 = vsub.s32 3, %v696
        %v698 = vrot.slane %v577, %v697
        %700 = vbcast.lane.b32.xlu0 %v698, 256
        %v701 = vpop.permute.xlu0 %700
        %v702 = vlaneseq
        %v703 = vshrl.u32 %v702, 7
        %v704 = vsub.s32 4, %v703
        %v705 = vrot.slane %v577, %v704
        %707 = vbcast.lane.b32.xlu0 %v705, 256
        %v708 = vpop.permute.xlu0 %707
        %v709 = vlaneseq
        %v710 = vshrl.u32 %v709, 7
        %v711 = vsub.s32 5, %v710
        %v712 = vrot.slane %v577, %v711
        %714 = vbcast.lane.b32.xlu0 %v712, 256
        %v715 = vpop.permute.xlu0 %714
        %v716 = vlaneseq
        %v717 = vshrl.u32 %v716, 7
        %v718 = vsub.s32 6, %v717
        %v719 = vrot.slane %v577, %v718
        %721 = vbcast.lane.b32.xlu0 %v719, 256
        %v722 = vpop.permute.xlu0 %721
        %v723 = vlaneseq
        %v724 = vshrl.u32 %v723, 7
        %v725 = vsub.s32 7, %v724
        %v726 = vrot.slane %v577, %v725
        %728 = vbcast.lane.b32.xlu0 %v726, 256
        %v729 = vpop.permute.xlu0 %728
        %v730 = vlaneseq
        %v731 = vshrl.u32 %v730, 7
        %v732 = vsub.s32 0, %v731
        %v733 = vrot.slane %v582, %v732
        %735 = vbcast.lane.b32.xlu0 %v733, 256
        %v736 = vpop.permute.xlu0 %735
        %v737 = vlaneseq
        %v738 = vshrl.u32 %v737, 7
        %v739 = vsub.s32 1, %v738
        %v740 = vrot.slane %v582, %v739
        %742 = vbcast.lane.b32.xlu0 %v740, 256
        %v743 = vpop.permute.xlu0 %742
        %v744 = vlaneseq
        %v745 = vshrl.u32 %v744, 7
        %v746 = vsub.s32 2, %v745
        %v747 = vrot.slane %v582, %v746
        %749 = vbcast.lane.b32.xlu0 %v747, 256
        %v750 = vpop.permute.xlu0 %749
        %v751 = vlaneseq
        %v752 = vshrl.u32 %v751, 7
        %v753 = vsub.s32 3, %v752
        %v754 = vrot.slane %v582, %v753
        %756 = vbcast.lane.b32.xlu0 %v754, 256
        %v757 = vpop.permute.xlu0 %756
        %v758 = vlaneseq
        %v759 = vshrl.u32 %v758, 7
        %v760 = vsub.s32 4, %v759
        %v761 = vrot.slane %v582, %v760
        %763 = vbcast.lane.b32.xlu0 %v761, 256
        %v764 = vpop.permute.xlu0 %763
        %v765 = vlaneseq
        %v766 = vshrl.u32 %v765, 7
        %v767 = vsub.s32 5, %v766
        %v768 = vrot.slane %v582, %v767
        %770 = vbcast.lane.b32.xlu0 %v768, 256
        %v771 = vpop.permute.xlu0 %770
        %v772 = vlaneseq
        %v773 = vshrl.u32 %v772, 7
        %v774 = vsub.s32 6, %v773
        %v775 = vrot.slane %v582, %v774
        %777 = vbcast.lane.b32.xlu0 %v775, 256
        %v778 = vpop.permute.xlu0 %777
        %v779 = vlaneseq
        %v780 = vshrl.u32 %v779, 7
        %v781 = vsub.s32 7, %v780
        %v782 = vrot.slane %v582, %v781
        %784 = vbcast.lane.b32.xlu0 %v782, 256
        %v785 = vpop.permute.xlu0 %784
        %v786 = vlaneseq
        %v787 = vshrl.u32 %v786, 7
        %v788 = vsub.s32 0, %v787
        %v789 = vrot.slane %v388, %v788
        %v790 = vmul.f32 %v680, %v789
        %v791 = vmul.f32 %v687, %v789
        %v792 = vmul.f32 %v694, %v789
        %v793 = vmul.f32 %v701, %v789
        %v794 = vmul.f32 %v708, %v789
        %v795 = vmul.f32 %v715, %v789
        %v796 = vmul.f32 %v722, %v789
        %v797 = vmul.f32 %v729, %v789
        %v798 = vmul.f32 %v736, %v789
        %v799 = vmul.f32 %v743, %v789
        %v800 = vmul.f32 %v750, %v789
        %v801 = vmul.f32 %v757, %v789
        %v802 = vmul.f32 %v764, %v789
        %v803 = vmul.f32 %v771, %v789
        %v804 = vmul.f32 %v778, %v789
        %v805 = vmul.f32 %v785, %v789
        %v806 = vlaneseq
        %v807 = vshrl.u32 %v806, 7
        %v808 = vsub.s32 0, %v807
        %v809 = vrot.slane %v489, %v808
        %811 = vbcast.lane.b32.xlu0 %v809, 256
        %v812 = vpop.permute.xlu0 %811
        %v813 = vlaneseq
        %v814 = vshrl.u32 %v813, 7
        %v815 = vsub.s32 1, %v814
        %v816 = vrot.slane %v489, %v815
        %818 = vbcast.lane.b32.xlu0 %v816, 256
        %v819 = vpop.permute.xlu0 %818
        %v820 = vlaneseq
        %v821 = vshrl.u32 %v820, 7
        %v822 = vsub.s32 2, %v821
        %v823 = vrot.slane %v489, %v822
        %825 = vbcast.lane.b32.xlu0 %v823, 256
        %v826 = vpop.permute.xlu0 %825
        %v827 = vlaneseq
        %v828 = vshrl.u32 %v827, 7
        %v829 = vsub.s32 3, %v828
        %v830 = vrot.slane %v489, %v829
        %832 = vbcast.lane.b32.xlu0 %v830, 256
        %v833 = vpop.permute.xlu0 %832
        %v834 = vlaneseq
        %v835 = vshrl.u32 %v834, 7
        %v836 = vsub.s32 4, %v835
        %v837 = vrot.slane %v489, %v836
        %839 = vbcast.lane.b32.xlu0 %v837, 256
        %v840 = vpop.permute.xlu0 %839
        %v841 = vlaneseq
        %v842 = vshrl.u32 %v841, 7
        %v843 = vsub.s32 5, %v842
        %v844 = vrot.slane %v489, %v843
        %846 = vbcast.lane.b32.xlu0 %v844, 256
        %v847 = vpop.permute.xlu0 %846
        %v848 = vlaneseq
        %v849 = vshrl.u32 %v848, 7
        %v850 = vsub.s32 6, %v849
        %v851 = vrot.slane %v489, %v850
        %853 = vbcast.lane.b32.xlu0 %v851, 256
        %v854 = vpop.permute.xlu0 %853
        %v855 = vlaneseq
        %v856 = vshrl.u32 %v855, 7
        %v857 = vsub.s32 7, %v856
        %v858 = vrot.slane %v489, %v857
        %860 = vbcast.lane.b32.xlu0 %v858, 256
        %v861 = vpop.permute.xlu0 %860
        %v862 = vlaneseq
        %v863 = vshrl.u32 %v862, 7
        %v864 = vsub.s32 0, %v863
        %v865 = vrot.slane %v494, %v864
        %867 = vbcast.lane.b32.xlu0 %v865, 256
        %v868 = vpop.permute.xlu0 %867
        %v869 = vlaneseq
        %v870 = vshrl.u32 %v869, 7
        %v871 = vsub.s32 1, %v870
        %v872 = vrot.slane %v494, %v871
        %874 = vbcast.lane.b32.xlu0 %v872, 256
        %v875 = vpop.permute.xlu0 %874
        %v876 = vlaneseq
        %v877 = vshrl.u32 %v876, 7
        %v878 = vsub.s32 2, %v877
        %v879 = vrot.slane %v494, %v878
        %881 = vbcast.lane.b32.xlu0 %v879, 256
        %v882 = vpop.permute.xlu0 %881
        %v883 = vlaneseq
        %v884 = vshrl.u32 %v883, 7
        %v885 = vsub.s32 3, %v884
        %v886 = vrot.slane %v494, %v885
        %888 = vbcast.lane.b32.xlu0 %v886, 256
        %v889 = vpop.permute.xlu0 %888
        %v890 = vlaneseq
        %v891 = vshrl.u32 %v890, 7
        %v892 = vsub.s32 4, %v891
        %v893 = vrot.slane %v494, %v892
        %895 = vbcast.lane.b32.xlu0 %v893, 256
        %v896 = vpop.permute.xlu0 %895
        %v897 = vlaneseq
        %v898 = vshrl.u32 %v897, 7
        %v899 = vsub.s32 5, %v898
        %v900 = vrot.slane %v494, %v899
        %902 = vbcast.lane.b32.xlu0 %v900, 256
        %v903 = vpop.permute.xlu0 %902
        %v904 = vlaneseq
        %v905 = vshrl.u32 %v904, 7
        %v906 = vsub.s32 6, %v905
        %v907 = vrot.slane %v494, %v906
        %909 = vbcast.lane.b32.xlu0 %v907, 256
        %v910 = vpop.permute.xlu0 %909
        %v911 = vlaneseq
        %v912 = vshrl.u32 %v911, 7
        %v913 = vsub.s32 7, %v912
        %v914 = vrot.slane %v494, %v913
        %916 = vbcast.lane.b32.xlu0 %v914, 256
        %v917 = vpop.permute.xlu0 %916
        %v918 = vlaneseq
        %v919 = vshrl.u32 %v918, 7
        %v920 = vsub.s32 1, %v919
        %v921 = vrot.slane %v388, %v920
        %v922 = vmul.f32 %v812, %v921
        %v923 = vmul.f32 %v819, %v921
        %v924 = vmul.f32 %v826, %v921
        %v925 = vmul.f32 %v833, %v921
        %v926 = vmul.f32 %v840, %v921
        %v927 = vmul.f32 %v847, %v921
        %v928 = vmul.f32 %v854, %v921
        %v929 = vmul.f32 %v861, %v921
        %v930 = vmul.f32 %v868, %v921
        %v931 = vmul.f32 %v875, %v921
        %v932 = vmul.f32 %v882, %v921
        %v933 = vmul.f32 %v889, %v921
        %v934 = vmul.f32 %v896, %v921
        %v935 = vmul.f32 %v903, %v921
        %v936 = vmul.f32 %v910, %v921
        %v937 = vmul.f32 %v917, %v921
        %v938 = vadd.f32 %v790, %v922
        %v939 = vadd.f32 %v791, %v923
        %v940 = vadd.f32 %v792, %v924
        %v941 = vadd.f32 %v793, %v925
        %v942 = vadd.f32 %v794, %v926
        %v943 = vadd.f32 %v795, %v927
        %v944 = vadd.f32 %v796, %v928
        %v945 = vadd.f32 %v797, %v929
        %v946 = vadd.f32 %v798, %v930
        %v947 = vadd.f32 %v799, %v931
        %v948 = vadd.f32 %v800, %v932
        %v949 = vadd.f32 %v801, %v933
        %v950 = vadd.f32 %v802, %v934
        %v951 = vadd.f32 %v803, %v935
        %v952 = vadd.f32 %v804, %v936
        %v953 = vadd.f32 %v805, %v937
        %v954 = vlaneseq
        %v955 = vshrl.u32 %v954, 7
        %v956 = vsub.s32 0, %v955
        %v957 = vrot.slane %v666, %v956
        %959 = vbcast.lane.b32.xlu0 %v957, 256
        %v960 = vpop.permute.xlu0 %959
        %v961 = vlaneseq
        %v962 = vshrl.u32 %v961, 7
        %v963 = vsub.s32 1, %v962
        %v964 = vrot.slane %v666, %v963
        %966 = vbcast.lane.b32.xlu0 %v964, 256
        %v967 = vpop.permute.xlu0 %966
        %v968 = vlaneseq
        %v969 = vshrl.u32 %v968, 7
        %v970 = vsub.s32 2, %v969
        %v971 = vrot.slane %v666, %v970
        %973 = vbcast.lane.b32.xlu0 %v971, 256
        %v974 = vpop.permute.xlu0 %973
        %v975 = vlaneseq
        %v976 = vshrl.u32 %v975, 7
        %v977 = vsub.s32 3, %v976
        %v978 = vrot.slane %v666, %v977
        %980 = vbcast.lane.b32.xlu0 %v978, 256
        %v981 = vpop.permute.xlu0 %980
        %v982 = vlaneseq
        %v983 = vshrl.u32 %v982, 7
        %v984 = vsub.s32 4, %v983
        %v985 = vrot.slane %v666, %v984
        %987 = vbcast.lane.b32.xlu0 %v985, 256
        %v988 = vpop.permute.xlu0 %987
        %v989 = vlaneseq
        %v990 = vshrl.u32 %v989, 7
        %v991 = vsub.s32 5, %v990
        %v992 = vrot.slane %v666, %v991
        %994 = vbcast.lane.b32.xlu0 %v992, 256
        %v995 = vpop.permute.xlu0 %994
        %v996 = vlaneseq
        %v997 = vshrl.u32 %v996, 7
        %v998 = vsub.s32 6, %v997
        %v999 = vrot.slane %v666, %v998
        %1001 = vbcast.lane.b32.xlu0 %v999, 256
        %v1002 = vpop.permute.xlu0 %1001
        %v1003 = vlaneseq
        %v1004 = vshrl.u32 %v1003, 7
        %v1005 = vsub.s32 7, %v1004
        %v1006 = vrot.slane %v666, %v1005
        %1008 = vbcast.lane.b32.xlu0 %v1006, 256
        %v1009 = vpop.permute.xlu0 %1008
        %v1010 = vlaneseq
        %v1011 = vshrl.u32 %v1010, 7
        %v1012 = vsub.s32 0, %v1011
        %v1013 = vrot.slane %v671, %v1012
        %1015 = vbcast.lane.b32.xlu0 %v1013, 256
        %v1016 = vpop.permute.xlu0 %1015
        %v1017 = vlaneseq
        %v1018 = vshrl.u32 %v1017, 7
        %v1019 = vsub.s32 1, %v1018
        %v1020 = vrot.slane %v671, %v1019
        %1022 = vbcast.lane.b32.xlu0 %v1020, 256
        %v1023 = vpop.permute.xlu0 %1022
        %v1024 = vlaneseq
        %v1025 = vshrl.u32 %v1024, 7
        %v1026 = vsub.s32 2, %v1025
        %v1027 = vrot.slane %v671, %v1026
        %1029 = vbcast.lane.b32.xlu0 %v1027, 256
        %v1030 = vpop.permute.xlu0 %1029
        %v1031 = vlaneseq
        %v1032 = vshrl.u32 %v1031, 7
        %v1033 = vsub.s32 3, %v1032
        %v1034 = vrot.slane %v671, %v1033
        %1036 = vbcast.lane.b32.xlu0 %v1034, 256
        %v1037 = vpop.permute.xlu0 %1036
        %v1038 = vlaneseq
        %v1039 = vshrl.u32 %v1038, 7
        %v1040 = vsub.s32 4, %v1039
        %v1041 = vrot.slane %v671, %v1040
        %1043 = vbcast.lane.b32.xlu0 %v1041, 256
        %v1044 = vpop.permute.xlu0 %1043
        %v1045 = vlaneseq
        %v1046 = vshrl.u32 %v1045, 7
        %v1047 = vsub.s32 5, %v1046
        %v1048 = vrot.slane %v671, %v1047
        %1050 = vbcast.lane.b32.xlu0 %v1048, 256
        %v1051 = vpop.permute.xlu0 %1050
        %v1052 = vlaneseq
        %v1053 = vshrl.u32 %v1052, 7
        %v1054 = vsub.s32 6, %v1053
        %v1055 = vrot.slane %v671, %v1054
        %1057 = vbcast.lane.b32.xlu0 %v1055, 256
        %v1058 = vpop.permute.xlu0 %1057
        %v1059 = vlaneseq
        %v1060 = vshrl.u32 %v1059, 7
        %v1061 = vsub.s32 7, %v1060
        %v1062 = vrot.slane %v671, %v1061
        %1064 = vbcast.lane.b32.xlu0 %v1062, 256
        %v1065 = vpop.permute.xlu0 %1064
        %v1066 = vlaneseq
        %v1067 = vshrl.u32 %v1066, 7
        %v1068 = vsub.s32 2, %v1067
        %v1069 = vrot.slane %v388, %v1068
        %v1070 = vmul.f32 %v960, %v1069
        %v1071 = vmul.f32 %v967, %v1069
        %v1072 = vmul.f32 %v974, %v1069
        %v1073 = vmul.f32 %v981, %v1069
        %v1074 = vmul.f32 %v988, %v1069
        %v1075 = vmul.f32 %v995, %v1069
        %v1076 = vmul.f32 %v1002, %v1069
        %v1077 = vmul.f32 %v1009, %v1069
        %v1078 = vmul.f32 %v1016, %v1069
        %v1079 = vmul.f32 %v1023, %v1069
        %v1080 = vmul.f32 %v1030, %v1069
        %v1081 = vmul.f32 %v1037, %v1069
        %v1082 = vmul.f32 %v1044, %v1069
        %v1083 = vmul.f32 %v1051, %v1069
        %v1084 = vmul.f32 %v1058, %v1069
        %v1085 = vmul.f32 %v1065, %v1069
        %v1086 = vadd.f32 %v938, %v1070
        %v1087 = vadd.f32 %v939, %v1071
        %v1088 = vadd.f32 %v940, %v1072
        %v1089 = vadd.f32 %v941, %v1073
        %v1090 = vadd.f32 %v942, %v1074
        %v1091 = vadd.f32 %v943, %v1075
        %v1092 = vadd.f32 %v944, %v1076
        %v1093 = vadd.f32 %v945, %v1077
        %v1094 = vadd.f32 %v946, %v1078
        %v1095 = vadd.f32 %v947, %v1079
        %v1096 = vadd.f32 %v948, %v1080
        %v1097 = vadd.f32 %v949, %v1081
        %v1098 = vadd.f32 %v950, %v1082
        %v1099 = vadd.f32 %v951, %v1083
        %v1100 = vadd.f32 %v952, %v1084
        %v1101 = vadd.f32 %v953, %v1085
        %v1102 = vld [vmem:[%s2] sm:$0x1]
        %v1104 = vlaneseq
        %v1105 = vshrl.u32 %v1104, 7
        %v1106 = vsub.s32 0, %v1105
        %v1107 = vrot.slane %v1102, %v1106
        %v1109 = vadd.f32 %v1086, %v1107
        %v1110 = vadd.f32 %v1087, %v1107
        %v1111 = vadd.f32 %v1088, %v1107
        %v1112 = vadd.f32 %v1089, %v1107
        %v1113 = vadd.f32 %v1090, %v1107
        %v1114 = vadd.f32 %v1091, %v1107
        %v1115 = vadd.f32 %v1092, %v1107
        %v1116 = vadd.f32 %v1093, %v1107
        %v1117 = vadd.f32 %v1094, %v1107
        %v1118 = vadd.f32 %v1095, %v1107
        %v1119 = vadd.f32 %v1096, %v1107
        %v1120 = vadd.f32 %v1097, %v1107
        %v1121 = vadd.f32 %v1098, %v1107
        %v1122 = vadd.f32 %v1099, %v1107
        %v1123 = vadd.f32 %v1100, %v1107
        %v1124 = vadd.f32 %v1101, %v1107
        %v1125 = vmax.f32 %v1109, 0.0
        %v1126 = vmax.f32 %v1110, 0.0
        %v1127 = vmax.f32 %v1111, 0.0
        %v1128 = vmax.f32 %v1112, 0.0
        %v1129 = vmax.f32 %v1113, 0.0
        %v1130 = vmax.f32 %v1114, 0.0
        %v1131 = vmax.f32 %v1115, 0.0
        %v1132 = vmax.f32 %v1116, 0.0
        %v1133 = vmax.f32 %v1117, 0.0
        %v1134 = vmax.f32 %v1118, 0.0
        %v1135 = vmax.f32 %v1119, 0.0
        %v1136 = vmax.f32 %v1120, 0.0
        %v1137 = vmax.f32 %v1121, 0.0
        %v1138 = vmax.f32 %v1122, 0.0
        %v1139 = vmax.f32 %v1123, 0.0
        %v1140 = vmax.f32 %v1124, 0.0
        %vm1141 = vcmask 261120
        %v1143 = vsel %vm1141, %v1125, 0
        %v1146 = vsel %vm1141, %v1126, 0
        %v1149 = vsel %vm1141, %v1127, 0
        %v1152 = vsel %vm1141, %v1128, 0
        %v1155 = vsel %vm1141, %v1129, 0
        %v1158 = vsel %vm1141, %v1130, 0
        %v1161 = vsel %vm1141, %v1131, 0
        %v1164 = vsel %vm1141, %v1132, 0
        %v1167 = vsel %vm1141, %v1133, 0
        %v1170 = vsel %vm1141, %v1134, 0
        %v1173 = vsel %vm1141, %v1135, 0
        %v1176 = vsel %vm1141, %v1136, 0
        %v1179 = vsel %vm1141, %v1137, 0
        %v1182 = vsel %vm1141, %v1138, 0
        %v1185 = vsel %vm1141, %v1139, 0
        %v1188 = vsel %vm1141, %v1140, 0
        %1190 = vmatprep.subr.mxu0 0.0
        %1191 = vmatpush1.msra.mxu0 %v393
        %1192 = vmatprep.subr.mxu0 0.0
        %1193 = vmatpush1.msra.mxu0 %v394
        %1194 = vmatprep.subr.mxu0 0.0
        %1195 = vmatpush1.msra.mxu0 %v395
        %1196 = vmatprep.subr.mxu0 0.0
        %1197 = vmatpush1.msra.mxu0 %v396
        %1198 = vmatprep.subr.mxu0 0.0
        %1199 = vmatpush1.msra.mxu0 0.0
        %1200 = vmatprep.subr.mxu0 0.0
        %1201 = vmatpush1.msra.mxu0 0.0
        %1202 = vmatprep.subr.mxu0 0.0
        %1203 = vmatpush1.msra.mxu0 0.0
        %1204 = vmatprep.subr.mxu0 0.0
        %1205 = vmatpush1.msra.mxu0 0.0
        %1206 = vmatprep.subr.mxu0 0.0
        %1207 = vmatpush1.msra.mxu0 0.0
        %1208 = vmatprep.subr.mxu0 0.0
        %1209 = vmatpush1.msra.mxu0 0.0
        %1210 = vmatprep.subr.mxu0 0.0
        %1211 = vmatpush1.msra.mxu0 0.0
        %1212 = vmatprep.subr.mxu0 0.0
        %1213 = vmatpush1.msra.mxu0 0.0
        %1214 = vmatprep.subr.mxu0 0.0
        %1215 = vmatpush1.msra.mxu0 0.0
        %1216 = vmatprep.subr.mxu0 0.0
        %1217 = vmatpush1.msra.mxu0 0.0
        %1218 = vmatprep.subr.mxu0 0.0
        %1219 = vmatpush1.msra.mxu0 0.0
        %1220 = vmatprep.subr.mxu0 0.0
        %1221 = vmatpush1.msra.mxu0 0.0
        %1222 = vmatprep.subr.mxu0 0.0
        %1223 = vmatpush1.msra.mxu0 0.0
        %1224 = vmatprep.subr.mxu0 0.0
        %1225 = vmatpush1.msra.mxu0 0.0
        %1226 = vmatprep.subr.mxu0 0.0
        %1227 = vmatpush1.msra.mxu0 0.0
        %1228 = vmatprep.subr.mxu0 0.0
        %1229 = vmatpush1.msra.mxu0 0.0
        %1230 = vmatprep.subr.mxu0 0.0
        %1231 = vmatpush1.msra.mxu0 0.0
        %1232 = vmatprep.subr.mxu0 0.0
        %1233 = vmatpush1.msra.mxu0 0.0
        %1234 = vmatprep.subr.mxu0 0.0
        %1235 = vmatpush1.msra.mxu0 0.0
        %1236 = vmatprep.subr.mxu0 0.0
        %1237 = vmatpush1.msra.mxu0 0.0
        %1238 = vmatprep.subr.mxu0 0.0
        %1239 = vmatpush1.msra.mxu0 0.0
        %1240 = vmatprep.subr.mxu0 0.0
        %1241 = vmatpush1.msra.mxu0 0.0
        %1242 = vmatprep.subr.mxu0 0.0
        %1243 = vmatpush1.msra.mxu0 0.0
        %1244 = vmatprep.subr.mxu0 0.0
        %1245 = vmatpush1.msra.mxu0 0.0
        %1246 = vmatprep.subr.mxu0 0.0
        %1247 = vmatpush1.msra.mxu0 0.0
        %1248 = vmatprep.subr.mxu0 0.0
        %1249 = vmatpush1.msra.mxu0 0.0
        %1250 = vmatprep.subr.mxu0 0.0
        %1251 = vmatpush1.msra.mxu0 0.0
        %1252 = vmatprep.subr.mxu0 0.0
        %1253 = vmatpush1.msra.mxu0 0.0
        %1254 = vmatprep.mubr.f32.mxu0 0.0
        %1255 = vmatmul.mubr.f32.gmra.mrb[0].mxu0 %v1143
        %v1256 = vpop.f32.mrb[0].mxu0
        %v1257 = vadd.f32 0.0, %v1256
        %v1258 = vpop.f32.mrb[0].mxu0
        %1259 = vmatprep.mubr.f32.mxu0 0.0
        %1260 = vmatmul.mubr.f32.gmra.mrb[0].mxu0 %v1146
        %v1261 = vpop.f32.mrb[0].mxu0
        %v1262 = vadd.f32 0.0, %v1261
        %v1263 = vpop.f32.mrb[0].mxu0
        %1264 = vmatprep.mubr.f32.mxu0 0.0
        %1265 = vmatmul.mubr.f32.gmra.mrb[0].mxu0 %v1149
        %v1266 = vpop.f32.mrb[0].mxu0
        %v1267 = vadd.f32 0.0, %v1266
        %v1268 = vpop.f32.mrb[0].mxu0
        %1269 = vmatprep.mubr.f32.mxu0 0.0
        %1270 = vmatmul.mubr.f32.gmra.mrb[0].mxu0 %v1152
        %v1271 = vpop.f32.mrb[0].mxu0
        %v1272 = vadd.f32 0.0, %v1271
        %v1273 = vpop.f32.mrb[0].mxu0
        %1274 = vmatprep.mubr.f32.mxu0 0.0
        %1275 = vmatmul.mubr.f32.gmra.mrb[0].mxu0 %v1155
        %v1276 = vpop.f32.mrb[0].mxu0
        %v1277 = vadd.f32 0.0, %v1276
        %v1278 = vpop.f32.mrb[0].mxu0
        %1279 = vmatprep.mubr.f32.mxu0 0.0
        %1280 = vmatmul.mubr.f32.gmra.mrb[0].mxu0 %v1158
        %v1281 = vpop.f32.mrb[0].mxu0
        %v1282 = vadd.f32 0.0, %v1281
        %v1283 = vpop.f32.mrb[0].mxu0
        %1284 = vmatprep.mubr.f32.mxu0 0.0
        %1285 = vmatmul.mubr.f32.gmra.mrb[0].mxu0 %v1161
        %v1286 = vpop.f32.mrb[0].mxu0
        %v1287 = vadd.f32 0.0, %v1286
        %v1288 = vpop.f32.mrb[0].mxu0
        %1289 = vmatprep.mubr.f32.mxu0 0.0
        %1290 = vmatmul.mubr.f32.gmra.mrb[0].mxu0 %v1164
        %v1291 = vpop.f32.mrb[0].mxu0
        %v1292 = vadd.f32 0.0, %v1291
        %v1293 = vpop.f32.mrb[0].mxu0
        %1294 = vmatprep.mubr.f32.mxu0 0.0
        %1295 = vmatmul.mubr.f32.gmra.mrb[0].mxu0 %v1167
        %v1296 = vpop.f32.mrb[0].mxu0
        %v1297 = vadd.f32 0.0, %v1296
        %v1298 = vpop.f32.mrb[0].mxu0
        %1299 = vmatprep.mubr.f32.mxu0 0.0
        %1300 = vmatmul.mubr.f32.gmra.mrb[0].mxu0 %v1170
        %v1301 = vpop.f32.mrb[0].mxu0
        %v1302 = vadd.f32 0.0, %v1301
        %v1303 = vpop.f32.mrb[0].mxu0
        %1304 = vmatprep.mubr.f32.mxu0 0.0
        %1305 = vmatmul.mubr.f32.gmra.mrb[0].mxu0 %v1173
        %v1306 = vpop.f32.mrb[0].mxu0
        %v1307 = vadd.f32 0.0, %v1306
        %v1308 = vpop.f32.mrb[0].mxu0
        %1309 = vmatprep.mubr.f32.mxu0 0.0
        %1310 = vmatmul.mubr.f32.gmra.mrb[0].mxu0 %v1176
        %v1311 = vpop.f32.mrb[0].mxu0
        %v1312 = vadd.f32 0.0, %v1311
        %v1313 = vpop.f32.mrb[0].mxu0
        %1314 = vmatprep.mubr.f32.mxu0 0.0
        %1315 = vmatmul.mubr.f32.gmra.mrb[0].mxu0 %v1179
        %v1316 = vpop.f32.mrb[0].mxu0
        %v1317 = vadd.f32 0.0, %v1316
        %v1318 = vpop.f32.mrb[0].mxu0
        %1319 = vmatprep.mubr.f32.mxu0 0.0
        %1320 = vmatmul.mubr.f32.gmra.mrb[0].mxu0 %v1182
        %v1321 = vpop.f32.mrb[0].mxu0
        %v1322 = vadd.f32 0.0, %v1321
        %v1323 = vpop.f32.mrb[0].mxu0
        %1324 = vmatprep.mubr.f32.mxu0 0.0
        %1325 = vmatmul.mubr.f32.gmra.mrb[0].mxu0 %v1185
        %v1326 = vpop.f32.mrb[0].mxu0
        %v1327 = vadd.f32 0.0, %v1326
        %v1328 = vpop.f32.mrb[0].mxu0
        %1329 = vmatprep.mubr.f32.mxu0 0.0
        %1330 = vmatmul.mubr.f32.gmra.mrb[0].mxu0 %v1188
        %v1331 = vpop.f32.mrb[0].mxu0
        %v1332 = vadd.f32 0.0, %v1331
        %v1333 = vpop.f32.mrb[0].mxu0
        %1334 = vdwg.mxu0
        %v1336 = vsel %vm1141, 0.0, 0
        %1338 = vmatprep.subr.mxu0 0.0
        %1339 = vmatpush1.msra.mxu0 %v389
        %1340 = vmatprep.subr.mxu0 0.0
        %1341 = vmatpush1.msra.mxu0 %v390
        %1342 = vmatprep.subr.mxu0 0.0
        %1343 = vmatpush1.msra.mxu0 %v391
        %1344 = vmatprep.subr.mxu0 0.0
        %1345 = vmatpush1.msra.mxu0 %v392
        %1346 = vmatprep.subr.mxu0 0.0
        %1347 = vmatpush1.msra.mxu0 0.0
        %1348 = vmatprep.subr.mxu0 0.0
        %1349 = vmatpush1.msra.mxu0 0.0
        %1350 = vmatprep.subr.mxu0 0.0
        %1351 = vmatpush1.msra.mxu0 0.0
        %1352 = vmatprep.subr.mxu0 0.0
        %1353 = vmatpush1.msra.mxu0 0.0
        %1354 = vmatprep.subr.mxu0 0.0
        %1355 = vmatpush1.msra.mxu0 0.0
        %1356 = vmatprep.subr.mxu0 0.0
        %1357 = vmatpush1.msra.mxu0 0.0
        %1358 = vmatprep.subr.mxu0 0.0
        %1359 = vmatpush1.msra.mxu0 0.0
        %1360 = vmatprep.subr.mxu0 0.0
        %1361 = vmatpush1.msra.mxu0 0.0
        %1362 = vmatprep.subr.mxu0 0.0
        %1363 = vmatpush1.msra.mxu0 0.0
        %1364 = vmatprep.subr.mxu0 0.0
        %1365 = vmatpush1.msra.mxu0 0.0
        %1366 = vmatprep.subr.mxu0 0.0
        %1367 = vmatpush1.msra.mxu0 0.0
        %1368 = vmatprep.subr.mxu0 0.0
        %1369 = vmatpush1.msra.mxu0 0.0
        %1370 = vmatprep.subr.mxu0 0.0
        %1371 = vmatpush1.msra.mxu0 0.0
        %1372 = vmatprep.subr.mxu0 0.0
        %1373 = vmatpush1.msra.mxu0 0.0
        %1374 = vmatprep.subr.mxu0 0.0
        %1375 = vmatpush1.msra.mxu0 0.0
        %1376 = vmatprep.subr.mxu0 0.0
        %1377 = vmatpush1.msra.mxu0 0.0
        %1378 = vmatprep.subr.mxu0 0.0
        %1379 = vmatpush1.msra.mxu0 0.0
        %1380 = vmatprep.subr.mxu0 0.0
        %1381 = vmatpush1.msra.mxu0 0.0
        %1382 = vmatprep.subr.mxu0 0.0
        %1383 = vmatpush1.msra.mxu0 0.0
        %1384 = vmatprep.subr.mxu0 0.0
        %1385 = vmatpush1.msra.mxu0 0.0
        %1386 = vmatprep.subr.mxu0 0.0
        %1387 = vmatpush1.msra.mxu0 0.0
        %1388 = vmatprep.subr.mxu0 0.0
        %1389 = vmatpush1.msra.mxu0 0.0
        %1390 = vmatprep.subr.mxu0 0.0
        %1391 = vmatpush1.msra.mxu0 0.0
        %1392 = vmatprep.subr.mxu0 0.0
        %1393 = vmatpush1.msra.mxu0 0.0
        %1394 = vmatprep.subr.mxu0 0.0
        %1395 = vmatpush1.msra.mxu0 0.0
        %1396 = vmatprep.subr.mxu0 0.0
        %1397 = vmatpush1.msra.mxu0 0.0
        %1398 = vmatprep.subr.mxu0 0.0
        %1399 = vmatpush1.msra.mxu0 0.0
        %1400 = vmatprep.subr.mxu0 0.0
        %1401 = vmatpush1.msra.mxu0 0.0
        %1402 = vmatprep.mubr.f32.mxu0 0.0
        %1403 = vmatmul.mubr.f32.gmra.mrb[0].mxu0 %v1336
        %v1404 = vpop.f32.mrb[0].mxu0
        %v1405 = vadd.f32 %v1257, %v1404
        %v1406 = vpop.f32.mrb[0].mxu0
        %1407 = vmatprep.mubr.f32.mxu0 0.0
        %1408 = vmatmul.mubr.f32.gmra.mrb[0].mxu0 %v1143
        %v1409 = vpop.f32.mrb[0].mxu0
        %v1410 = vadd.f32 %v1262, %v1409
        %v1411 = vpop.f32.mrb[0].mxu0
        %1412 = vmatprep.mubr.f32.mxu0 0.0
        %1413 = vmatmul.mubr.f32.gmra.mrb[0].mxu0 %v1146
        %v1414 = vpop.f32.mrb[0].mxu0
        %v1415 = vadd.f32 %v1267, %v1414
        %v1416 = vpop.f32.mrb[0].mxu0
        %1417 = vmatprep.mubr.f32.mxu0 0.0
        %1418 = vmatmul.mubr.f32.gmra.mrb[0].mxu0 %v1149
        %v1419 = vpop.f32.mrb[0].mxu0
        %v1420 = vadd.f32 %v1272, %v1419
        %v1421 = vpop.f32.mrb[0].mxu0
        %1422 = vmatprep.mubr.f32.mxu0 0.0
        %1423 = vmatmul.mubr.f32.gmra.mrb[0].mxu0 %v1152
        %v1424 = vpop.f32.mrb[0].mxu0
        %v1425 = vadd.f32 %v1277, %v1424
        %v1426 = vpop.f32.mrb[0].mxu0
        %1427 = vmatprep.mubr.f32.mxu0 0.0
        %1428 = vmatmul.mubr.f32.gmra.mrb[0].mxu0 %v1155
        %v1429 = vpop.f32.mrb[0].mxu0
        %v1430 = vadd.f32 %v1282, %v1429
        %v1431 = vpop.f32.mrb[0].mxu0
        %1432 = vmatprep.mubr.f32.mxu0 0.0
        %1433 = vmatmul.mubr.f32.gmra.mrb[0].mxu0 %v1158
        %v1434 = vpop.f32.mrb[0].mxu0
        %v1435 = vadd.f32 %v1287, %v1434
        %v1436 = vpop.f32.mrb[0].mxu0
        %1437 = vmatprep.mubr.f32.mxu0 0.0
        %1438 = vmatmul.mubr.f32.gmra.mrb[0].mxu0 %v1161
        %v1439 = vpop.f32.mrb[0].mxu0
        %v1440 = vadd.f32 %v1292, %v1439
        %v1441 = vpop.f32.mrb[0].mxu0
        %1442 = vmatprep.mubr.f32.mxu0 0.0
        %1443 = vmatmul.mubr.f32.gmra.mrb[0].mxu0 %v1164
        %v1444 = vpop.f32.mrb[0].mxu0
        %v1445 = vadd.f32 %v1297, %v1444
        %v1446 = vpop.f32.mrb[0].mxu0
        %1447 = vmatprep.mubr.f32.mxu0 0.0
        %1448 = vmatmul.mubr.f32.gmra.mrb[0].mxu0 %v1167
        %v1449 = vpop.f32.mrb[0].mxu0
        %v1450 = vadd.f32 %v1302, %v1449
        %v1451 = vpop.f32.mrb[0].mxu0
        %1452 = vmatprep.mubr.f32.mxu0 0.0
        %1453 = vmatmul.mubr.f32.gmra.mrb[0].mxu0 %v1170
        %v1454 = vpop.f32.mrb[0].mxu0
        %v1455 = vadd.f32 %v1307, %v1454
        %v1456 = vpop.f32.mrb[0].mxu0
        %1457 = vmatprep.mubr.f32.mxu0 0.0
        %1458 = vmatmul.mubr.f32.gmra.mrb[0].mxu0 %v1173
        %v1459 = vpop.f32.mrb[0].mxu0
        %v1460 = vadd.f32 %v1312, %v1459
        %v1461 = vpop.f32.mrb[0].mxu0
        %1462 = vmatprep.mubr.f32.mxu0 0.0
        %1463 = vmatmul.mubr.f32.gmra.mrb[0].mxu0 %v1176
        %v1464 = vpop.f32.mrb[0].mxu0
        %v1465 = vadd.f32 %v1317, %v1464
        %v1466 = vpop.f32.mrb[0].mxu0
        %1467 = vmatprep.mubr.f32.mxu0 0.0
        %1468 = vmatmul.mubr.f32.gmra.mrb[0].mxu0 %v1179
        %v1469 = vpop.f32.mrb[0].mxu0
        %v1470 = vadd.f32 %v1322, %v1469
        %v1471 = vpop.f32.mrb[0].mxu0
        %1472 = vmatprep.mubr.f32.mxu0 0.0
        %1473 = vmatmul.mubr.f32.gmra.mrb[0].mxu0 %v1182
        %v1474 = vpop.f32.mrb[0].mxu0
        %v1475 = vadd.f32 %v1327, %v1474
        %v1476 = vpop.f32.mrb[0].mxu0
        %1477 = vmatprep.mubr.f32.mxu0 0.0
        %1478 = vmatmul.mubr.f32.gmra.mrb[0].mxu0 %v1185
        %v1479 = vpop.f32.mrb[0].mxu0
        %v1480 = vadd.f32 %v1332, %v1479
        %v1481 = vpop.f32.mrb[0].mxu0
        %1482 = vdwg.mxu0
        %1483 = vmatprep.subr.mxu0 0.0
        %1484 = vmatpush1.msra.mxu0 %v397
        %1485 = vmatprep.subr.mxu0 0.0
        %1486 = vmatpush1.msra.mxu0 %v398
        %1487 = vmatprep.subr.mxu0 0.0
        %1488 = vmatpush1.msra.mxu0 %v399
        %1489 = vmatprep.subr.mxu0 0.0
        %1490 = vmatpush1.msra.mxu0 %v400
        %1491 = vmatprep.subr.mxu0 0.0
        %1492 = vmatpush1.msra.mxu0 0.0
        %1493 = vmatprep.subr.mxu0 0.0
        %1494 = vmatpush1.msra.mxu0 0.0
        %1495 = vmatprep.subr.mxu0 0.0
        %1496 = vmatpush1.msra.mxu0 0.0
        %1497 = vmatprep.subr.mxu0 0.0
        %1498 = vmatpush1.msra.mxu0 0.0
        %1499 = vmatprep.subr.mxu0 0.0
        %1500 = vmatpush1.msra.mxu0 0.0
        %1501 = vmatprep.subr.mxu0 0.0
        %1502 = vmatpush1.msra.mxu0 0.0
        %1503 = vmatprep.subr.mxu0 0.0
        %1504 = vmatpush1.msra.mxu0 0.0
        %1505 = vmatprep.subr.mxu0 0.0
        %1506 = vmatpush1.msra.mxu0 0.0
        %1507 = vmatprep.subr.mxu0 0.0
        %1508 = vmatpush1.msra.mxu0 0.0
        %1509 = vmatprep.subr.mxu0 0.0
        %1510 = vmatpush1.msra.mxu0 0.0
        %1511 = vmatprep.subr.mxu0 0.0
        %1512 = vmatpush1.msra.mxu0 0.0
        %1513 = vmatprep.subr.mxu0 0.0
        %1514 = vmatpush1.msra.mxu0 0.0
        %1515 = vmatprep.subr.mxu0 0.0
        %1516 = vmatpush1.msra.mxu0 0.0
        %1517 = vmatprep.subr.mxu0 0.0
        %1518 = vmatpush1.msra.mxu0 0.0
        %1519 = vmatprep.subr.mxu0 0.0
        %1520 = vmatpush1.msra.mxu0 0.0
        %1521 = vmatprep.subr.mxu0 0.0
        %1522 = vmatpush1.msra.mxu0 0.0
        %1523 = vmatprep.subr.mxu0 0.0
        %1524 = vmatpush1.msra.mxu0 0.0
        %1525 = vmatprep.subr.mxu0 0.0
        %1526 = vmatpush1.msra.mxu0 0.0
        %1527 = vmatprep.subr.mxu0 0.0
        %1528 = vmatpush1.msra.mxu0 0.0
        %1529 = vmatprep.subr.mxu0 0.0
        %1530 = vmatpush1.msra.mxu0 0.0
        %1531 = vmatprep.subr.mxu0 0.0
        %1532 = vmatpush1.msra.mxu0 0.0
        %1533 = vmatprep.subr.mxu0 0.0
        %1534 = vmatpush1.msra.mxu0 0.0
        %1535 = vmatprep.subr.mxu0 0.0
        %1536 = vmatpush1.msra.mxu0 0.0
        %1537 = vmatprep.subr.mxu0 0.0
        %1538 = vmatpush1.msra.mxu0 0.0
        %1539 = vmatprep.subr.mxu0 0.0
        %1540 = vmatpush1.msra.mxu0 0.0
        %1541 = vmatprep.subr.mxu0 0.0
        %1542 = vmatpush1.msra.mxu0 0.0
        %1543 = vmatprep.subr.mxu0 0.0
        %1544 = vmatpush1.msra.mxu0 0.0
        %1545 = vmatprep.subr.mxu0 0.0
        %1546 = vmatpush1.msra.mxu0 0.0
        %1547 = vmatprep.mubr.f32.mxu0 0.0
        %1548 = vmatmul.mubr.f32.gmra.mrb[0].mxu0 %v1146
        %v1549 = vpop.f32.mrb[0].mxu0
        %v1550 = vadd.f32 0.0, %v1549
        %v1551 = vpop.f32.mrb[0].mxu0
        %1552 = vmatprep.mubr.f32.mxu0 0.0
        %1553 = vmatmul.mubr.f32.gmra.mrb[0].mxu0 %v1149
        %v1554 = vpop.f32.mrb[0].mxu0
        %v1555 = vadd.f32 0.0, %v1554
        %v1556 = vpop.f32.mrb[0].mxu0
        %1557 = vmatprep.mubr.f32.mxu0 0.0
        %1558 = vmatmul.mubr.f32.gmra.mrb[0].mxu0 %v1152
        %v1559 = vpop.f32.mrb[0].mxu0
        %v1560 = vadd.f32 0.0, %v1559
        %v1561 = vpop.f32.mrb[0].mxu0
        %1562 = vmatprep.mubr.f32.mxu0 0.0
        %1563 = vmatmul.mubr.f32.gmra.mrb[0].mxu0 %v1155
        %v1564 = vpop.f32.mrb[0].mxu0
        %v1565 = vadd.f32 0.0, %v1564
        %v1566 = vpop.f32.mrb[0].mxu0
        %1567 = vmatprep.mubr.f32.mxu0 0.0
        %1568 = vmatmul.mubr.f32.gmra.mrb[0].mxu0 %v1158
        %v1569 = vpop.f32.mrb[0].mxu0
        %v1570 = vadd.f32 0.0, %v1569
        %v1571 = vpop.f32.mrb[0].mxu0
        %1572 = vmatprep.mubr.f32.mxu0 0.0
        %1573 = vmatmul.mubr.f32.gmra.mrb[0].mxu0 %v1161
        %v1574 = vpop.f32.mrb[0].mxu0
        %v1575 = vadd.f32 0.0, %v1574
        %v1576 = vpop.f32.mrb[0].mxu0
        %1577 = vmatprep.mubr.f32.mxu0 0.0
        %1578 = vmatmul.mubr.f32.gmra.mrb[0].mxu0 %v1164
        %v1579 = vpop.f32.mrb[0].mxu0
        %v1580 = vadd.f32 0.0, %v1579
        %v1581 = vpop.f32.mrb[0].mxu0
        %1582 = vmatprep.mubr.f32.mxu0 0.0
        %1583 = vmatmul.mubr.f32.gmra.mrb[0].mxu0 %v1167
        %v1584 = vpop.f32.mrb[0].mxu0
        %v1585 = vadd.f32 0.0, %v1584
        %v1586 = vpop.f32.mrb[0].mxu0
        %1587 = vmatprep.mubr.f32.mxu0 0.0
        %1588 = vmatmul.mubr.f32.gmra.mrb[0].mxu0 %v1170
        %v1589 = vpop.f32.mrb[0].mxu0
        %v1590 = vadd.f32 0.0, %v1589
        %v1591 = vpop.f32.mrb[0].mxu0
        %1592 = vmatprep.mubr.f32.mxu0 0.0
        %1593 = vmatmul.mubr.f32.gmra.mrb[0].mxu0 %v1173
        %v1594 = vpop.f32.mrb[0].mxu0
        %v1595 = vadd.f32 0.0, %v1594
        %v1596 = vpop.f32.mrb[0].mxu0
        %1597 = vmatprep.mubr.f32.mxu0 0.0
        %1598 = vmatmul.mubr.f32.gmra.mrb[0].mxu0 %v1176
        %v1599 = vpop.f32.mrb[0].mxu0
        %v1600 = vadd.f32 0.0, %v1599
        %v1601 = vpop.f32.mrb[0].mxu0
        %1602 = vmatprep.mubr.f32.mxu0 0.0
        %1603 = vmatmul.mubr.f32.gmra.mrb[0].mxu0 %v1179
        %v1604 = vpop.f32.mrb[0].mxu0
        %v1605 = vadd.f32 0.0, %v1604
        %v1606 = vpop.f32.mrb[0].mxu0
        %1607 = vmatprep.mubr.f32.mxu0 0.0
        %1608 = vmatmul.mubr.f32.gmra.mrb[0].mxu0 %v1182
        %v1609 = vpop.f32.mrb[0].mxu0
        %v1610 = vadd.f32 0.0, %v1609
        %v1611 = vpop.f32.mrb[0].mxu0
        %1612 = vmatprep.mubr.f32.mxu0 0.0
        %1613 = vmatmul.mubr.f32.gmra.mrb[0].mxu0 %v1185
        %v1614 = vpop.f32.mrb[0].mxu0
        %v1615 = vadd.f32 0.0, %v1614
        %v1616 = vpop.f32.mrb[0].mxu0
        %1617 = vmatprep.mubr.f32.mxu0 0.0
        %1618 = vmatmul.mubr.f32.gmra.mrb[0].mxu0 %v1188
        %v1619 = vpop.f32.mrb[0].mxu0
        %v1620 = vadd.f32 0.0, %v1619
        %v1621 = vpop.f32.mrb[0].mxu0
        %1622 = vmatprep.mubr.f32.mxu0 0.0
        %1623 = vmatmul.mubr.f32.gmra.mrb[0].mxu0 %v1336
        %v1624 = vpop.f32.mrb[0].mxu0
        %v1625 = vadd.f32 0.0, %v1624
        %v1626 = vpop.f32.mrb[0].mxu0
        %1627 = vdwg.mxu0
        %v1628 = vadd.f32 %v1405, %v1550
        %v1629 = vadd.f32 %v1410, %v1555
        %v1630 = vadd.f32 %v1415, %v1560
        %v1631 = vadd.f32 %v1420, %v1565
        %v1632 = vadd.f32 %v1425, %v1570
        %v1633 = vadd.f32 %v1430, %v1575
        %v1634 = vadd.f32 %v1435, %v1580
        %v1635 = vadd.f32 %v1440, %v1585
        %v1636 = vadd.f32 %v1445, %v1590
        %v1637 = vadd.f32 %v1450, %v1595
        %v1638 = vadd.f32 %v1455, %v1600
        %v1639 = vadd.f32 %v1460, %v1605
        %v1640 = vadd.f32 %v1465, %v1610
        %v1641 = vadd.f32 %v1470, %v1615
        %v1642 = vadd.f32 %v1475, %v1620
        %v1643 = vadd.f32 %v1480, %v1625
        %v1644 = vld [vmem:[%s4] sm:$0x1]
        %v1646 = vlaneseq
        %v1647 = vshrl.u32 %v1646, 7
        %v1648 = vsub.s32 0, %v1647
        %v1649 = vrot.slane %v1644, %v1648
        %v1651 = vadd.f32 %v1628, %v1649
        %v1652 = vadd.f32 %v1629, %v1649
        %v1653 = vadd.f32 %v1630, %v1649
        %v1654 = vadd.f32 %v1631, %v1649
        %v1655 = vadd.f32 %v1632, %v1649
        %v1656 = vadd.f32 %v1633, %v1649
        %v1657 = vadd.f32 %v1634, %v1649
        %v1658 = vadd.f32 %v1635, %v1649
        %v1659 = vadd.f32 %v1636, %v1649
        %v1660 = vadd.f32 %v1637, %v1649
        %v1661 = vadd.f32 %v1638, %v1649
        %v1662 = vadd.f32 %v1639, %v1649
        %v1663 = vadd.f32 %v1640, %v1649
        %v1664 = vadd.f32 %v1641, %v1649
        %v1665 = vadd.f32 %v1642, %v1649
        %v1666 = vadd.f32 %v1643, %v1649
        %v1667 = vmax.f32 %v1651, 0.0
        %v1668 = vmax.f32 %v1652, 0.0
        %v1669 = vmax.f32 %v1653, 0.0
        %v1670 = vmax.f32 %v1654, 0.0
        %v1671 = vmax.f32 %v1655, 0.0
        %v1672 = vmax.f32 %v1656, 0.0
        %v1673 = vmax.f32 %v1657, 0.0
        %v1674 = vmax.f32 %v1658, 0.0
        %v1675 = vmax.f32 %v1659, 0.0
        %v1676 = vmax.f32 %v1660, 0.0
        %v1677 = vmax.f32 %v1661, 0.0
        %v1678 = vmax.f32 %v1662, 0.0
        %v1679 = vmax.f32 %v1663, 0.0
        %v1680 = vmax.f32 %v1664, 0.0
        %v1681 = vmax.f32 %v1665, 0.0
        %v1682 = vmax.f32 %v1666, 0.0
        %v1683 = vpack.c.bf16 %v1667, %v1667
        %vm1684 = vcmask 519168
        %1685 = vst.msk [vmem:[#allocation2] sm:$0xf] %vm1684, %v1683
        %v1686 = vpack.c.bf16 %v1668, %v1668
        %v1688 = vunpack.c.l.b16 %v1686
        %v1689 = vpack.c.b16 %v1688, %v1688
        %1690 = vrot.lane.b32.xlu0 %v1689, 64
        %v1691 = vpop.permute.xlu0 %1690
        %vm1693 = vcmask 1043968
        %1694 = vst.msk [vmem:[#allocation2] sm:$0xf] %vm1693, %v1691
        %v1695 = vpack.c.bf16 %v1669, %v1669
        %1696 = vst.msk [vmem:[#allocation2 + $0x4] sm:$0xf] %vm1684, %v1695
        %v1697 = vpack.c.bf16 %v1670, %v1670
        %v1699 = vunpack.c.l.b16 %v1697
        %v1700 = vpack.c.b16 %v1699, %v1699
        %1701 = vrot.lane.b32.xlu0 %v1700, 64
        %v1702 = vpop.permute.xlu0 %1701
        %1704 = vst.msk [vmem:[#allocation2 + $0x4] sm:$0xf] %vm1693, %v1702
        %v1705 = vpack.c.bf16 %v1671, %v1671
        %1706 = vst.msk [vmem:[#allocation2 + $0x8] sm:$0xf] %vm1684, %v1705
        %v1707 = vpack.c.bf16 %v1672, %v1672
        %v1709 = vunpack.c.l.b16 %v1707
        %v1710 = vpack.c.b16 %v1709, %v1709
        %1711 = vrot.lane.b32.xlu0 %v1710, 64
        %v1712 = vpop.permute.xlu0 %1711
        %1714 = vst.msk [vmem:[#allocation2 + $0x8] sm:$0xf] %vm1693, %v1712
        %v1715 = vpack.c.bf16 %v1673, %v1673
        %1716 = vst.msk [vmem:[#allocation2 + $0xc] sm:$0xf] %vm1684, %v1715
        %v1717 = vpack.c.bf16 %v1674, %v1674
        %v1719 = vunpack.c.l.b16 %v1717
        %v1720 = vpack.c.b16 %v1719, %v1719
        %1721 = vrot.lane.b32.xlu0 %v1720, 64
        %v1722 = vpop.permute.xlu0 %1721
        %1724 = vst.msk [vmem:[#allocation2 + $0xc] sm:$0xf] %vm1693, %v1722
        %v1725 = vpack.c.bf16 %v1675, %v1675
        %1726 = vst.msk [vmem:[#allocation2 + $0x10] sm:$0xf] %vm1684, %v1725
        %v1727 = vpack.c.bf16 %v1676, %v1676
        %v1729 = vunpack.c.l.b16 %v1727
        %v1730 = vpack.c.b16 %v1729, %v1729
        %1731 = vrot.lane.b32.xlu0 %v1730, 64
        %v1732 = vpop.permute.xlu0 %1731
        %1734 = vst.msk [vmem:[#allocation2 + $0x10] sm:$0xf] %vm1693, %v1732
        %v1735 = vpack.c.bf16 %v1677, %v1677
        %1736 = vst.msk [vmem:[#allocation2 + $0x14] sm:$0xf] %vm1684, %v1735
        %v1737 = vpack.c.bf16 %v1678, %v1678
        %v1739 = vunpack.c.l.b16 %v1737
        %v1740 = vpack.c.b16 %v1739, %v1739
        %1741 = vrot.lane.b32.xlu0 %v1740, 64
        %v1742 = vpop.permute.xlu0 %1741
        %1744 = vst.msk [vmem:[#allocation2 + $0x14] sm:$0xf] %vm1693, %v1742
        %v1745 = vpack.c.bf16 %v1679, %v1679
        %1746 = vst.msk [vmem:[#allocation2 + $0x18] sm:$0xf] %vm1684, %v1745
        %v1747 = vpack.c.bf16 %v1680, %v1680
        %v1749 = vunpack.c.l.b16 %v1747
        %v1750 = vpack.c.b16 %v1749, %v1749
        %1751 = vrot.lane.b32.xlu0 %v1750, 64
        %v1752 = vpop.permute.xlu0 %1751
        %1754 = vst.msk [vmem:[#allocation2 + $0x18] sm:$0xf] %vm1693, %v1752
        %v1755 = vpack.c.bf16 %v1681, %v1681
        %1756 = vst.msk [vmem:[#allocation2 + $0x1c] sm:$0xf] %vm1684, %v1755
        %v1757 = vpack.c.bf16 %v1682, %v1682
        %v1759 = vunpack.c.l.b16 %v1757
        %v1760 = vpack.c.b16 %v1759, %v1759
        %1761 = vrot.lane.b32.xlu0 %v1760, 64
        %v1762 = vpop.permute.xlu0 %1761
        %1764 = vst.msk [vmem:[#allocation2 + $0x1c] sm:$0xf] %vm1693, %v1762
        %v1765 = vld [vmem:[#allocation2] sm:$0xff]
        %v1766 = vld [vmem:[#allocation2 + $0x8] sm:$0xff]
        %v1767 = vld [vmem:[#allocation2 + $0x10] sm:$0xff]
        %v1768 = vld [vmem:[#allocation2 + $0x18] sm:$0xff]
        %v1769 = vld [vmem:[#allocation3] sm:$0xff]
        %v1770 = vld [vmem:[#allocation3 + $0x8] sm:$0xff]
        %v1771 = vld [vmem:[#allocation3 + $0x10] sm:$0xff]
        %v1772 = vld [vmem:[#allocation3 + $0x18] sm:$0xff]
        %v1773 = vld [vmem:[#allocation3 + $0x20] sm:$0xff]
        %v1774 = vld [vmem:[#allocation3 + $0x28] sm:$0xff]
        %v1775 = vld [vmem:[#allocation3 + $0x30] sm:$0xff]
        %v1776 = vld [vmem:[#allocation3 + $0x38] sm:$0xff]
        %v1777 = vld [vmem:[#allocation3 + $0x40] sm:$0xff]
        %v1778 = vld [vmem:[#allocation3 + $0x48] sm:$0xff]
        %v1779 = vld [vmem:[#allocation3 + $0x50] sm:$0xff]
        %v1780 = vld [vmem:[#allocation3 + $0x58] sm:$0xff]
        %v1781 = vld [vmem:[#allocation3 + $0x60] sm:$0xff]
        %v1782 = vld [vmem:[#allocation3 + $0x68] sm:$0xff]
        %v1783 = vld [vmem:[#allocation3 + $0x70] sm:$0xff]
        %v1784 = vld [vmem:[#allocation3 + $0x78] sm:$0xff]
        %v1785 = vld [vmem:[#allocation3 + $0x80] sm:$0xff]
        %v1786 = vld [vmem:[#allocation3 + $0x88] sm:$0xff]
        %v1787 = vld [vmem:[#allocation3 + $0x90] sm:$0xff]
        %v1788 = vld [vmem:[#allocation3 + $0x98] sm:$0xff]
        %v1789 = vld [vmem:[#allocation3 + $0xa0] sm:$0xff]
        %v1790 = vld [vmem:[#allocation3 + $0xa8] sm:$0xff]
        %v1791 = vld [vmem:[#allocation3 + $0xb0] sm:$0xff]
        %v1792 = vld [vmem:[#allocation3 + $0xb8] sm:$0xff]
        %v1793 = vld [vmem:[#allocation3 + $0xc0] sm:$0xff]
        %v1794 = vld [vmem:[#allocation3 + $0xc8] sm:$0xff]
        %v1795 = vld [vmem:[#allocation3 + $0xd0] sm:$0xff]
        %v1796 = vld [vmem:[#allocation3 + $0xd8] sm:$0xff]
        %v1797 = vld [vmem:[#allocation3 + $0xe0] sm:$0xff]
        %v1798 = vld [vmem:[#allocation3 + $0xe8] sm:$0xff]
        %v1799 = vld [vmem:[#allocation3 + $0xf0] sm:$0xff]
        %v1800 = vld [vmem:[#allocation3 + $0xf8] sm:$0xff]
        %v1801 = vld [vmem:[#allocation3 + $0x100] sm:$0xff]
        %v1802 = vld [vmem:[#allocation3 + $0x108] sm:$0xff]
        %v1803 = vld [vmem:[#allocation3 + $0x110] sm:$0xff]
        %v1804 = vld [vmem:[#allocation3 + $0x118] sm:$0xff]
        %v1805 = vld [vmem:[#allocation3 + $0x120] sm:$0xff]
        %v1806 = vld [vmem:[#allocation3 + $0x128] sm:$0xff]
        %v1807 = vld [vmem:[#allocation3 + $0x130] sm:$0xff]
        %v1808 = vld [vmem:[#allocation3 + $0x138] sm:$0xff]
        %v1809 = vld [vmem:[#allocation3 + $0x140] sm:$0xff]
        %v1810 = vld [vmem:[#allocation3 + $0x148] sm:$0xff]
        %v1811 = vld [vmem:[#allocation3 + $0x150] sm:$0xff]
        %v1812 = vld [vmem:[#allocation3 + $0x158] sm:$0xff]
        %v1813 = vld [vmem:[#allocation3 + $0x160] sm:$0xff]
        %v1814 = vld [vmem:[#allocation3 + $0x168] sm:$0xff]
        %v1815 = vld [vmem:[#allocation3 + $0x170] sm:$0xff]
        %v1816 = vld [vmem:[#allocation3 + $0x178] sm:$0xff]
        %v1817 = vld [vmem:[#allocation3 + $0x180] sm:$0xff]
        %v1818 = vld [vmem:[#allocation3 + $0x188] sm:$0xff]
        %v1819 = vld [vmem:[#allocation3 + $0x190] sm:$0xff]
        %v1820 = vld [vmem:[#allocation3 + $0x198] sm:$0xff]
        %v1821 = vld [vmem:[#allocation3 + $0x1a0] sm:$0xff]
        %v1822 = vld [vmem:[#allocation3 + $0x1a8] sm:$0xff]
        %v1823 = vld [vmem:[#allocation3 + $0x1b0] sm:$0xff]
        %v1824 = vld [vmem:[#allocation3 + $0x1b8] sm:$0xff]
        %v1825 = vld [vmem:[#allocation3 + $0x1c0] sm:$0xff]
        %v1826 = vld [vmem:[#allocation3 + $0x1c8] sm:$0xff]
        %v1827 = vld [vmem:[#allocation3 + $0x1d0] sm:$0xff]
        %v1828 = vld [vmem:[#allocation3 + $0x1d8] sm:$0xff]
        %v1829 = vld [vmem:[#allocation3 + $0x1e0] sm:$0xff]
        %v1830 = vld [vmem:[#allocation3 + $0x1e8] sm:$0xff]
        %v1831 = vld [vmem:[#allocation3 + $0x1f0] sm:$0xff]
        %v1832 = vld [vmem:[#allocation3 + $0x1f8] sm:$0xff]
        %v1833 = vld [vmem:[#allocation3 + $0x200] sm:$0xff]
        %v1834 = vld [vmem:[#allocation3 + $0x208] sm:$0xff]
        %v1835 = vld [vmem:[#allocation3 + $0x210] sm:$0xff]
        %v1836 = vld [vmem:[#allocation3 + $0x218] sm:$0xff]
        %v1837 = vld [vmem:[#allocation3 + $0x220] sm:$0xff]
        %v1838 = vld [vmem:[#allocation3 + $0x228] sm:$0xff]
        %v1839 = vld [vmem:[#allocation3 + $0x230] sm:$0xff]
        %v1840 = vld [vmem:[#allocation3 + $0x238] sm:$0xff]
        %v1841 = vld [vmem:[#allocation3 + $0x240] sm:$0xff]
        %v1842 = vld [vmem:[#allocation3 + $0x248] sm:$0xff]
        %v1843 = vld [vmem:[#allocation3 + $0x250] sm:$0xff]
        %v1844 = vld [vmem:[#allocation3 + $0x258] sm:$0xff]
        %v1845 = vld [vmem:[#allocation3 + $0x260] sm:$0xff]
        %v1846 = vld [vmem:[#allocation3 + $0x268] sm:$0xff]
        %v1847 = vld [vmem:[#allocation3 + $0x270] sm:$0xff]
        %v1848 = vld [vmem:[#allocation3 + $0x278] sm:$0xff]
        %v1849 = vld [vmem:[#allocation3 + $0x280] sm:$0xff]
        %v1850 = vld [vmem:[#allocation3 + $0x288] sm:$0xff]
        %v1851 = vld [vmem:[#allocation3 + $0x290] sm:$0xff]
        %v1852 = vld [vmem:[#allocation3 + $0x298] sm:$0xff]
        %v1853 = vld [vmem:[#allocation3 + $0x2a0] sm:$0xff]
        %v1854 = vld [vmem:[#allocation3 + $0x2a8] sm:$0xff]
        %v1855 = vld [vmem:[#allocation3 + $0x2b0] sm:$0xff]
        %v1856 = vld [vmem:[#allocation3 + $0x2b8] sm:$0xff]
        %v1857 = vld [vmem:[#allocation3 + $0x2c0] sm:$0xff]
        %v1858 = vld [vmem:[#allocation3 + $0x2c8] sm:$0xff]
        %v1859 = vld [vmem:[#allocation3 + $0x2d0] sm:$0xff]
        %v1860 = vld [vmem:[#allocation3 + $0x2d8] sm:$0xff]
        %v1861 = vld [vmem:[#allocation3 + $0x2e0] sm:$0xff]
        %v1862 = vld [vmem:[#allocation3 + $0x2e8] sm:$0xff]
        %v1863 = vld [vmem:[#allocation3 + $0x2f0] sm:$0xff]
        %v1864 = vld [vmem:[#allocation3 + $0x2f8] sm:$0xff]
        %v1865 = vld [vmem:[#allocation3 + $0x300] sm:$0xff]
        %v1866 = vld [vmem:[#allocation3 + $0x308] sm:$0xff]
        %v1867 = vld [vmem:[#allocation3 + $0x310] sm:$0xff]
        %v1868 = vld [vmem:[#allocation3 + $0x318] sm:$0xff]
        %v1869 = vld [vmem:[#allocation3 + $0x320] sm:$0xff]
        %v1870 = vld [vmem:[#allocation3 + $0x328] sm:$0xff]
        %v1871 = vld [vmem:[#allocation3 + $0x330] sm:$0xff]
        %v1872 = vld [vmem:[#allocation3 + $0x338] sm:$0xff]
        %v1873 = vld [vmem:[#allocation3 + $0x340] sm:$0xff]
        %v1874 = vld [vmem:[#allocation3 + $0x348] sm:$0xff]
        %v1875 = vld [vmem:[#allocation3 + $0x350] sm:$0xff]
        %v1876 = vld [vmem:[#allocation3 + $0x358] sm:$0xff]
        %v1877 = vld [vmem:[#allocation3 + $0x360] sm:$0xff]
        %v1878 = vld [vmem:[#allocation3 + $0x368] sm:$0xff]
        %v1879 = vld [vmem:[#allocation3 + $0x370] sm:$0xff]
        %v1880 = vld [vmem:[#allocation3 + $0x378] sm:$0xff]
        %v1881 = vld [vmem:[#allocation3 + $0x380] sm:$0xff]
        %v1882 = vld [vmem:[#allocation3 + $0x388] sm:$0xff]
        %v1883 = vld [vmem:[#allocation3 + $0x390] sm:$0xff]
        %v1884 = vld [vmem:[#allocation3 + $0x398] sm:$0xff]
        %v1885 = vld [vmem:[#allocation3 + $0x3a0] sm:$0xff]
        %v1886 = vld [vmem:[#allocation3 + $0x3a8] sm:$0xff]
        %v1887 = vld [vmem:[#allocation3 + $0x3b0] sm:$0xff]
        %v1888 = vld [vmem:[#allocation3 + $0x3b8] sm:$0xff]
        %v1889 = vld [vmem:[#allocation3 + $0x3c0] sm:$0xff]
        %v1890 = vld [vmem:[#allocation3 + $0x3c8] sm:$0xff]
        %v1891 = vld [vmem:[#allocation3 + $0x3d0] sm:$0xff]
        %v1892 = vld [vmem:[#allocation3 + $0x3d8] sm:$0xff]
        %v1893 = vld [vmem:[#allocation3 + $0x3e0] sm:$0xff]
        %v1894 = vld [vmem:[#allocation3 + $0x3e8] sm:$0xff]
        %v1895 = vld [vmem:[#allocation3 + $0x3f0] sm:$0xff]
        %v1896 = vld [vmem:[#allocation3 + $0x3f8] sm:$0xff]
        %v1897 = vld [vmem:[%s6] sm:$0x3]
        %v1899 = vlaneseq
        %v1900 = vshrl.u32 %v1899, 7
        %v1901 = vsub.s32 0, %v1900
        %v1902 = vrot.slane %v1897, %v1901
        %v1903 = vlaneseq
        %v1904 = vshrl.u32 %v1903, 7
        %v1905 = vsub.s32 1, %v1904
        %v1906 = vrot.slane %v1897, %v1905
        %v1913 = vunpack.c.l.b16 %v1765
        %v1914 = vunpack.c.h.b16 %v1765
        %v1915 = vunpack.c.l.b16 %v1766
        %v1916 = vunpack.c.h.b16 %v1766
        %v1917 = vunpack.c.l.b16 %v1767
        %v1918 = vunpack.c.h.b16 %v1767
        %v1919 = vunpack.c.l.b16 %v1768
        %v1920 = vunpack.c.h.b16 %v1768
        %v1921 = vpack.c.b16 %v1913, %v1913
        %v1922 = vpack.c.b16 %v1914, %v1914
        %v1923 = vpack.c.b16 %v1915, %v1915
        %v1924 = vpack.c.b16 %v1916, %v1916
        %v1925 = vpack.c.b16 %v1917, %v1917
        %v1926 = vpack.c.b16 %v1918, %v1918
        %v1927 = vpack.c.b16 %v1919, %v1919
        %v1928 = vpack.c.b16 %v1920, %v1920
        %v2065 = vunpack.c.l.b16 %v1769
        %v2066 = vunpack.c.h.b16 %v1769
        %v2067 = vunpack.c.l.b16 %v1770
        %v2068 = vunpack.c.h.b16 %v1770
        %v2069 = vunpack.c.l.b16 %v1771
        %v2070 = vunpack.c.h.b16 %v1771
        %v2071 = vunpack.c.l.b16 %v1772
        %v2072 = vunpack.c.h.b16 %v1772
        %v2073 = vunpack.c.l.b16 %v1773
        %v2074 = vunpack.c.h.b16 %v1773
        %v2075 = vunpack.c.l.b16 %v1774
        %v2076 = vunpack.c.h.b16 %v1774
        %v2077 = vunpack.c.l.b16 %v1775
        %v2078 = vunpack.c.h.b16 %v1775
        %v2079 = vunpack.c.l.b16 %v1776
        %v2080 = vunpack.c.h.b16 %v1776
        %v2081 = vunpack.c.l.b16 %v1777
        %v2082 = vunpack.c.h.b16 %v1777
        %v2083 = vunpack.c.l.b16 %v1778
        %v2084 = vunpack.c.h.b16 %v1778
        %v2085 = vunpack.c.l.b16 %v1779
        %v2086 = vunpack.c.h.b16 %v1779
        %v2087 = vunpack.c.l.b16 %v1780
        %v2088 = vunpack.c.h.b16 %v1780
        %v2089 = vunpack.c.l.b16 %v1781
        %v2090 = vunpack.c.h.b16 %v1781
        %v2091 = vunpack.c.l.b16 %v1782
        %v2092 = vunpack.c.h.b16 %v1782
        %v2093 = vunpack.c.l.b16 %v1783
        %v2094 = vunpack.c.h.b16 %v1783
        %v2095 = vunpack.c.l.b16 %v1784
        %v2096 = vunpack.c.h.b16 %v1784
        %v2097 = vunpack.c.l.b16 %v1785
        %v2098 = vunpack.c.h.b16 %v1785
        %v2099 = vunpack.c.l.b16 %v1786
        %v2100 = vunpack.c.h.b16 %v1786
        %v2101 = vunpack.c.l.b16 %v1787
        %v2102 = vunpack.c.h.b16 %v1787
        %v2103 = vunpack.c.l.b16 %v1788
        %v2104 = vunpack.c.h.b16 %v1788
        %v2105 = vunpack.c.l.b16 %v1789
        %v2106 = vunpack.c.h.b16 %v1789
        %v2107 = vunpack.c.l.b16 %v1790
        %v2108 = vunpack.c.h.b16 %v1790
        %v2109 = vunpack.c.l.b16 %v1791
        %v2110 = vunpack.c.h.b16 %v1791
        %v2111 = vunpack.c.l.b16 %v1792
        %v2112 = vunpack.c.h.b16 %v1792
        %v2113 = vunpack.c.l.b16 %v1793
        %v2114 = vunpack.c.h.b16 %v1793
        %v2115 = vunpack.c.l.b16 %v1794
        %v2116 = vunpack.c.h.b16 %v1794
        %v2117 = vunpack.c.l.b16 %v1795
        %v2118 = vunpack.c.h.b16 %v1795
        %v2119 = vunpack.c.l.b16 %v1796
        %v2120 = vunpack.c.h.b16 %v1796
        %v2121 = vunpack.c.l.b16 %v1797
        %v2122 = vunpack.c.h.b16 %v1797
        %v2123 = vunpack.c.l.b16 %v1798
        %v2124 = vunpack.c.h.b16 %v1798
        %v2125 = vunpack.c.l.b16 %v1799
        %v2126 = vunpack.c.h.b16 %v1799
        %v2127 = vunpack.c.l.b16 %v1800
        %v2128 = vunpack.c.h.b16 %v1800
        %v2129 = vunpack.c.l.b16 %v1801
        %v2130 = vunpack.c.h.b16 %v1801
        %v2131 = vunpack.c.l.b16 %v1802
        %v2132 = vunpack.c.h.b16 %v1802
        %v2133 = vunpack.c.l.b16 %v1803
        %v2134 = vunpack.c.h.b16 %v1803
        %v2135 = vunpack.c.l.b16 %v1804
        %v2136 = vunpack.c.h.b16 %v1804
        %v2137 = vunpack.c.l.b16 %v1805
        %v2138 = vunpack.c.h.b16 %v1805
        %v2139 = vunpack.c.l.b16 %v1806
        %v2140 = vunpack.c.h.b16 %v1806
        %v2141 = vunpack.c.l.b16 %v1807
        %v2142 = vunpack.c.h.b16 %v1807
        %v2143 = vunpack.c.l.b16 %v1808
        %v2144 = vunpack.c.h.b16 %v1808
        %v2145 = vunpack.c.l.b16 %v1809
        %v2146 = vunpack.c.h.b16 %v1809
        %v2147 = vunpack.c.l.b16 %v1810
        %v2148 = vunpack.c.h.b16 %v1810
        %v2149 = vunpack.c.l.b16 %v1811
        %v2150 = vunpack.c.h.b16 %v1811
        %v2151 = vunpack.c.l.b16 %v1812
        %v2152 = vunpack.c.h.b16 %v1812
        %v2153 = vunpack.c.l.b16 %v1813
        %v2154 = vunpack.c.h.b16 %v1813
        %v2155 = vunpack.c.l.b16 %v1814
        %v2156 = vunpack.c.h.b16 %v1814
        %v2157 = vunpack.c.l.b16 %v1815
        %v2158 = vunpack.c.h.b16 %v1815
        %v2159 = vunpack.c.l.b16 %v1816
        %v2160 = vunpack.c.h.b16 %v1816
        %v2161 = vunpack.c.l.b16 %v1817
        %v2162 = vunpack.c.h.b16 %v1817
        %v2163 = vunpack.c.l.b16 %v1818
        %v2164 = vunpack.c.h.b16 %v1818
        %v2165 = vunpack.c.l.b16 %v1819
        %v2166 = vunpack.c.h.b16 %v1819
        %v2167 = vunpack.c.l.b16 %v1820
        %v2168 = vunpack.c.h.b16 %v1820
        %v2169 = vunpack.c.l.b16 %v1821
        %v2170 = vunpack.c.h.b16 %v1821
        %v2171 = vunpack.c.l.b16 %v1822
        %v2172 = vunpack.c.h.b16 %v1822
        %v2173 = vunpack.c.l.b16 %v1823
        %v2174 = vunpack.c.h.b16 %v1823
        %v2175 = vunpack.c.l.b16 %v1824
        %v2176 = vunpack.c.h.b16 %v1824
        %v2177 = vunpack.c.l.b16 %v1825
        %v2178 = vunpack.c.h.b16 %v1825
        %v2179 = vunpack.c.l.b16 %v1826
        %v2180 = vunpack.c.h.b16 %v1826
        %v2181 = vunpack.c.l.b16 %v1827
        %v2182 = vunpack.c.h.b16 %v1827
        %v2183 = vunpack.c.l.b16 %v1828
        %v2184 = vunpack.c.h.b16 %v1828
        %v2185 = vunpack.c.l.b16 %v1829
        %v2186 = vunpack.c.h.b16 %v1829
        %v2187 = vunpack.c.l.b16 %v1830
        %v2188 = vunpack.c.h.b16 %v1830
        %v2189 = vunpack.c.l.b16 %v1831
        %v2190 = vunpack.c.h.b16 %v1831
        %v2191 = vunpack.c.l.b16 %v1832
        %v2192 = vunpack.c.h.b16 %v1832
        %v2193 = vunpack.c.l.b16 %v1833
        %v2194 = vunpack.c.h.b16 %v1833
        %v2195 = vunpack.c.l.b16 %v1834
        %v2196 = vunpack.c.h.b16 %v1834
        %v2197 = vunpack.c.l.b16 %v1835
        %v2198 = vunpack.c.h.b16 %v1835
        %v2199 = vunpack.c.l.b16 %v1836
        %v2200 = vunpack.c.h.b16 %v1836
        %v2201 = vunpack.c.l.b16 %v1837
        %v2202 = vunpack.c.h.b16 %v1837
        %v2203 = vunpack.c.l.b16 %v1838
        %v2204 = vunpack.c.h.b16 %v1838
        %v2205 = vunpack.c.l.b16 %v1839
        %v2206 = vunpack.c.h.b16 %v1839
        %v2207 = vunpack.c.l.b16 %v1840
        %v2208 = vunpack.c.h.b16 %v1840
        %v2209 = vunpack.c.l.b16 %v1841
        %v2210 = vunpack.c.h.b16 %v1841
        %v2211 = vunpack.c.l.b16 %v1842
        %v2212 = vunpack.c.h.b16 %v1842
        %v2213 = vunpack.c.l.b16 %v1843
        %v2214 = vunpack.c.h.b16 %v1843
        %v2215 = vunpack.c.l.b16 %v1844
        %v2216 = vunpack.c.h.b16 %v1844
        %v2217 = vunpack.c.l.b16 %v1845
        %v2218 = vunpack.c.h.b16 %v1845
        %v2219 = vunpack.c.l.b16 %v1846
        %v2220 = vunpack.c.h.b16 %v1846
        %v2221 = vunpack.c.l.b16 %v1847
        %v2222 = vunpack.c.h.b16 %v1847
        %v2223 = vunpack.c.l.b16 %v1848
        %v2224 = vunpack.c.h.b16 %v1848
        %v2225 = vunpack.c.l.b16 %v1849
        %v2226 = vunpack.c.h.b16 %v1849
        %v2227 = vunpack.c.l.b16 %v1850
        %v2228 = vunpack.c.h.b16 %v1850
        %v2229 = vunpack.c.l.b16 %v1851
        %v2230 = vunpack.c.h.b16 %v1851
        %v2231 = vunpack.c.l.b16 %v1852
        %v2232 = vunpack.c.h.b16 %v1852
        %v2233 = vunpack.c.l.b16 %v1853
        %v2234 = vunpack.c.h.b16 %v1853
        %v2235 = vunpack.c.l.b16 %v1854
        %v2236 = vunpack.c.h.b16 %v1854
        %v2237 = vunpack.c.l.b16 %v1855
        %v2238 = vunpack.c.h.b16 %v1855
        %v2239 = vunpack.c.l.b16 %v1856
        %v2240 = vunpack.c.h.b16 %v1856
        %v2241 = vunpack.c.l.b16 %v1857
        %v2242 = vunpack.c.h.b16 %v1857
        %v2243 = vunpack.c.l.b16 %v1858
        %v2244 = vunpack.c.h.b16 %v1858
        %v2245 = vunpack.c.l.b16 %v1859
        %v2246 = vunpack.c.h.b16 %v1859
        %v2247 = vunpack.c.l.b16 %v1860
        %v2248 = vunpack.c.h.b16 %v1860
        %v2249 = vunpack.c.l.b16 %v1861
        %v2250 = vunpack.c.h.b16 %v1861
        %v2251 = vunpack.c.l.b16 %v1862
        %v2252 = vunpack.c.h.b16 %v1862
        %v2253 = vunpack.c.l.b16 %v1863
        %v2254 = vunpack.c.h.b16 %v1863
        %v2255 = vunpack.c.l.b16 %v1864
        %v2256 = vunpack.c.h.b16 %v1864
        %v2257 = vunpack.c.l.b16 %v1865
        %v2258 = vunpack.c.h.b16 %v1865
        %v2259 = vunpack.c.l.b16 %v1866
        %v2260 = vunpack.c.h.b16 %v1866
        %v2261 = vunpack.c.l.b16 %v1867
        %v2262 = vunpack.c.h.b16 %v1867
        %v2263 = vunpack.c.l.b16 %v1868
        %v2264 = vunpack.c.h.b16 %v1868
        %v2265 = vunpack.c.l.b16 %v1869
        %v2266 = vunpack.c.h.b16 %v1869
        %v2267 = vunpack.c.l.b16 %v1870
        %v2268 = vunpack.c.h.b16 %v1870
        %v2269 = vunpack.c.l.b16 %v1871
        %v2270 = vunpack.c.h.b16 %v1871
        %v2271 = vunpack.c.l.b16 %v1872
        %v2272 = vunpack.c.h.b16 %v1872
        %v2273 = vunpack.c.l.b16 %v1873
        %v2274 = vunpack.c.h.b16 %v1873
        %v2275 = vunpack.c.l.b16 %v1874
        %v2276 = vunpack.c.h.b16 %v1874
        %v2277 = vunpack.c.l.b16 %v1875
        %v2278 = vunpack.c.h.b16 %v1875
        %v2279 = vunpack.c.l.b16 %v1876
        %v2280 = vunpack.c.h.b16 %v1876
        %v2281 = vunpack.c.l.b16 %v1877
        %v2282 = vunpack.c.h.b16 %v1877
        %v2283 = vunpack.c.l.b16 %v1878
        %v2284 = vunpack.c.h.b16 %v1878
        %v2285 = vunpack.c.l.b16 %v1879
        %v2286 = vunpack.c.h.b16 %v1879
        %v2287 = vunpack.c.l.b16 %v1880
        %v2288 = vunpack.c.h.b16 %v1880
        %v2289 = vunpack.c.l.b16 %v1881
        %v2290 = vunpack.c.h.b16 %v1881
        %v2291 = vunpack.c.l.b16 %v1882
        %v2292 = vunpack.c.h.b16 %v1882
        %v2293 = vunpack.c.l.b16 %v1883
        %v2294 = vunpack.c.h.b16 %v1883
        %v2295 = vunpack.c.l.b16 %v1884
        %v2296 = vunpack.c.h.b16 %v1884
        %v2297 = vunpack.c.l.b16 %v1885
        %v2298 = vunpack.c.h.b16 %v1885
        %v2299 = vunpack.c.l.b16 %v1886
        %v2300 = vunpack.c.h.b16 %v1886
        %v2301 = vunpack.c.l.b16 %v1887
        %v2302 = vunpack.c.h.b16 %v1887
        %v2303 = vunpack.c.l.b16 %v1888
        %v2304 = vunpack.c.h.b16 %v1888
        %v2305 = vunpack.c.l.b16 %v1889
        %v2306 = vunpack.c.h.b16 %v1889
        %v2307 = vunpack.c.l.b16 %v1890
        %v2308 = vunpack.c.h.b16 %v1890
        %v2309 = vunpack.c.l.b16 %v1891
        %v2310 = vunpack.c.h.b16 %v1891
        %v2311 = vunpack.c.l.b16 %v1892
        %v2312 = vunpack.c.h.b16 %v1892
        %v2313 = vunpack.c.l.b16 %v1893
        %v2314 = vunpack.c.h.b16 %v1893
        %v2315 = vunpack.c.l.b16 %v1894
        %v2316 = vunpack.c.h.b16 %v1894
        %v2317 = vunpack.c.l.b16 %v1895
        %v2318 = vunpack.c.h.b16 %v1895
        %v2319 = vunpack.c.l.b16 %v1896
        %v2320 = vunpack.c.h.b16 %v1896
        %v2321 = vpack.c.b16 %v2067, %v2065
        %v2322 = vpack.c.b16 %v2068, %v2066
        %v2323 = vpack.c.b16 %v2071, %v2069
        %v2324 = vpack.c.b16 %v2072, %v2070
        %v2325 = vpack.c.b16 %v2075, %v2073
        %v2326 = vpack.c.b16 %v2076, %v2074
        %v2327 = vpack.c.b16 %v2079, %v2077
        %v2328 = vpack.c.b16 %v2080, %v2078
        %v2329 = vpack.c.b16 %v2083, %v2081
        %v2330 = vpack.c.b16 %v2084, %v2082
        %v2331 = vpack.c.b16 %v2087, %v2085
        %v2332 = vpack.c.b16 %v2088, %v2086
        %v2333 = vpack.c.b16 %v2091, %v2089
        %v2334 = vpack.c.b16 %v2092, %v2090
        %v2335 = vpack.c.b16 %v2095, %v2093
        %v2336 = vpack.c.b16 %v2096, %v2094
        %v2337 = vpack.c.b16 %v2099, %v2097
        %v2338 = vpack.c.b16 %v2100, %v2098
        %v2339 = vpack.c.b16 %v2103, %v2101
        %v2340 = vpack.c.b16 %v2104, %v2102
        %v2341 = vpack.c.b16 %v2107, %v2105
        %v2342 = vpack.c.b16 %v2108, %v2106
        %v2343 = vpack.c.b16 %v2111, %v2109
        %v2344 = vpack.c.b16 %v2112, %v2110
        %v2345 = vpack.c.b16 %v2115, %v2113
        %v2346 = vpack.c.b16 %v2116, %v2114
        %v2347 = vpack.c.b16 %v2119, %v2117
        %v2348 = vpack.c.b16 %v2120, %v2118
        %v2349 = vpack.c.b16 %v2123, %v2121
        %v2350 = vpack.c.b16 %v2124, %v2122
        %v2351 = vpack.c.b16 %v2127, %v2125
        %v2352 = vpack.c.b16 %v2128, %v2126
        %v2353 = vpack.c.b16 %v2131, %v2129
        %v2354 = vpack.c.b16 %v2132, %v2130
        %v2355 = vpack.c.b16 %v2135, %v2133
        %v2356 = vpack.c.b16 %v2136, %v2134
        %v2357 = vpack.c.b16 %v2139, %v2137
        %v2358 = vpack.c.b16 %v2140, %v2138
        %v2359 = vpack.c.b16 %v2143, %v2141
        %v2360 = vpack.c.b16 %v2144, %v2142
        %v2361 = vpack.c.b16 %v2147, %v2145
        %v2362 = vpack.c.b16 %v2148, %v2146
        %v2363 = vpack.c.b16 %v2151, %v2149
        %v2364 = vpack.c.b16 %v2152, %v2150
        %v2365 = vpack.c.b16 %v2155, %v2153
        %v2366 = vpack.c.b16 %v2156, %v2154
        %v2367 = vpack.c.b16 %v2159, %v2157
        %v2368 = vpack.c.b16 %v2160, %v2158
        %v2369 = vpack.c.b16 %v2163, %v2161
        %v2370 = vpack.c.b16 %v2164, %v2162
        %v2371 = vpack.c.b16 %v2167, %v2165
        %v2372 = vpack.c.b16 %v2168, %v2166
        %v2373 = vpack.c.b16 %v2171, %v2169
        %v2374 = vpack.c.b16 %v2172, %v2170
        %v2375 = vpack.c.b16 %v2175, %v2173
        %v2376 = vpack.c.b16 %v2176, %v2174
        %v2377 = vpack.c.b16 %v2179, %v2177
        %v2378 = vpack.c.b16 %v2180, %v2178
        %v2379 = vpack.c.b16 %v2183, %v2181
        %v2380 = vpack.c.b16 %v2184, %v2182
        %v2381 = vpack.c.b16 %v2187, %v2185
        %v2382 = vpack.c.b16 %v2188, %v2186
        %v2383 = vpack.c.b16 %v2191, %v2189
        %v2384 = vpack.c.b16 %v2192, %v2190
        %v2385 = vpack.c.b16 %v2195, %v2193
        %v2386 = vpack.c.b16 %v2196, %v2194
        %v2387 = vpack.c.b16 %v2199, %v2197
        %v2388 = vpack.c.b16 %v2200, %v2198
        %v2389 = vpack.c.b16 %v2203, %v2201
        %v2390 = vpack.c.b16 %v2204, %v2202
        %v2391 = vpack.c.b16 %v2207, %v2205
        %v2392 = vpack.c.b16 %v2208, %v2206
        %v2393 = vpack.c.b16 %v2211, %v2209
        %v2394 = vpack.c.b16 %v2212, %v2210
        %v2395 = vpack.c.b16 %v2215, %v2213
        %v2396 = vpack.c.b16 %v2216, %v2214
        %v2397 = vpack.c.b16 %v2219, %v2217
        %v2398 = vpack.c.b16 %v2220, %v2218
        %v2399 = vpack.c.b16 %v2223, %v2221
        %v2400 = vpack.c.b16 %v2224, %v2222
        %v2401 = vpack.c.b16 %v2227, %v2225
        %v2402 = vpack.c.b16 %v2228, %v2226
        %v2403 = vpack.c.b16 %v2231, %v2229
        %v2404 = vpack.c.b16 %v2232, %v2230
        %v2405 = vpack.c.b16 %v2235, %v2233
        %v2406 = vpack.c.b16 %v2236, %v2234
        %v2407 = vpack.c.b16 %v2239, %v2237
        %v2408 = vpack.c.b16 %v2240, %v2238
        %v2409 = vpack.c.b16 %v2243, %v2241
        %v2410 = vpack.c.b16 %v2244, %v2242
        %v2411 = vpack.c.b16 %v2247, %v2245
        %v2412 = vpack.c.b16 %v2248, %v2246
        %v2413 = vpack.c.b16 %v2251, %v2249
        %v2414 = vpack.c.b16 %v2252, %v2250
        %v2415 = vpack.c.b16 %v2255, %v2253
        %v2416 = vpack.c.b16 %v2256, %v2254
        %v2417 = vpack.c.b16 %v2259, %v2257
        %v2418 = vpack.c.b16 %v2260, %v2258
        %v2419 = vpack.c.b16 %v2263, %v2261
        %v2420 = vpack.c.b16 %v2264, %v2262
        %v2421 = vpack.c.b16 %v2267, %v2265
        %v2422 = vpack.c.b16 %v2268, %v2266
        %v2423 = vpack.c.b16 %v2271, %v2269
        %v2424 = vpack.c.b16 %v2272, %v2270
        %v2425 = vpack.c.b16 %v2275, %v2273
        %v2426 = vpack.c.b16 %v2276, %v2274
        %v2427 = vpack.c.b16 %v2279, %v2277
        %v2428 = vpack.c.b16 %v2280, %v2278
        %v2429 = vpack.c.b16 %v2283, %v2281
        %v2430 = vpack.c.b16 %v2284, %v2282
        %v2431 = vpack.c.b16 %v2287, %v2285
        %v2432 = vpack.c.b16 %v2288, %v2286
        %v2433 = vpack.c.b16 %v2291, %v2289
        %v2434 = vpack.c.b16 %v2292, %v2290
        %v2435 = vpack.c.b16 %v2295, %v2293
        %v2436 = vpack.c.b16 %v2296, %v2294
        %v2437 = vpack.c.b16 %v2299, %v2297
        %v2438 = vpack.c.b16 %v2300, %v2298
        %v2439 = vpack.c.b16 %v2303, %v2301
        %v2440 = vpack.c.b16 %v2304, %v2302
        %v2441 = vpack.c.b16 %v2307, %v2305
        %v2442 = vpack.c.b16 %v2308, %v2306
        %v2443 = vpack.c.b16 %v2311, %v2309
        %v2444 = vpack.c.b16 %v2312, %v2310
        %v2445 = vpack.c.b16 %v2315, %v2313
        %v2446 = vpack.c.b16 %v2316, %v2314
        %v2447 = vpack.c.b16 %v2319, %v2317
        %v2448 = vpack.c.b16 %v2320, %v2318
        %2577 = vmatprep.subr.bf16.mxu0 %v2322
        %2578 = vmatpush1.bf16.msra.mxu0 %v2321
        %2579 = vmatprep.subr.bf16.mxu0 %v2324
        %2580 = vmatpush1.bf16.msra.mxu0 %v2323
        %2581 = vmatprep.subr.bf16.mxu0 %v2326
        %2582 = vmatpush1.bf16.msra.mxu0 %v2325
        %2583 = vmatprep.subr.bf16.mxu0 %v2328
        %2584 = vmatpush1.bf16.msra.mxu0 %v2327
        %2585 = vmatprep.subr.bf16.mxu0 %v2330
        %2586 = vmatpush1.bf16.msra.mxu0 %v2329
        %2587 = vmatprep.subr.bf16.mxu0 %v2332
        %2588 = vmatpush1.bf16.msra.mxu0 %v2331
        %2589 = vmatprep.subr.bf16.mxu0 %v2334
        %2590 = vmatpush1.bf16.msra.mxu0 %v2333
        %2591 = vmatprep.subr.bf16.mxu0 %v2336
        %2592 = vmatpush1.bf16.msra.mxu0 %v2335
        %2593 = vmatprep.subr.bf16.mxu0 %v2338
        %2594 = vmatpush1.bf16.msra.mxu0 %v2337
        %2595 = vmatprep.subr.bf16.mxu0 %v2340
        %2596 = vmatpush1.bf16.msra.mxu0 %v2339
        %2597 = vmatprep.subr.bf16.mxu0 %v2342
        %2598 = vmatpush1.bf16.msra.mxu0 %v2341
        %2599 = vmatprep.subr.bf16.mxu0 %v2344
        %2600 = vmatpush1.bf16.msra.mxu0 %v2343
        %2601 = vmatprep.subr.bf16.mxu0 %v2346
        %2602 = vmatpush1.bf16.msra.mxu0 %v2345
        %2603 = vmatprep.subr.bf16.mxu0 %v2348
        %2604 = vmatpush1.bf16.msra.mxu0 %v2347
        %2605 = vmatprep.subr.bf16.mxu0 %v2350
        %2606 = vmatpush1.bf16.msra.mxu0 %v2349
        %2607 = vmatprep.subr.bf16.mxu0 %v2352
        %2608 = vmatpush1.bf16.msra.mxu0 %v2351
        %2609 = vmatprep.mubr.bf16.mxu0 %v1922
        %2610 = vmatmul.mubr.bf16.gmra.mrb[0].mxu0 %v1921
        %v2611 = vpop.f32.mrb[0].mxu0
        %v2612 = vadd.f32 %v1902, %v2611
        %v2613 = vpop.f32.mrb[0].mxu0
        %v2614 = vadd.f32 %v1906, %v2613
        %v2615 = vpop.f32.mrb[0].mxu0
        %v2616 = vpop.f32.mrb[0].mxu0
        %2617 = vdwg.mxu0
        %2618 = vmatprep.subr.bf16.mxu0 %v2354
        %2619 = vmatpush1.bf16.msra.mxu0 %v2353
        %2620 = vmatprep.subr.bf16.mxu0 %v2356
        %2621 = vmatpush1.bf16.msra.mxu0 %v2355
        %2622 = vmatprep.subr.bf16.mxu0 %v2358
        %2623 = vmatpush1.bf16.msra.mxu0 %v2357
        %2624 = vmatprep.subr.bf16.mxu0 %v2360
        %2625 = vmatpush1.bf16.msra.mxu0 %v2359
        %2626 = vmatprep.subr.bf16.mxu0 %v2362
        %2627 = vmatpush1.bf16.msra.mxu0 %v2361
        %2628 = vmatprep.subr.bf16.mxu0 %v2364
        %2629 = vmatpush1.bf16.msra.mxu0 %v2363
        %2630 = vmatprep.subr.bf16.mxu0 %v2366
        %2631 = vmatpush1.bf16.msra.mxu0 %v2365
        %2632 = vmatprep.subr.bf16.mxu0 %v2368
        %2633 = vmatpush1.bf16.msra.mxu0 %v2367
        %2634 = vmatprep.subr.bf16.mxu0 %v2370
        %2635 = vmatpush1.bf16.msra.mxu0 %v2369
        %2636 = vmatprep.subr.bf16.mxu0 %v2372
        %2637 = vmatpush1.bf16.msra.mxu0 %v2371
        %2638 = vmatprep.subr.bf16.mxu0 %v2374
        %2639 = vmatpush1.bf16.msra.mxu0 %v2373
        %2640 = vmatprep.subr.bf16.mxu0 %v2376
        %2641 = vmatpush1.bf16.msra.mxu0 %v2375
        %2642 = vmatprep.subr.bf16.mxu0 %v2378
        %2643 = vmatpush1.bf16.msra.mxu0 %v2377
        %2644 = vmatprep.subr.bf16.mxu0 %v2380
        %2645 = vmatpush1.bf16.msra.mxu0 %v2379
        %2646 = vmatprep.subr.bf16.mxu0 %v2382
        %2647 = vmatpush1.bf16.msra.mxu0 %v2381
        %2648 = vmatprep.subr.bf16.mxu0 %v2384
        %2649 = vmatpush1.bf16.msra.mxu0 %v2383
        %2650 = vmatprep.mubr.bf16.mxu0 %v1924
        %2651 = vmatmul.mubr.bf16.gmra.mrb[0].mxu0 %v1923
        %v2652 = vpop.f32.mrb[0].mxu0
        %v2653 = vadd.f32 %v2612, %v2652
        %v2654 = vpop.f32.mrb[0].mxu0
        %v2655 = vadd.f32 %v2614, %v2654
        %v2656 = vpop.f32.mrb[0].mxu0
        %v2657 = vpop.f32.mrb[0].mxu0
        %2658 = vdwg.mxu0
        %2659 = vmatprep.subr.bf16.mxu0 %v2386
        %2660 = vmatpush1.bf16.msra.mxu0 %v2385
        %2661 = vmatprep.subr.bf16.mxu0 %v2388
        %2662 = vmatpush1.bf16.msra.mxu0 %v2387
        %2663 = vmatprep.subr.bf16.mxu0 %v2390
        %2664 = vmatpush1.bf16.msra.mxu0 %v2389
        %2665 = vmatprep.subr.bf16.mxu0 %v2392
        %2666 = vmatpush1.bf16.msra.mxu0 %v2391
        %2667 = vmatprep.subr.bf16.mxu0 %v2394
        %2668 = vmatpush1.bf16.msra.mxu0 %v2393
        %2669 = vmatprep.subr.bf16.mxu0 %v2396
        %2670 = vmatpush1.bf16.msra.mxu0 %v2395
        %2671 = vmatprep.subr.bf16.mxu0 %v2398
        %2672 = vmatpush1.bf16.msra.mxu0 %v2397
        %2673 = vmatprep.subr.bf16.mxu0 %v2400
        %2674 = vmatpush1.bf16.msra.mxu0 %v2399
        %2675 = vmatprep.subr.bf16.mxu0 %v2402
        %2676 = vmatpush1.bf16.msra.mxu0 %v2401
        %2677 = vmatprep.subr.bf16.mxu0 %v2404
        %2678 = vmatpush1.bf16.msra.mxu0 %v2403
        %2679 = vmatprep.subr.bf16.mxu0 %v2406
        %2680 = vmatpush1.bf16.msra.mxu0 %v2405
        %2681 = vmatprep.subr.bf16.mxu0 %v2408
        %2682 = vmatpush1.bf16.msra.mxu0 %v2407
        %2683 = vmatprep.subr.bf16.mxu0 %v2410
        %2684 = vmatpush1.bf16.msra.mxu0 %v2409
        %2685 = vmatprep.subr.bf16.mxu0 %v2412
        %2686 = vmatpush1.bf16.msra.mxu0 %v2411
        %2687 = vmatprep.subr.bf16.mxu0 %v2414
        %2688 = vmatpush1.bf16.msra.mxu0 %v2413
        %2689 = vmatprep.subr.bf16.mxu0 %v2416
        %2690 = vmatpush1.bf16.msra.mxu0 %v2415
        %2691 = vmatprep.mubr.bf16.mxu0 %v1926
        %2692 = vmatmul.mubr.bf16.gmra.mrb[0].mxu0 %v1925
        %v2693 = vpop.f32.mrb[0].mxu0
        %v2694 = vadd.f32 %v2653, %v2693
        %v2695 = vpop.f32.mrb[0].mxu0
        %v2696 = vadd.f32 %v2655, %v2695
        %v2697 = vpop.f32.mrb[0].mxu0
        %v2698 = vpop.f32.mrb[0].mxu0
        %2699 = vdwg.mxu0
        %2700 = vmatprep.subr.bf16.mxu0 %v2418
        %2701 = vmatpush1.bf16.msra.mxu0 %v2417
        %2702 = vmatprep.subr.bf16.mxu0 %v2420
        %2703 = vmatpush1.bf16.msra.mxu0 %v2419
        %2704 = vmatprep.subr.bf16.mxu0 %v2422
        %2705 = vmatpush1.bf16.msra.mxu0 %v2421
        %2706 = vmatprep.subr.bf16.mxu0 %v2424
        %2707 = vmatpush1.bf16.msra.mxu0 %v2423
        %2708 = vmatprep.subr.bf16.mxu0 %v2426
        %2709 = vmatpush1.bf16.msra.mxu0 %v2425
        %2710 = vmatprep.subr.bf16.mxu0 %v2428
        %2711 = vmatpush1.bf16.msra.mxu0 %v2427
        %2712 = vmatprep.subr.bf16.mxu0 %v2430
        %2713 = vmatpush1.bf16.msra.mxu0 %v2429
        %2714 = vmatprep.subr.bf16.mxu0 %v2432
        %2715 = vmatpush1.bf16.msra.mxu0 %v2431
        %2716 = vmatprep.subr.bf16.mxu0 %v2434
        %2717 = vmatpush1.bf16.msra.mxu0 %v2433
        %2718 = vmatprep.subr.bf16.mxu0 %v2436
        %2719 = vmatpush1.bf16.msra.mxu0 %v2435
        %2720 = vmatprep.subr.bf16.mxu0 %v2438
        %2721 = vmatpush1.bf16.msra.mxu0 %v2437
        %2722 = vmatprep.subr.bf16.mxu0 %v2440
        %2723 = vmatpush1.bf16.msra.mxu0 %v2439
        %2724 = vmatprep.subr.bf16.mxu0 %v2442
        %2725 = vmatpush1.bf16.msra.mxu0 %v2441
        %2726 = vmatprep.subr.bf16.mxu0 %v2444
        %2727 = vmatpush1.bf16.msra.mxu0 %v2443
        %2728 = vmatprep.subr.bf16.mxu0 %v2446
        %2729 = vmatpush1.bf16.msra.mxu0 %v2445
        %2730 = vmatprep.subr.bf16.mxu0 %v2448
        %2731 = vmatpush1.bf16.msra.mxu0 %v2447
        %2732 = vmatprep.mubr.bf16.mxu0 %v1928
        %2733 = vmatmul.mubr.bf16.gmra.mrb[0].mxu0 %v1927
        %v2734 = vpop.f32.mrb[0].mxu0
        %v2735 = vadd.f32 %v2694, %v2734
        %v2736 = vpop.f32.mrb[0].mxu0
        %v2737 = vadd.f32 %v2696, %v2736
        %v2738 = vpop.f32.mrb[0].mxu0
        %v2739 = vpop.f32.mrb[0].mxu0
        %2740 = vdwg.mxu0
        %v2741 = vmax.f32 %v2735, 0.0
        %v2742 = vmax.f32 %v2737, 0.0
        %v2743 = vld [vmem:[%s7] sm:$0xff]
        %v2744 = vld [vmem:[%s7 + $0x8] sm:$0xff]
        %v2745 = vld [vmem:[%s7 + $0x10] sm:$0xff]
        %v2746 = vld [vmem:[%s7 + $0x18] sm:$0xff]
        %v2747 = vld [vmem:[%s7 + $0x20] sm:$0xff]
        %v2748 = vld [vmem:[%s7 + $0x28] sm:$0xff]
        %v2749 = vld [vmem:[%s7 + $0x30] sm:$0xff]
        %v2750 = vld [vmem:[%s7 + $0x38] sm:$0xff]
        %v2751 = vld [vmem:[%s7 + $0x40] sm:$0xff]
        %v2752 = vld [vmem:[%s7 + $0x48] sm:$0xff]
        %v2753 = vld [vmem:[%s7 + $0x50] sm:$0xff]
        %v2754 = vld [vmem:[%s7 + $0x58] sm:$0xff]
        %v2755 = vld [vmem:[%s7 + $0x60] sm:$0xff]
        %v2756 = vld [vmem:[%s7 + $0x68] sm:$0xff]
        %v2757 = vld [vmem:[%s7 + $0x70] sm:$0xff]
        %v2758 = vld [vmem:[%s7 + $0x78] sm:$0xff]
        %v2759 = vld [vmem:[%s7 + $0x80] sm:$0xff]
        %v2760 = vld [vmem:[%s7 + $0x88] sm:$0xff]
        %v2761 = vld [vmem:[%s7 + $0x90] sm:$0xff]
        %v2762 = vld [vmem:[%s7 + $0x98] sm:$0xff]
        %v2763 = vld [vmem:[%s7 + $0xa0] sm:$0xff]
        %v2764 = vld [vmem:[%s7 + $0xa8] sm:$0xff]
        %v2765 = vld [vmem:[%s7 + $0xb0] sm:$0xff]
        %v2766 = vld [vmem:[%s7 + $0xb8] sm:$0xff]
        %v2767 = vld [vmem:[%s7 + $0xc0] sm:$0xff]
        %v2768 = vld [vmem:[%s7 + $0xc8] sm:$0xff]
        %v2769 = vld [vmem:[%s7 + $0xd0] sm:$0xff]
        %v2770 = vld [vmem:[%s7 + $0xd8] sm:$0xff]
        %v2771 = vld [vmem:[%s7 + $0xe0] sm:$0xff]
        %v2772 = vld [vmem:[%s7 + $0xe8] sm:$0xff]
        %v2773 = vld [vmem:[%s7 + $0xf0] sm:$0xff]
        %v2774 = vld [vmem:[%s7 + $0xf8] sm:$0xff]
        %v2775 = vld [vmem:[%s8] sm:$0x1]
        %v2777 = vlaneseq
        %v2778 = vshrl.u32 %v2777, 7
        %v2779 = vsub.s32 0, %v2778
        %v2780 = vrot.slane %v2775, %v2779
        %2782 = vmatprep.subr.mxu0 0.0
        %2783 = vmatpush1.msra.mxu0 %v2743
        %2784 = vmatprep.subr.mxu0 0.0
        %2785 = vmatpush1.msra.mxu0 %v2744
        %2786 = vmatprep.subr.mxu0 0.0
        %2787 = vmatpush1.msra.mxu0 %v2745
        %2788 = vmatprep.subr.mxu0 0.0
        %2789 = vmatpush1.msra.mxu0 %v2746
        %2790 = vmatprep.subr.mxu0 0.0
        %2791 = vmatpush1.msra.mxu0 %v2747
        %2792 = vmatprep.subr.mxu0 0.0
        %2793 = vmatpush1.msra.mxu0 %v2748
        %2794 = vmatprep.subr.mxu0 0.0
        %2795 = vmatpush1.msra.mxu0 %v2749
        %2796 = vmatprep.subr.mxu0 0.0
        %2797 = vmatpush1.msra.mxu0 %v2750
        %2798 = vmatprep.subr.mxu0 0.0
        %2799 = vmatpush1.msra.mxu0 %v2751
        %2800 = vmatprep.subr.mxu0 0.0
        %2801 = vmatpush1.msra.mxu0 %v2752
        %2802 = vmatprep.subr.mxu0 0.0
        %2803 = vmatpush1.msra.mxu0 %v2753
        %2804 = vmatprep.subr.mxu0 0.0
        %2805 = vmatpush1.msra.mxu0 %v2754
        %2806 = vmatprep.subr.mxu0 0.0
        %2807 = vmatpush1.msra.mxu0 %v2755
        %2808 = vmatprep.subr.mxu0 0.0
        %2809 = vmatpush1.msra.mxu0 %v2756
        %2810 = vmatprep.subr.mxu0 0.0
        %2811 = vmatpush1.msra.mxu0 %v2757
        %2812 = vmatprep.subr.mxu0 0.0
        %2813 = vmatpush1.msra.mxu0 %v2758
        %2814 = vmatprep.subr.mxu0 0.0
        %2815 = vmatpush1.msra.mxu0 %v2759
        %2816 = vmatprep.subr.mxu0 0.0
        %2817 = vmatpush1.msra.mxu0 %v2760
        %2818 = vmatprep.subr.mxu0 0.0
        %2819 = vmatpush1.msra.mxu0 %v2761
        %2820 = vmatprep.subr.mxu0 0.0
        %2821 = vmatpush1.msra.mxu0 %v2762
        %2822 = vmatprep.subr.mxu0 0.0
        %2823 = vmatpush1.msra.mxu0 %v2763
        %2824 = vmatprep.subr.mxu0 0.0
        %2825 = vmatpush1.msra.mxu0 %v2764
        %2826 = vmatprep.subr.mxu0 0.0
        %2827 = vmatpush1.msra.mxu0 %v2765
        %2828 = vmatprep.subr.mxu0 0.0
        %2829 = vmatpush1.msra.mxu0 %v2766
        %2830 = vmatprep.subr.mxu0 0.0
        %2831 = vmatpush1.msra.mxu0 %v2767
        %2832 = vmatprep.subr.mxu0 0.0
        %2833 = vmatpush1.msra.mxu0 %v2768
        %2834 = vmatprep.subr.mxu0 0.0
        %2835 = vmatpush1.msra.mxu0 %v2769
        %2836 = vmatprep.subr.mxu0 0.0
        %2837 = vmatpush1.msra.mxu0 %v2770
        %2838 = vmatprep.subr.mxu0 0.0
        %2839 = vmatpush1.msra.mxu0 %v2771
        %2840 = vmatprep.subr.mxu0 0.0
        %2841 = vmatpush1.msra.mxu0 %v2772
        %2842 = vmatprep.subr.mxu0 0.0
        %2843 = vmatpush1.msra.mxu0 %v2773
        %2844 = vmatprep.subr.mxu0 0.0
        %2845 = vmatpush1.msra.mxu0 %v2774
        %2846 = vmatprep.mubr.f32.mxu0 %v2742
        %2847 = vmatmul.mubr.f32.gmra.mrb[0].mxu0 %v2741
        %v2848 = vpop.f32.mrb[0].mxu0
        %v2849 = vadd.f32 %v2780, %v2848
        %v2850 = vpop.f32.mrb[0].mxu0
        %2851 = vdwg.mxu0
        %v2852 = vld [vmem:[%s382] sm:$0xff]
        %v2853 = vmul.f32 %v2849, 0.5
        %v2854 = vmul.f32 %v2853, 1.442695
        %v2855 = vpow.pop %v2854
        %2857 = vrot.lane.b32.xlu0 %v2855, 112
        %v2858 = vpop.permute.xlu0 %2857
        %v2860 = vmul.f32 %v2852, %v2858
        %v2861 = vadd.f32 %v2849, %v2860
        %2862 = vst.msk [vmem:[%s386] sm:$0xff] %vm412, %v2861
        %2864 = vrot.lane.b32.xlu0 %v2849, 16
        %v2865 = vpop.permute.xlu0 %2864
        %vm2867 = vcmask 261248
        %2868 = vst.msk [vmem:[%s386] sm:$0xff] %vm2867, %v2865
        %vm2869 = vcmask 392448
        %2870 = vst.msk [vmem:[%s386] sm:$0xff] %vm2869, %v2865
        %p2871 = scmp.lt.s32.totalorder %s22, 1
        %s2872 = scalar_select %p2871, %s22, 1
        %s2873 = smul.addr %s2872, 8
        %s2874 = scalar_lea.vmem %s10, %s2873
        // Predicated region
        $region65: #{cnn_encoder_forward.1} parent=59 // pred_check
          %p2875 = pneg %p260
        $region66: #{cnn_encoder_forward.1} parent=59 // pred_check_branch
          %2877 = sbr.rel (%p2875) target = $region68
        $region67: #{cnn_encoder_forward.1} parent=59 // pred_region
          _
        $region68: #{cnn_encoder_forward.1} parent=59 // pred_fallthru
          _
      $region60: #{cnn_encoder_forward.1} parent=5 // pred_fallthru
        _
      %p2878 = scmp.le.s32.totalorder 2, %s17
      // Predicated region
      $region69: #{cnn_encoder_forward.1} parent=5 // pred_check
        %p2879 = pneg %p2878
      $region70: #{cnn_encoder_forward.1} parent=5 // pred_check_branch
        %2881 = sbr.rel (%p2879) target = $region72
      $region71: #{cnn_encoder_forward.1} parent=5 // pred_region
        %s2882 = ssub.s32 %s17, 2
        // Predicated region
        $region73: #{cnn_encoder_forward.1} parent=71 // pred_check
          %p2883 = pneg %p266
        $region74: #{cnn_encoder_forward.1} parent=71 // pred_check_branch
          %2885 = sbr.rel (%p2883) target = $region76
        $region75: #{cnn_encoder_forward.1} parent=71 // pred_region
          %p2886 = scmp.lt.s32.totalorder %s23, 1
          %s2887 = scalar_select %p2886, %s23, 1
          %s2888 = smul.addr %s2887, 8
          %s2889 = scalar_lea.vmem %s10, %s2888
        $region76: #{cnn_encoder_forward.1} parent=71 // pred_fallthru
          _
      $region72: #{cnn_encoder_forward.1} parent=5 // pred_fallthru
        _
    $region6: #{cnn_encoder_forward.1} parent=1 // loop_footer
      %s21 = sadd.s32 1, %s17
    $region7: #{cnn_encoder_forward.1} parent=1 // loop_footer_branch
      %16 = sbr.rel target = $region3
    $region8: #{cnn_encoder_forward.1} parent=1 // loop_exit
      _
    %2890 = vsyncpa [#allocation4], 1
    %s2891 = scalar_lea.sflag [#allocation4], 1
    %2892 = vsyncpa %s2891, 1

</llo_original>
